<compile_context>
chip_gen: v7x
topology: tpu7x:2x2x1
jax: 0.10.0
libtpu: 0.0.40
codegen_flags: <defaults>
</compile_context>

<pallas_src>
import functools
import math

import jax
import jax.numpy as jnp
from jax import lax
from jax.experimental import pallas as pl
from jax.experimental.pallas import tpu as pltpu


# ----------------------------------------------------------------------------
# Fused encoder-block kernel (one batch element per grid step)
# ----------------------------------------------------------------------------
def _encoder_block_kernel(src_ref, bias_ref,
                          wqkv_ref, bqkv_ref,
                          wo_ref, bo_ref,
                          w1_ref, b1_ref,
                          w2_ref, b2_ref,
                          o_ref, *, num_heads):
    x = src_ref[...]                                   # (S, D) f32
    S, D = x.shape
    dk = D // num_heads
    scale = 1.0 / math.sqrt(dk)

    # ---- fused Q|K|V projection (bf16 MXU, f32 accumulation) --------------
    qkv = (jnp.dot(x.astype(jnp.bfloat16), wqkv_ref[...],
                   preferred_element_type=jnp.float32)
           + bqkv_ref[...])                            # (S, 3D) f32

    # Static lane slices of the qkv slab (D is a lane multiple -> free
    # vreg-column selects).  Fold the 1/sqrt(dk) scale into q once.
    q = (qkv[:, 0:D] * scale).astype(jnp.bfloat16)
    k = qkv[:, D:2 * D].astype(jnp.bfloat16)
    v = qkv[:, 2 * D:3 * D].astype(jnp.bfloat16)
    bias = bias_ref[...]                               # (1, S) additive bias

    # ---- multi-head attention, static head loop ----------------------------
    outs = []
    for h in range(num_heads):                         # static lane slices
        sl = slice(h * dk, (h + 1) * dk)
        qh, kh, vh = q[:, sl], k[:, sl], v[:, sl]
        # q @ k^T without materializing the transpose: contract dim 1 x dim 1.
        s = lax.dot_general(qh, kh, (((1,), (1,)), ((), ())),
                            preferred_element_type=jnp.float32)
        s = s + bias                                   # key-padding bias
        s = s - jnp.max(s, axis=-1, keepdims=True)
        p = jnp.exp(s)
        p = p * pl.reciprocal(jnp.sum(p, axis=-1, keepdims=True), approx=True)
        outs.append(jnp.dot(p.astype(jnp.bfloat16), vh,
                            preferred_element_type=jnp.float32))
    ctx = jnp.concatenate(outs, axis=-1)               # (S, D) f32

    # ---- out-proj + residual 1 + position-wise FF + residual 2 -------------
    h0 = (jnp.dot(ctx.astype(jnp.bfloat16), wo_ref[...],
                  preferred_element_type=jnp.float32)
          + bo_ref[...] + x)                           # residual 1 (f32)
    h1 = jnp.maximum(
        jnp.dot(h0.astype(jnp.bfloat16), w1_ref[...],
                preferred_element_type=jnp.float32) + b1_ref[...], 0.0)
    y = (jnp.dot(h1.astype(jnp.bfloat16), w2_ref[...],
                 preferred_element_type=jnp.float32)
         + b2_ref[...] + h0)                           # residual 2 (f32)
    o_ref[...] = y.astype(o_ref.dtype)


# ----------------------------------------------------------------------------
# Parameter fusion (done ONCE, outside the jitted forward)
# ----------------------------------------------------------------------------
def fuse_params(params):
    return {
        "wqkv": jnp.concatenate(
            [params["wq"], params["wk"], params["wv"]],
            axis=1).astype(jnp.bfloat16),
        "bqkv": jnp.concatenate(
            [params["bq"], params["bk"], params["bv"]],
            axis=0).reshape(1, -1).astype(jnp.float32),
        "wo": params["wo"].astype(jnp.bfloat16),
        "bo": params["bo"].reshape(1, -1).astype(jnp.float32),
        "w1": params["w1"].astype(jnp.bfloat16),
        "b1": params["b1"].reshape(1, -1).astype(jnp.float32),
        "w2": params["w2"].astype(jnp.bfloat16),
        "b2": params["b2"].reshape(1, -1).astype(jnp.float32),
    }


# ----------------------------------------------------------------------------
# EncoderBlock forward
# ----------------------------------------------------------------------------
def encoder_block(src, src_mask, fused, num_heads):
    B, S, D = src.shape
    F = fused["w1"].shape[1]

    # src_mask (B,1,S,S) is assumed constant over query rows (key padding);
    # compress it to a (B,1,S) additive key bias (0 keep / -1e9 masked).
    key_keep = src_mask[:, 0, 0, :]                         # (B, S)
    key_bias = jnp.where(key_keep != 0, 0.0, -1e9).astype(jnp.float32)
    key_bias = key_bias[:, None, :]                         # (B, 1, S)

    def resident(shape):
        # Same block every grid step -> weight/bias stays resident in VMEM.
        return pl.BlockSpec(shape, lambda b: (0, 0))

    return pl.pallas_call(
        functools.partial(_encoder_block_kernel, num_heads=num_heads),
        out_shape=jax.ShapeDtypeStruct((B, S, D), src.dtype),
        grid=(B,),
        in_specs=[
            pl.BlockSpec((None, S, D), lambda b: (b, 0, 0)),   # src
            pl.BlockSpec((None, 1, S), lambda b: (b, 0, 0)),   # key bias
            resident((D, 3 * D)), resident((1, 3 * D)),        # wqkv, bqkv
            resident((D, D)), resident((1, D)),                # wo, bo
            resident((D, F)), resident((1, F)),                # w1, b1
            resident((F, D)), resident((1, D)),                # w2, b2
        ],
        out_specs=pl.BlockSpec((None, S, D), lambda b: (b, 0, 0)),
        compiler_params=pltpu.CompilerParams(
            dimension_semantics=("parallel",)),
    )(src, key_bias, fused["wqkv"], fused["bqkv"], fused["wo"], fused["bo"],
      fused["w1"], fused["b1"], fused["w2"], fused["b2"])


# ----------------------------------------------------------------------------
# Pure-JAX f32 reference (for a sanity check)
# ----------------------------------------------------------------------------
def encoder_block_reference(src, src_mask, params, num_heads):
    B, S, D = src.shape
    dk = D // num_heads
    x = src.reshape(B * S, D)

    def heads(t):
        return t.reshape(B, S, num_heads, dk).transpose(0, 2, 1, 3)

    q = heads(x @ params["wq"] + params["bq"])
    k = heads(x @ params["wk"] + params["bk"])
    v = heads(x @ params["wv"] + params["bv"])
    s = jnp.einsum("bhqd,bhkd->bhqk", q, k) / math.sqrt(dk)
    s = jnp.where(src_mask == 0, -1e9, s)
    p = jax.nn.softmax(s, axis=-1)
    ctx = jnp.einsum("bhqk,bhkd->bhqd", p, v)
    ctx = ctx.transpose(0, 2, 1, 3).reshape(B * S, D)
    h0 = ctx @ params["wo"] + params["bo"] + x
    h1 = jnp.maximum(h0 @ params["w1"] + params["b1"], 0.0)
    y = h1 @ params["w2"] + params["b2"] + h0
    return y.reshape(B, S, D)


# ----------------------------------------------------------------------------
# Main
# ----------------------------------------------------------------------------
if __name__ == "__main__":
    B, S, D, H, FF = 2, 128, 128, 4, 256

    key = jax.random.PRNGKey(0)
    ks = jax.random.split(key, 16)

    def w(k, shape):
        return (0.02 * jax.random.normal(k, shape)).astype(jnp.float32)

    params = {
        "wq": w(ks[0], (D, D)), "bq": w(ks[1], (D,)),
        "wk": w(ks[2], (D, D)), "bk": w(ks[3], (D,)),
        "wv": w(ks[4], (D, D)), "bv": w(ks[5], (D,)),
        "wo": w(ks[6], (D, D)), "bo": w(ks[7], (D,)),
        "w1": w(ks[8], (D, FF)), "b1": w(ks[9], (FF,)),
        "w2": w(ks[10], (FF, D)), "b2": w(ks[11], (D,)),
    }

    src = jax.random.normal(ks[12], (B, S, D), dtype=jnp.float32)

    # padding mask: batch 0 all valid, batch 1 has the last 16 keys padded.
    valid_len = jnp.array([S, S - 16], dtype=jnp.int32)
    key_valid = (jnp.arange(S)[None, :] < valid_len[:, None]).astype(jnp.float32)
    src_mask = key_valid[:, None, None, :] * jnp.ones((1, 1, S, 1), jnp.float32)
    # src_mask: (B, 1, S, S), 1 = attend, 0 = mask

    fused = fuse_params(params)          # pre-fused / bf16 weights, once

    run = jax.jit(functools.partial(encoder_block, num_heads=H))
    out = run(src, src_mask, fused)
    jax.block_until_ready(out)

    assert out.shape == (B, S, D) and out.dtype == jnp.float32

    ref = encoder_block_reference(src, src_mask, params, num_heads=H)
    assert jnp.allclose(out, ref, atol=2e-2, rtol=2e-2), (
        float(jnp.max(jnp.abs(out - ref))))

    print("KERNEL_OK")
</pallas_src>

<mosaic_0001>
module attributes {stable_mosaic.version = 11 : i64} {
  func.func @_encoder_block_kernel(%arg0: i32, %arg1: memref<1x128x128xf32, #tpu.memory_space<vmem>>, %arg2: memref<1x1x128xf32, #tpu.memory_space<vmem>>, %arg3: memref<128x384xbf16, #tpu.memory_space<vmem>>, %arg4: memref<1x384xf32, #tpu.memory_space<vmem>>, %arg5: memref<128x128xbf16, #tpu.memory_space<vmem>>, %arg6: memref<1x128xf32, #tpu.memory_space<vmem>>, %arg7: memref<128x256xbf16, #tpu.memory_space<vmem>>, %arg8: memref<1x256xf32, #tpu.memory_space<vmem>>, %arg9: memref<256x128xbf16, #tpu.memory_space<vmem>>, %arg10: memref<1x128xf32, #tpu.memory_space<vmem>>, %arg11: memref<1x128x128xf32, #tpu.memory_space<vmem>>) attributes {dimension_semantics = [#tpu.dimension_semantics<parallel>], iteration_bounds = array<i64: 2>, scalar_prefetch = 0 : i64, scratch_operands = 0 : i64, tpu.core_type = #tpu.core_type<tc>, window_params = [{transform_indices = @transform_0, window_bounds = array<i64: 1, 128, 128>}, {transform_indices = @transform_1, window_bounds = array<i64: 1, 1, 128>}, {pipeline_mode = #tpu.pipeline_mode<synchronous>, transform_indices = @transform_2, window_bounds = array<i64: 128, 384>}, {pipeline_mode = #tpu.pipeline_mode<synchronous>, transform_indices = @transform_3, window_bounds = array<i64: 1, 384>}, {pipeline_mode = #tpu.pipeline_mode<synchronous>, transform_indices = @transform_4, window_bounds = array<i64: 128, 128>}, {pipeline_mode = #tpu.pipeline_mode<synchronous>, transform_indices = @transform_5, window_bounds = array<i64: 1, 128>}, {pipeline_mode = #tpu.pipeline_mode<synchronous>, transform_indices = @transform_6, window_bounds = array<i64: 128, 256>}, {pipeline_mode = #tpu.pipeline_mode<synchronous>, transform_indices = @transform_7, window_bounds = array<i64: 1, 256>}, {pipeline_mode = #tpu.pipeline_mode<synchronous>, transform_indices = @transform_8, window_bounds = array<i64: 256, 128>}, {pipeline_mode = #tpu.pipeline_mode<synchronous>, transform_indices = @transform_9, window_bounds = array<i64: 1, 128>}, {transform_indices = @transform_10, window_bounds = array<i64: 1, 128, 128>}]} {
    %c0 = arith.constant 0 : index
    %c0_0 = arith.constant 0 : index
    %c0_1 = arith.constant 0 : index
    %0 = vector.load %arg1[%c0, %c0_0, %c0_1] : memref<1x128x128xf32, #tpu.memory_space<vmem>>, vector<1x128x128xf32>
    %1 = vector.shape_cast %0 : vector<1x128x128xf32> to vector<128x128xf32>
    %2 = arith.truncf %1 : vector<128x128xf32> to vector<128x128xbf16>
    %c0_2 = arith.constant 0 : index
    %c0_3 = arith.constant 0 : index
    %3 = vector.load %arg3[%c0_2, %c0_3] : memref<128x384xbf16, #tpu.memory_space<vmem>>, vector<128x384xbf16>
    %cst = arith.constant dense<0.000000e+00> : vector<128x384xf32>
    %4 = tpu.matmul %2, %3, %cst {dimension_numbers = #tpu.dot_dimension_numbers<[1], [0], [0], [1], [0, 0, 1, 1], [], []>} : vector<128x128xbf16>, vector<128x384xbf16>, vector<128x384xf32> -> vector<128x384xf32>
    %c0_4 = arith.constant 0 : index
    %c0_5 = arith.constant 0 : index
    %5 = vector.load %arg4[%c0_4, %c0_5] : memref<1x384xf32, #tpu.memory_space<vmem>>, vector<1x384xf32>
    %6 = vector.broadcast %5 : vector<1x384xf32> to vector<128x384xf32>
    %7 = arith.addf %4, %6 : vector<128x384xf32>
    %8 = vector.extract_strided_slice %7 {offsets = [0, 0], sizes = [128, 128], strides = [1, 1]} : vector<128x384xf32> to vector<128x128xf32>
    %cst_6 = arith.constant 0.176776692 : f32
    %9 = vector.broadcast %cst_6 : f32 to vector<128x128xf32>
    %10 = arith.mulf %8, %9 : vector<128x128xf32>
    %11 = arith.truncf %10 : vector<128x128xf32> to vector<128x128xbf16>
    %12 = vector.extract_strided_slice %7 {offsets = [0, 128], sizes = [128, 128], strides = [1, 1]} : vector<128x384xf32> to vector<128x128xf32>
    %13 = arith.truncf %12 : vector<128x128xf32> to vector<128x128xbf16>
    %14 = vector.extract_strided_slice %7 {offsets = [0, 256], sizes = [128, 128], strides = [1, 1]} : vector<128x384xf32> to vector<128x128xf32>
    %15 = arith.truncf %14 : vector<128x128xf32> to vector<128x128xbf16>
    %c0_7 = arith.constant 0 : index
    %c0_8 = arith.constant 0 : index
    %c0_9 = arith.constant 0 : index
    %16 = vector.load %arg2[%c0_7, %c0_8, %c0_9] : memref<1x1x128xf32, #tpu.memory_space<vmem>>, vector<1x1x128xf32>
    %17 = vector.shape_cast %16 : vector<1x1x128xf32> to vector<1x128xf32>
    %18 = vector.extract_strided_slice %11 {offsets = [0, 0], sizes = [128, 32], strides = [1, 1]} : vector<128x128xbf16> to vector<128x32xbf16>
    %19 = vector.extract_strided_slice %13 {offsets = [0, 0], sizes = [128, 32], strides = [1, 1]} : vector<128x128xbf16> to vector<128x32xbf16>
    %20 = vector.extract_strided_slice %15 {offsets = [0, 0], sizes = [128, 32], strides = [1, 1]} : vector<128x128xbf16> to vector<128x32xbf16>
    %cst_10 = arith.constant dense<0.000000e+00> : vector<128x128xf32>
    %21 = tpu.matmul %18, %19, %cst_10 {dimension_numbers = #tpu.dot_dimension_numbers<[1], [1], [0], [0], [0, 0, 1, 0], [], []>} : vector<128x32xbf16>, vector<128x32xbf16>, vector<128x128xf32> -> vector<128x128xf32>
    %22 = vector.broadcast %17 : vector<1x128xf32> to vector<128x128xf32>
    %23 = arith.addf %21, %22 : vector<128x128xf32>
    %cst_11 = arith.constant dense<0xFF800000> : vector<128xf32>
    %24 = vector.multi_reduction <maximumf>, %23, %cst_11 [1] : vector<128x128xf32> to vector<128xf32>
    %25 = vector.shape_cast %24 : vector<128xf32> to vector<128x1xf32>
    %26 = vector.broadcast %25 : vector<128x1xf32> to vector<128x128xf32>
    %27 = arith.subf %23, %26 : vector<128x128xf32>
    %28 = math.exp %27 : vector<128x128xf32>
    %cst_12 = arith.constant dense<0.000000e+00> : vector<128xf32>
    %29 = vector.multi_reduction <add>, %28, %cst_12 [1] : vector<128x128xf32> to vector<128xf32>
    %30 = vector.shape_cast %29 : vector<128xf32> to vector<128x1xf32>
    %31 = tpu.reciprocal %30 {approx = true} : vector<128x1xf32> -> vector<128x1xf32>
    %32 = vector.broadcast %31 : vector<128x1xf32> to vector<128x128xf32>
    %33 = arith.mulf %28, %32 : vector<128x128xf32>
    %34 = arith.truncf %33 : vector<128x128xf32> to vector<128x128xbf16>
    %cst_13 = arith.constant dense<0.000000e+00> : vector<128x32xf32>
    %35 = tpu.matmul %34, %20, %cst_13 {dimension_numbers = #tpu.dot_dimension_numbers<[1], [0], [0], [1], [0, 0, 1, 1], [], []>} : vector<128x128xbf16>, vector<128x32xbf16>, vector<128x32xf32> -> vector<128x32xf32>
    %36 = vector.extract_strided_slice %11 {offsets = [0, 32], sizes = [128, 32], strides = [1, 1]} : vector<128x128xbf16> to vector<128x32xbf16>
    %37 = vector.extract_strided_slice %13 {offsets = [0, 32], sizes = [128, 32], strides = [1, 1]} : vector<128x128xbf16> to vector<128x32xbf16>
    %38 = vector.extract_strided_slice %15 {offsets = [0, 32], sizes = [128, 32], strides = [1, 1]} : vector<128x128xbf16> to vector<128x32xbf16>
    %cst_14 = arith.constant dense<0.000000e+00> : vector<128x128xf32>
    %39 = tpu.matmul %36, %37, %cst_14 {dimension_numbers = #tpu.dot_dimension_numbers<[1], [1], [0], [0], [0, 0, 1, 0], [], []>} : vector<128x32xbf16>, vector<128x32xbf16>, vector<128x128xf32> -> vector<128x128xf32>
    %40 = vector.broadcast %17 : vector<1x128xf32> to vector<128x128xf32>
    %41 = arith.addf %39, %40 : vector<128x128xf32>
    %cst_15 = arith.constant dense<0xFF800000> : vector<128xf32>
    %42 = vector.multi_reduction <maximumf>, %41, %cst_15 [1] : vector<128x128xf32> to vector<128xf32>
    %43 = vector.shape_cast %42 : vector<128xf32> to vector<128x1xf32>
    %44 = vector.broadcast %43 : vector<128x1xf32> to vector<128x128xf32>
    %45 = arith.subf %41, %44 : vector<128x128xf32>
    %46 = math.exp %45 : vector<128x128xf32>
    %cst_16 = arith.constant dense<0.000000e+00> : vector<128xf32>
    %47 = vector.multi_reduction <add>, %46, %cst_16 [1] : vector<128x128xf32> to vector<128xf32>
    %48 = vector.shape_cast %47 : vector<128xf32> to vector<128x1xf32>
    %49 = tpu.reciprocal %48 {approx = true} : vector<128x1xf32> -> vector<128x1xf32>
    %50 = vector.broadcast %49 : vector<128x1xf32> to vector<128x128xf32>
    %51 = arith.mulf %46, %50 : vector<128x128xf32>
    %52 = arith.truncf %51 : vector<128x128xf32> to vector<128x128xbf16>
    %cst_17 = arith.constant dense<0.000000e+00> : vector<128x32xf32>
    %53 = tpu.matmul %52, %38, %cst_17 {dimension_numbers = #tpu.dot_dimension_numbers<[1], [0], [0], [1], [0, 0, 1, 1], [], []>} : vector<128x128xbf16>, vector<128x32xbf16>, vector<128x32xf32> -> vector<128x32xf32>
    %54 = vector.extract_strided_slice %11 {offsets = [0, 64], sizes = [128, 32], strides = [1, 1]} : vector<128x128xbf16> to vector<128x32xbf16>
    %55 = vector.extract_strided_slice %13 {offsets = [0, 64], sizes = [128, 32], strides = [1, 1]} : vector<128x128xbf16> to vector<128x32xbf16>
    %56 = vector.extract_strided_slice %15 {offsets = [0, 64], sizes = [128, 32], strides = [1, 1]} : vector<128x128xbf16> to vector<128x32xbf16>
    %cst_18 = arith.constant dense<0.000000e+00> : vector<128x128xf32>
    %57 = tpu.matmul %54, %55, %cst_18 {dimension_numbers = #tpu.dot_dimension_numbers<[1], [1], [0], [0], [0, 0, 1, 0], [], []>} : vector<128x32xbf16>, vector<128x32xbf16>, vector<128x128xf32> -> vector<128x128xf32>
    %58 = vector.broadcast %17 : vector<1x128xf32> to vector<128x128xf32>
    %59 = arith.addf %57, %58 : vector<128x128xf32>
    %cst_19 = arith.constant dense<0xFF800000> : vector<128xf32>
    %60 = vector.multi_reduction <maximumf>, %59, %cst_19 [1] : vector<128x128xf32> to vector<128xf32>
    %61 = vector.shape_cast %60 : vector<128xf32> to vector<128x1xf32>
    %62 = vector.broadcast %61 : vector<128x1xf32> to vector<128x128xf32>
    %63 = arith.subf %59, %62 : vector<128x128xf32>
    %64 = math.exp %63 : vector<128x128xf32>
    %cst_20 = arith.constant dense<0.000000e+00> : vector<128xf32>
    %65 = vector.multi_reduction <add>, %64, %cst_20 [1] : vector<128x128xf32> to vector<128xf32>
    %66 = vector.shape_cast %65 : vector<128xf32> to vector<128x1xf32>
    %67 = tpu.reciprocal %66 {approx = true} : vector<128x1xf32> -> vector<128x1xf32>
    %68 = vector.broadcast %67 : vector<128x1xf32> to vector<128x128xf32>
    %69 = arith.mulf %64, %68 : vector<128x128xf32>
    %70 = arith.truncf %69 : vector<128x128xf32> to vector<128x128xbf16>
    %cst_21 = arith.constant dense<0.000000e+00> : vector<128x32xf32>
    %71 = tpu.matmul %70, %56, %cst_21 {dimension_numbers = #tpu.dot_dimension_numbers<[1], [0], [0], [1], [0, 0, 1, 1], [], []>} : vector<128x128xbf16>, vector<128x32xbf16>, vector<128x32xf32> -> vector<128x32xf32>
    %72 = vector.extract_strided_slice %11 {offsets = [0, 96], sizes = [128, 32], strides = [1, 1]} : vector<128x128xbf16> to vector<128x32xbf16>
    %73 = vector.extract_strided_slice %13 {offsets = [0, 96], sizes = [128, 32], strides = [1, 1]} : vector<128x128xbf16> to vector<128x32xbf16>
    %74 = vector.extract_strided_slice %15 {offsets = [0, 96], sizes = [128, 32], strides = [1, 1]} : vector<128x128xbf16> to vector<128x32xbf16>
    %cst_22 = arith.constant dense<0.000000e+00> : vector<128x128xf32>
    %75 = tpu.matmul %72, %73, %cst_22 {dimension_numbers = #tpu.dot_dimension_numbers<[1], [1], [0], [0], [0, 0, 1, 0], [], []>} : vector<128x32xbf16>, vector<128x32xbf16>, vector<128x128xf32> -> vector<128x128xf32>
    %76 = vector.broadcast %17 : vector<1x128xf32> to vector<128x128xf32>
    %77 = arith.addf %75, %76 : vector<128x128xf32>
    %cst_23 = arith.constant dense<0xFF800000> : vector<128xf32>
    %78 = vector.multi_reduction <maximumf>, %77, %cst_23 [1] : vector<128x128xf32> to vector<128xf32>
    %79 = vector.shape_cast %78 : vector<128xf32> to vector<128x1xf32>
    %80 = vector.broadcast %79 : vector<128x1xf32> to vector<128x128xf32>
    %81 = arith.subf %77, %80 : vector<128x128xf32>
    %82 = math.exp %81 : vector<128x128xf32>
    %cst_24 = arith.constant dense<0.000000e+00> : vector<128xf32>
    %83 = vector.multi_reduction <add>, %82, %cst_24 [1] : vector<128x128xf32> to vector<128xf32>
    %84 = vector.shape_cast %83 : vector<128xf32> to vector<128x1xf32>
    %85 = tpu.reciprocal %84 {approx = true} : vector<128x1xf32> -> vector<128x1xf32>
    %86 = vector.broadcast %85 : vector<128x1xf32> to vector<128x128xf32>
    %87 = arith.mulf %82, %86 : vector<128x128xf32>
    %88 = arith.truncf %87 : vector<128x128xf32> to vector<128x128xbf16>
    %cst_25 = arith.constant dense<0.000000e+00> : vector<128x32xf32>
    %89 = tpu.matmul %88, %74, %cst_25 {dimension_numbers = #tpu.dot_dimension_numbers<[1], [0], [0], [1], [0, 0, 1, 1], [], []>} : vector<128x128xbf16>, vector<128x32xbf16>, vector<128x32xf32> -> vector<128x32xf32>
    %90 = tpu.concatenate %35, %53, %71, %89 in 1 : vector<128x32xf32>, vector<128x32xf32>, vector<128x32xf32>, vector<128x32xf32> -> vector<128x128xf32>
    %91 = arith.truncf %90 : vector<128x128xf32> to vector<128x128xbf16>
    %c0_26 = arith.constant 0 : index
    %c0_27 = arith.constant 0 : index
    %92 = vector.load %arg5[%c0_26, %c0_27] : memref<128x128xbf16, #tpu.memory_space<vmem>>, vector<128x128xbf16>
    %cst_28 = arith.constant dense<0.000000e+00> : vector<128x128xf32>
    %93 = tpu.matmul %91, %92, %cst_28 {dimension_numbers = #tpu.dot_dimension_numbers<[1], [0], [0], [1], [0, 0, 1, 1], [], []>} : vector<128x128xbf16>, vector<128x128xbf16>, vector<128x128xf32> -> vector<128x128xf32>
    %c0_29 = arith.constant 0 : index
    %c0_30 = arith.constant 0 : index
    %94 = vector.load %arg6[%c0_29, %c0_30] : memref<1x128xf32, #tpu.memory_space<vmem>>, vector<1x128xf32>
    %95 = vector.broadcast %94 : vector<1x128xf32> to vector<128x128xf32>
    %96 = arith.addf %93, %95 : vector<128x128xf32>
    %97 = arith.addf %96, %1 : vector<128x128xf32>
    %98 = arith.truncf %97 : vector<128x128xf32> to vector<128x128xbf16>
    %c0_31 = arith.constant 0 : index
    %c0_32 = arith.constant 0 : index
    %99 = vector.load %arg7[%c0_31, %c0_32] : memref<128x256xbf16, #tpu.memory_space<vmem>>, vector<128x256xbf16>
    %cst_33 = arith.constant dense<0.000000e+00> : vector<128x256xf32>
    %100 = tpu.matmul %98, %99, %cst_33 {dimension_numbers = #tpu.dot_dimension_numbers<[1], [0], [0], [1], [0, 0, 1, 1], [], []>} : vector<128x128xbf16>, vector<128x256xbf16>, vector<128x256xf32> -> vector<128x256xf32>
    %c0_34 = arith.constant 0 : index
    %c0_35 = arith.constant 0 : index
    %101 = vector.load %arg8[%c0_34, %c0_35] : memref<1x256xf32, #tpu.memory_space<vmem>>, vector<1x256xf32>
    %102 = vector.broadcast %101 : vector<1x256xf32> to vector<128x256xf32>
    %103 = arith.addf %100, %102 : vector<128x256xf32>
    %cst_36 = arith.constant 0.000000e+00 : f32
    %104 = vector.broadcast %cst_36 : f32 to vector<128x256xf32>
    %105 = arith.maximumf %103, %104 : vector<128x256xf32>
    %106 = arith.truncf %105 : vector<128x256xf32> to vector<128x256xbf16>
    %c0_37 = arith.constant 0 : index
    %c0_38 = arith.constant 0 : index
    %107 = vector.load %arg9[%c0_37, %c0_38] : memref<256x128xbf16, #tpu.memory_space<vmem>>, vector<256x128xbf16>
    %cst_39 = arith.constant dense<0.000000e+00> : vector<128x128xf32>
    %108 = tpu.matmul %106, %107, %cst_39 {dimension_numbers = #tpu.dot_dimension_numbers<[1], [0], [0], [1], [0, 0, 1, 1], [], []>} : vector<128x256xbf16>, vector<256x128xbf16>, vector<128x128xf32> -> vector<128x128xf32>
    %c0_40 = arith.constant 0 : index
    %c0_41 = arith.constant 0 : index
    %109 = vector.load %arg10[%c0_40, %c0_41] : memref<1x128xf32, #tpu.memory_space<vmem>>, vector<1x128xf32>
    %110 = vector.broadcast %109 : vector<1x128xf32> to vector<128x128xf32>
    %111 = arith.addf %108, %110 : vector<128x128xf32>
    %112 = arith.addf %111, %97 : vector<128x128xf32>
    %c0_42 = arith.constant 0 : index
    %c0_43 = arith.constant 0 : index
    %c0_44 = arith.constant 0 : index
    %113 = vector.load %arg11[%c0_42, %c0_43, %c0_44] : memref<1x128x128xf32, #tpu.memory_space<vmem>>, vector<1x128x128xf32>
    %114 = vector.shape_cast %113 : vector<1x128x128xf32> to vector<128x128xf32>
    %115 = vector.shape_cast %112 : vector<128x128xf32> to vector<1x128x128xf32>
    tpu.vector_store %arg11[%c0_42, %c0_43, %c0_44], %115 {strides = array<i32>} : memref<1x128x128xf32, #tpu.memory_space<vmem>>, vector<1x128x128xf32>,
    return
  }
  func.func @transform_0(%arg0: i32) -> (i32, i32, i32) {
    %c0_i32 = arith.constant 0 : i32
    %c0_i32_0 = arith.constant 0 : i32
    %c0_i32_1 = arith.constant 0 : i32
    return %arg0, %c0_i32, %c0_i32_0 : i32, i32, i32
  }
  func.func @transform_1(%arg0: i32) -> (i32, i32, i32) {
    %c0_i32 = arith.constant 0 : i32
    %c0_i32_0 = arith.constant 0 : i32
    %c0_i32_1 = arith.constant 0 : i32
    return %arg0, %c0_i32, %c0_i32_0 : i32, i32, i32
  }
  func.func @transform_2(%arg0: i32) -> (i32, i32) {
    %c0_i32 = arith.constant 0 : i32
    %c0_i32_0 = arith.constant 0 : i32
    %c0_i32_1 = arith.constant 0 : i32
    return %c0_i32, %c0_i32_0 : i32, i32
  }
  func.func @transform_3(%arg0: i32) -> (i32, i32) {
    %c0_i32 = arith.constant 0 : i32
    %c0_i32_0 = arith.constant 0 : i32
    %c0_i32_1 = arith.constant 0 : i32
    return %c0_i32, %c0_i32_0 : i32, i32
  }
  func.func @transform_4(%arg0: i32) -> (i32, i32) {
    %c0_i32 = arith.constant 0 : i32
    %c0_i32_0 = arith.constant 0 : i32
    %c0_i32_1 = arith.constant 0 : i32
    return %c0_i32, %c0_i32_0 : i32, i32
  }
  func.func @transform_5(%arg0: i32) -> (i32, i32) {
    %c0_i32 = arith.constant 0 : i32
    %c0_i32_0 = arith.constant 0 : i32
    %c0_i32_1 = arith.constant 0 : i32
    return %c0_i32, %c0_i32_0 : i32, i32
  }
  func.func @transform_6(%arg0: i32) -> (i32, i32) {
    %c0_i32 = arith.constant 0 : i32
    %c0_i32_0 = arith.constant 0 : i32
    %c0_i32_1 = arith.constant 0 : i32
    return %c0_i32, %c0_i32_0 : i32, i32
  }
  func.func @transform_7(%arg0: i32) -> (i32, i32) {
    %c0_i32 = arith.constant 0 : i32
    %c0_i32_0 = arith.constant 0 : i32
    %c0_i32_1 = arith.constant 0 : i32
    return %c0_i32, %c0_i32_0 : i32, i32
  }
  func.func @transform_8(%arg0: i32) -> (i32, i32) {
    %c0_i32 = arith.constant 0 : i32
    %c0_i32_0 = arith.constant 0 : i32
    %c0_i32_1 = arith.constant 0 : i32
    return %c0_i32, %c0_i32_0 : i32, i32
  }
  func.func @transform_9(%arg0: i32) -> (i32, i32) {
    %c0_i32 = arith.constant 0 : i32
    %c0_i32_0 = arith.constant 0 : i32
    %c0_i32_1 = arith.constant 0 : i32
    return %c0_i32, %c0_i32_0 : i32, i32
  }
  func.func @transform_10(%arg0: i32) -> (i32, i32, i32) {
    %c0_i32 = arith.constant 0 : i32
    %c0_i32_0 = arith.constant 0 : i32
    %c0_i32_1 = arith.constant 0 : i32
    return %arg0, %c0_i32, %c0_i32_0 : i32, i32, i32
  }
}

</mosaic_0001>

<llo_original>
// kernel: encoder_block.1
$region0: #{encoder_block.1}
  #allocation0 [shape = 'u32[]', space=smem, size = 0x4, offset = 0x4, fixed_abs, tag = 'smem constant byte address 0x4 - core index']
  #allocation1 [shape = 'u32[144,128]{1,0:T(1,128)}', space=vmem, size = 0x12000, scoped, tag = 'internal scratch']
  %s0 = inlined_call_operand.hbm [shape: f32[2,128,128], index: 0, kind: input, shape index: {}]
  %s1 = inlined_call_operand.vmem [shape: f32[2,1,128], index: 1, kind: input, shape index: {}]
  %s2 = inlined_call_operand.hbm [shape: bf16[128,384], index: 2, kind: input, shape index: {}]
  %s3 = inlined_call_operand.vmem [shape: f32[1,384], index: 3, kind: input, shape index: {}]
  %s4 = inlined_call_operand.hbm [shape: bf16[128,128], index: 4, kind: input, shape index: {}]
  %s5 = inlined_call_operand.vmem [shape: f32[1,128], index: 5, kind: input, shape index: {}]
  %s6 = inlined_call_operand.hbm [shape: bf16[128,256], index: 6, kind: input, shape index: {}]
  %s7 = inlined_call_operand.vmem [shape: f32[1,256], index: 7, kind: input, shape index: {}]
  %s8 = inlined_call_operand.hbm [shape: bf16[256,128], index: 8, kind: input, shape index: {}]
  %s9 = inlined_call_operand.vmem [shape: f32[1,128], index: 9, kind: input, shape index: {}]
  %s10 = inlined_call_operand.hbm [shape: f32[2,128,128], index: 10, kind: output, shape index: {}]
  %s11 = sld [smem:[#allocation0]]
  $region93: #{encoder_block.1} parent=0
    _
  %s13 = ssub.s32 1, %s11
  %s14 = scalar_select 0, %s13, %s11
  $region1: #{encoder_block.1} parent=0
    #allocation2 [shape = 'u8[131072]{0}', space=vmem, size = 0x20000, scoped, tag = 'input window, operand 0']
    #allocation3 [shape = 's32[2]{0}', space=sflag, size = 0x8, scoped, tag = 'scoped memory for encoder_block.1']
    #allocation4 [shape = 's32[2]{0}', space=sflag, size = 0x8, scoped, tag = 'scoped memory for encoder_block.1']
    #allocation5 [shape = 'u8[98304]{0}', space=vmem, size = 0x18000, scoped, tag = 'input window, operand 2, single buffered']
    #allocation6 [shape = 's32[1]{0}', space=sflag, size = 0x4, scoped, tag = 'scoped memory for encoder_block.1']
    #allocation7 [shape = 'u8[32768]{0}', space=vmem, size = 0x8000, scoped, tag = 'input window, operand 4, single buffered']
    #allocation8 [shape = 'u8[65536]{0}', space=vmem, size = 0x10000, scoped, tag = 'input window, operand 6, single buffered']
    #allocation9 [shape = 's32[1]{0}', space=sflag, size = 0x4, scoped, tag = 'scoped memory for encoder_block.1']
    #allocation10 [shape = 'u8[65536]{0}', space=vmem, size = 0x10000, scoped, tag = 'input window, operand 8, single buffered']
    #allocation11 [shape = 'u8[131072]{0}', space=vmem, size = 0x20000, scoped, tag = 'output window, operand 0']
    %15 = vsyncpa [#allocation3], 0
    %s16 = scalar_lea.sflag [#allocation3], 1
    %17 = vsyncpa %s16, 0
    %18 = vsyncpa [#allocation6], 0
    %19 = vsyncpa [#allocation9], 0
    %20 = vsyncpa [#allocation4], 0
    %s21 = scalar_lea.sflag [#allocation4], 1
    %22 = vsyncpa %s21, 0
    loop: start=0, step=1, limit=4
    $region2: #{encoder_block.1} parent=1 // loop_pre_header
      _
    $region3: #{encoder_block.1} parent=1 // loop_header
      %s24 = sphi 0, %s28
      %p25 = scmp.ge.s32.totalorder %s24, 4
      %s34 = sphi 0, %s36
      %s37 = sphi 0, %s34
      %s38 = sphi 0, %s37
      %s54 = sphi 0, %s38
      %s60 = sphi 0, %s62
      %s63 = sphi 0, %s60
      %s64 = sphi 0, %s63
      %s80 = sphi 0, %s64
      %s84 = sphi 0, %s84
      %s86 = sphi 0, %s84
      %s87 = sphi 0, %s86
      %s101 = sphi 0, %s87
      %s105 = sphi 0, %s105
      %s107 = sphi 0, %s105
      %s108 = sphi 0, %s107
      %s122 = sphi 0, %s108
      %s126 = sphi 0, %s126
      %s128 = sphi 0, %s126
      %s129 = sphi 0, %s128
      %s143 = sphi 0, %s129
      %s147 = sphi 0, %s147
      %s149 = sphi 0, %s147
      %s150 = sphi 0, %s149
      %s164 = sphi 0, %s150
      %s168 = sphi 0, %s168
      %s170 = sphi 0, %s168
      %s171 = sphi 0, %s170
      %s185 = sphi 0, %s171
      %s189 = sphi 0, %s189
      %s191 = sphi 0, %s189
      %s192 = sphi 0, %s191
      %s206 = sphi 0, %s192
      %s210 = sphi 0, %s210
      %s212 = sphi 0, %s210
      %s213 = sphi 0, %s212
      %s227 = sphi 0, %s213
      %s231 = sphi 0, %s231
      %s233 = sphi 0, %s231
      %s234 = sphi 0, %s233
      %s248 = sphi 0, %s234
      %s254 = sphi 0, %s256
      %s257 = sphi 0, %s254
      %s258 = sphi 0, %s257
      %s274 = sphi 0, %s258
    $region4: #{encoder_block.1} parent=1 // loop_header_branch
      %27 = sbr.rel (%p25) target = $region8
    $region5: #{encoder_block.1} parent=1 // loop_body
      %s29 = ssub.s32 %s24, 1
      %s30 = ssub.s32 %s24, 2
      %s31 = sadd.s32 %s24, 1
      %s32 = ssub.s32 %s24, %s31
      %p33 = scmp.eq.s32.totalorder %s32, 0
      %s35 = sadd.s32 %s34, 1
      %s36 = scalar_select %p33, %s34, %s35
      %p39 = pneg %p33
      %p40 = scmp.eq.s32.totalorder %s24, 1
      %p41 = por %p39, %p40
      %p42 = scmp.ne.s32.totalorder %s34, %s37
      %p43 = scmp.eq.s32.totalorder %s24, 0
      %p44 = por %p42, %p43
      %p45 = scmp.ne.s32.totalorder %s34, %s37
      %p46 = scmp.eq.s32.totalorder %s29, 1
      %p47 = por %p45, %p46
      %p48 = scmp.ne.s32.totalorder %s37, %s38
      %p49 = scmp.eq.s32.totalorder %s29, 0
      %p50 = por %p48, %p49
      %p51 = scmp.ne.s32.totalorder %s37, %s38
      %p52 = scmp.eq.s32.totalorder %s30, 1
      %p53 = por %p51, %p52
      %p55 = scmp.ne.s32.totalorder %s38, %s54
      %p56 = scmp.eq.s32.totalorder %s30, 0
      %p57 = por %p55, %p56
      %s58 = ssub.s32 %s24, %s31
      %p59 = scmp.eq.s32.totalorder %s58, 0
      %s61 = sadd.s32 %s60, 1
      %s62 = scalar_select %p59, %s60, %s61
      %p65 = pneg %p59
      %p66 = scmp.eq.s32.totalorder %s24, 1
      %p67 = por %p65, %p66
      %p68 = scmp.ne.s32.totalorder %s60, %s63
      %p69 = scmp.eq.s32.totalorder %s24, 0
      %p70 = por %p68, %p69
      %p71 = scmp.ne.s32.totalorder %s60, %s63
      %p72 = scmp.eq.s32.totalorder %s29, 1
      %p73 = por %p71, %p72
      %p74 = scmp.ne.s32.totalorder %s63, %s64
      %p75 = scmp.eq.s32.totalorder %s29, 0
      %p76 = por %p74, %p75
      %p77 = scmp.ne.s32.totalorder %s63, %s64
      %p78 = scmp.eq.s32.totalorder %s30, 1
      %p79 = por %p77, %p78
      %p81 = scmp.ne.s32.totalorder %s64, %s80
      %p82 = scmp.eq.s32.totalorder %s30, 0
      %p83 = por %p81, %p82
      %s85 = sadd.s32 %s84, 1
      %p88 = scmp.eq.s32.totalorder %s24, 1
      %p89 = scmp.ne.s32.totalorder %s84, %s86
      %p90 = scmp.eq.s32.totalorder %s24, 0
      %p91 = por %p89, %p90
      %p92 = scmp.ne.s32.totalorder %s84, %s86
      %p93 = scmp.eq.s32.totalorder %s29, 1
      %p94 = por %p92, %p93
      %p95 = scmp.ne.s32.totalorder %s86, %s87
      %p96 = scmp.eq.s32.totalorder %s29, 0
      %p97 = por %p95, %p96
      %p98 = scmp.ne.s32.totalorder %s86, %s87
      %p99 = scmp.eq.s32.totalorder %s30, 1
      %p100 = por %p98, %p99
      %p102 = scmp.ne.s32.totalorder %s87, %s101
      %p103 = scmp.eq.s32.totalorder %s30, 0
      %p104 = por %p102, %p103
      %s106 = sadd.s32 %s105, 1
      %p109 = scmp.eq.s32.totalorder %s24, 1
      %p110 = scmp.ne.s32.totalorder %s105, %s107
      %p111 = scmp.eq.s32.totalorder %s24, 0
      %p112 = por %p110, %p111
      %p113 = scmp.ne.s32.totalorder %s105, %s107
      %p114 = scmp.eq.s32.totalorder %s29, 1
      %p115 = por %p113, %p114
      %p116 = scmp.ne.s32.totalorder %s107, %s108
      %p117 = scmp.eq.s32.totalorder %s29, 0
      %p118 = por %p116, %p117
      %p119 = scmp.ne.s32.totalorder %s107, %s108
      %p120 = scmp.eq.s32.totalorder %s30, 1
      %p121 = por %p119, %p120
      %p123 = scmp.ne.s32.totalorder %s108, %s122
      %p124 = scmp.eq.s32.totalorder %s30, 0
      %p125 = por %p123, %p124
      %s127 = sadd.s32 %s126, 1
      %p130 = scmp.eq.s32.totalorder %s24, 1
      %p131 = scmp.ne.s32.totalorder %s126, %s128
      %p132 = scmp.eq.s32.totalorder %s24, 0
      %p133 = por %p131, %p132
      %p134 = scmp.ne.s32.totalorder %s126, %s128
      %p135 = scmp.eq.s32.totalorder %s29, 1
      %p136 = por %p134, %p135
      %p137 = scmp.ne.s32.totalorder %s128, %s129
      %p138 = scmp.eq.s32.totalorder %s29, 0
      %p139 = por %p137, %p138
      %p140 = scmp.ne.s32.totalorder %s128, %s129
      %p141 = scmp.eq.s32.totalorder %s30, 1
      %p142 = por %p140, %p141
      %p144 = scmp.ne.s32.totalorder %s129, %s143
      %p145 = scmp.eq.s32.totalorder %s30, 0
      %p146 = por %p144, %p145
      %s148 = sadd.s32 %s147, 1
      %p151 = scmp.eq.s32.totalorder %s24, 1
      %p152 = scmp.ne.s32.totalorder %s147, %s149
      %p153 = scmp.eq.s32.totalorder %s24, 0
      %p154 = por %p152, %p153
      %p155 = scmp.ne.s32.totalorder %s147, %s149
      %p156 = scmp.eq.s32.totalorder %s29, 1
      %p157 = por %p155, %p156
      %p158 = scmp.ne.s32.totalorder %s149, %s150
      %p159 = scmp.eq.s32.totalorder %s29, 0
      %p160 = por %p158, %p159
      %p161 = scmp.ne.s32.totalorder %s149, %s150
      %p162 = scmp.eq.s32.totalorder %s30, 1
      %p163 = por %p161, %p162
      %p165 = scmp.ne.s32.totalorder %s150, %s164
      %p166 = scmp.eq.s32.totalorder %s30, 0
      %p167 = por %p165, %p166
      %s169 = sadd.s32 %s168, 1
      %p172 = scmp.eq.s32.totalorder %s24, 1
      %p173 = scmp.ne.s32.totalorder %s168, %s170
      %p174 = scmp.eq.s32.totalorder %s24, 0
      %p175 = por %p173, %p174
      %p176 = scmp.ne.s32.totalorder %s168, %s170
      %p177 = scmp.eq.s32.totalorder %s29, 1
      %p178 = por %p176, %p177
      %p179 = scmp.ne.s32.totalorder %s170, %s171
      %p180 = scmp.eq.s32.totalorder %s29, 0
      %p181 = por %p179, %p180
      %p182 = scmp.ne.s32.totalorder %s170, %s171
      %p183 = scmp.eq.s32.totalorder %s30, 1
      %p184 = por %p182, %p183
      %p186 = scmp.ne.s32.totalorder %s171, %s185
      %p187 = scmp.eq.s32.totalorder %s30, 0
      %p188 = por %p186, %p187
      %s190 = sadd.s32 %s189, 1
      %p193 = scmp.eq.s32.totalorder %s24, 1
      %p194 = scmp.ne.s32.totalorder %s189, %s191
      %p195 = scmp.eq.s32.totalorder %s24, 0
      %p196 = por %p194, %p195
      %p197 = scmp.ne.s32.totalorder %s189, %s191
      %p198 = scmp.eq.s32.totalorder %s29, 1
      %p199 = por %p197, %p198
      %p200 = scmp.ne.s32.totalorder %s191, %s192
      %p201 = scmp.eq.s32.totalorder %s29, 0
      %p202 = por %p200, %p201
      %p203 = scmp.ne.s32.totalorder %s191, %s192
      %p204 = scmp.eq.s32.totalorder %s30, 1
      %p205 = por %p203, %p204
      %p207 = scmp.ne.s32.totalorder %s192, %s206
      %p208 = scmp.eq.s32.totalorder %s30, 0
      %p209 = por %p207, %p208
      %s211 = sadd.s32 %s210, 1
      %p214 = scmp.eq.s32.totalorder %s24, 1
      %p215 = scmp.ne.s32.totalorder %s210, %s212
      %p216 = scmp.eq.s32.totalorder %s24, 0
      %p217 = por %p215, %p216
      %p218 = scmp.ne.s32.totalorder %s210, %s212
      %p219 = scmp.eq.s32.totalorder %s29, 1
      %p220 = por %p218, %p219
      %p221 = scmp.ne.s32.totalorder %s212, %s213
      %p222 = scmp.eq.s32.totalorder %s29, 0
      %p223 = por %p221, %p222
      %p224 = scmp.ne.s32.totalorder %s212, %s213
      %p225 = scmp.eq.s32.totalorder %s30, 1
      %p226 = por %p224, %p225
      %p228 = scmp.ne.s32.totalorder %s213, %s227
      %p229 = scmp.eq.s32.totalorder %s30, 0
      %p230 = por %p228, %p229
      %s232 = sadd.s32 %s231, 1
      %p235 = scmp.eq.s32.totalorder %s24, 1
      %p236 = scmp.ne.s32.totalorder %s231, %s233
      %p237 = scmp.eq.s32.totalorder %s24, 0
      %p238 = por %p236, %p237
      %p239 = scmp.ne.s32.totalorder %s231, %s233
      %p240 = scmp.eq.s32.totalorder %s29, 1
      %p241 = por %p239, %p240
      %p242 = scmp.ne.s32.totalorder %s233, %s234
      %p243 = scmp.eq.s32.totalorder %s29, 0
      %p244 = por %p242, %p243
      %p245 = scmp.ne.s32.totalorder %s233, %s234
      %p246 = scmp.eq.s32.totalorder %s30, 1
      %p247 = por %p245, %p246
      %p249 = scmp.ne.s32.totalorder %s234, %s248
      %p250 = scmp.eq.s32.totalorder %s30, 0
      %p251 = por %p249, %p250
      %s252 = ssub.s32 %s24, %s31
      %p253 = scmp.eq.s32.totalorder %s252, 0
      %s255 = sadd.s32 %s254, 1
      %s256 = scalar_select %p253, %s254, %s255
      %p259 = pneg %p253
      %p260 = scmp.eq.s32.totalorder %s24, 1
      %p261 = por %p259, %p260
      %p262 = scmp.ne.s32.totalorder %s254, %s257
      %p263 = scmp.eq.s32.totalorder %s24, 0
      %p264 = por %p262, %p263
      %p265 = scmp.ne.s32.totalorder %s254, %s257
      %p266 = scmp.eq.s32.totalorder %s29, 1
      %p267 = por %p265, %p266
      %p268 = scmp.ne.s32.totalorder %s257, %s258
      %p269 = scmp.eq.s32.totalorder %s29, 0
      %p270 = por %p268, %p269
      %p271 = scmp.ne.s32.totalorder %s257, %s258
      %p272 = scmp.eq.s32.totalorder %s30, 1
      %p273 = por %p271, %p272
      %p275 = scmp.ne.s32.totalorder %s258, %s274
      %p276 = scmp.eq.s32.totalorder %s30, 0
      %p277 = por %p275, %p276
      %p278 = scmp.le.s32.totalorder 1, %s24
      %p279 = scmp.lt.s32.totalorder %s24, 3
      %p280 = pnand %p278, %p279
      %p281 = pneg %p280
      // Predicated region
      $region9: #{encoder_block.1} parent=5 // pred_check
        _
      $region10: #{encoder_block.1} parent=5 // pred_check_branch
        %283 = sbr.rel (%p280) target = $region12
      $region11: #{encoder_block.1} parent=5 // pred_region
        %s284 = ssub.s32 %s24, 1
        // Predicated region
        $region13: #{encoder_block.1} parent=11 // pred_check
          %p285 = pneg %p97
        $region14: #{encoder_block.1} parent=11 // pred_check_branch
          %287 = sbr.rel (%p285) target = $region16
        $region15: #{encoder_block.1} parent=11 // pred_region
          %s289 = ssub.s32 3072, 3072
          %290 = vsyncadd [#allocation6], %s289
          %s291 = sshll.u32 [#allocation5], 4
          %s292 = int_to_ptr.vmem [resolvable:$true] %s291
          %297 = dma.hbm_to_vmem [thread:$0]  %s2, 3072, %s292, [#allocation6], 192, 192, 12
        $region16: #{encoder_block.1} parent=11 // pred_fallthru
          _
        // Predicated region
        $region17: #{encoder_block.1} parent=11 // pred_check
          %p298 = pneg %p118
        $region18: #{encoder_block.1} parent=11 // pred_check_branch
          %300 = sbr.rel (%p298) target = $region20
        $region19: #{encoder_block.1} parent=11 // pred_region
          _
        $region20: #{encoder_block.1} parent=11 // pred_fallthru
          _
        // Predicated region
        $region21: #{encoder_block.1} parent=11 // pred_check
          %p301 = pneg %p139
        $region22: #{encoder_block.1} parent=11 // pred_check_branch
          %303 = sbr.rel (%p301) target = $region24
        $region23: #{encoder_block.1} parent=11 // pred_region
          %s305 = ssub.s32 1024, 1024
          %306 = vsyncadd [#allocation6], %s305
          %s307 = sshll.u32 [#allocation7], 4
          %s308 = int_to_ptr.vmem [resolvable:$true] %s307
          %313 = dma.hbm_to_vmem [thread:$0]  %s4, 1024, %s308, [#allocation6], 64, 64, 4
        $region24: #{encoder_block.1} parent=11 // pred_fallthru
          _
        // Predicated region
        $region25: #{encoder_block.1} parent=11 // pred_check
          %p314 = pneg %p160
        $region26: #{encoder_block.1} parent=11 // pred_check_branch
          %316 = sbr.rel (%p314) target = $region28
        $region27: #{encoder_block.1} parent=11 // pred_region
          _
        $region28: #{encoder_block.1} parent=11 // pred_fallthru
          _
        // Predicated region
        $region29: #{encoder_block.1} parent=11 // pred_check
          %p317 = pneg %p181
        $region30: #{encoder_block.1} parent=11 // pred_check_branch
          %319 = sbr.rel (%p317) target = $region32
        $region31: #{encoder_block.1} parent=11 // pred_region
          %s321 = ssub.s32 2048, 2048
          %322 = vsyncadd [#allocation9], %s321
          %s323 = sshll.u32 [#allocation8], 4
          %s324 = int_to_ptr.vmem [resolvable:$true] %s323
          %329 = dma.hbm_to_vmem [thread:$0]  %s6, 2048, %s324, [#allocation9], 128, 128, 8
        $region32: #{encoder_block.1} parent=11 // pred_fallthru
          _
        // Predicated region
        $region33: #{encoder_block.1} parent=11 // pred_check
          %p330 = pneg %p202
        $region34: #{encoder_block.1} parent=11 // pred_check_branch
          %332 = sbr.rel (%p330) target = $region36
        $region35: #{encoder_block.1} parent=11 // pred_region
          _
        $region36: #{encoder_block.1} parent=11 // pred_fallthru
          _
        // Predicated region
        $region37: #{encoder_block.1} parent=11 // pred_check
          %p333 = pneg %p223
        $region38: #{encoder_block.1} parent=11 // pred_check_branch
          %335 = sbr.rel (%p333) target = $region40
        $region39: #{encoder_block.1} parent=11 // pred_region
          %s337 = ssub.s32 2048, 2048
          %338 = vsyncadd [#allocation9], %s337
          %s339 = sshll.u32 [#allocation10], 4
          %s340 = int_to_ptr.vmem [resolvable:$true] %s339
          %345 = dma.hbm_to_vmem [thread:$0]  %s8, 2048, %s340, [#allocation9], 64, 64, 4
        $region40: #{encoder_block.1} parent=11 // pred_fallthru
          _
        // Predicated region
        $region41: #{encoder_block.1} parent=11 // pred_check
          %p346 = pneg %p244
        $region42: #{encoder_block.1} parent=11 // pred_check_branch
          %348 = sbr.rel (%p346) target = $region44
        $region43: #{encoder_block.1} parent=11 // pred_region
          _
        $region44: #{encoder_block.1} parent=11 // pred_fallthru
          _
      $region12: #{encoder_block.1} parent=5 // pred_fallthru
        _
      %p349 = scmp.lt.s32.totalorder %s24, 2
      // Predicated region
      $region45: #{encoder_block.1} parent=5 // pred_check
        %p350 = pneg %p349
      $region46: #{encoder_block.1} parent=5 // pred_check_branch
        %352 = sbr.rel (%p350) target = $region48
      $region47: #{encoder_block.1} parent=5 // pred_region
        // Predicated region
        $region49: #{encoder_block.1} parent=47 // pred_check
          %p353 = pneg %p44
        $region50: #{encoder_block.1} parent=47 // pred_check_branch
          %355 = sbr.rel (%p353) target = $region52
        $region51: #{encoder_block.1} parent=47 // pred_region
          %s356 = sand.u32 %s34, 1
          %s357 = scalar_lea.sflag [#allocation3], %s356
          %s358 = sand.u32 %s34, 1
          %s359 = smul.addr %s358, 128
          %s360 = scalar_lea.vmem [#allocation2], %s359
          %s362 = ssub.s32 2048, 2048
          %363 = vsyncadd %s357, %s362
          %s364 = smul.addr %s24, 16
          %s365 = smul.addr %s364, 128
          %s366 = scalar_lea.hbm %s0, %s365
          %s367 = sshll.u32 %s360, 4
          %s368 = int_to_ptr.vmem [resolvable:$true] %s367
          %373 = dma.hbm_to_vmem [thread:$0]  %s366, 2048, %s368, %s357, 128, 128, 8
        $region52: #{encoder_block.1} parent=47 // pred_fallthru
          _
        // Predicated region
        $region53: #{encoder_block.1} parent=47 // pred_check
          %p374 = pneg %p70
        $region54: #{encoder_block.1} parent=47 // pred_check_branch
          %376 = sbr.rel (%p374) target = $region56
        $region55: #{encoder_block.1} parent=47 // pred_region
          %p377 = scmp.lt.s32.totalorder %s24, 1
          %s378 = scalar_select %p377, %s24, 1
          %s379 = scalar_lea.vmem %s1, %s378
        $region56: #{encoder_block.1} parent=47 // pred_fallthru
          _
      $region48: #{encoder_block.1} parent=5 // pred_fallthru
        _
      %p380 = scmp.le.s32.totalorder 1, %s24
      %p381 = scmp.lt.s32.totalorder %s24, 3
      %p382 = pnand %p380, %p381
      %p383 = pneg %p382
      // Predicated region
      $region57: #{encoder_block.1} parent=5 // pred_check
        _
      $region58: #{encoder_block.1} parent=5 // pred_check_branch
        %385 = sbr.rel (%p382) target = $region60
      $region59: #{encoder_block.1} parent=5 // pred_region
        %s386 = ssub.s32 %s24, 1
        %s387 = sand.u32 %s37, 1
        %s388 = scalar_lea.sflag [#allocation3], %s387
        %s389 = sand.u32 %s37, 1
        %s390 = smul.addr %s389, 128
        %s391 = scalar_lea.vmem [#allocation2], %s390
        // Predicated region
        $region61: #{encoder_block.1} parent=59 // pred_check
          %p392 = pneg %p50
        $region62: #{encoder_block.1} parent=59 // pred_check_branch
          %394 = sbr.rel (%p392) target = $region64
        $region63: #{encoder_block.1} parent=59 // pred_region
          %395 = dma.done %s388, 2048
        $region64: #{encoder_block.1} parent=59 // pred_fallthru
          _
        // Predicated region
        $region65: #{encoder_block.1} parent=59 // pred_check
          %p396 = pneg %p97
        $region66: #{encoder_block.1} parent=59 // pred_check_branch
          %398 = sbr.rel (%p396) target = $region68
        $region67: #{encoder_block.1} parent=59 // pred_region
          %399 = dma.done [#allocation6], 3072
        $region68: #{encoder_block.1} parent=59 // pred_fallthru
          _
        // Predicated region
        $region69: #{encoder_block.1} parent=59 // pred_check
          %p400 = pneg %p139
        $region70: #{encoder_block.1} parent=59 // pred_check_branch
          %402 = sbr.rel (%p400) target = $region72
        $region71: #{encoder_block.1} parent=59 // pred_region
          %403 = dma.done [#allocation6], 1024
        $region72: #{encoder_block.1} parent=59 // pred_fallthru
          _
        // Predicated region
        $region73: #{encoder_block.1} parent=59 // pred_check
          %p404 = pneg %p181
        $region74: #{encoder_block.1} parent=59 // pred_check_branch
          %406 = sbr.rel (%p404) target = $region76
        $region75: #{encoder_block.1} parent=59 // pred_region
          %407 = dma.done [#allocation9], 2048
        $region76: #{encoder_block.1} parent=59 // pred_fallthru
          _
        // Predicated region
        $region77: #{encoder_block.1} parent=59 // pred_check
          %p408 = pneg %p223
        $region78: #{encoder_block.1} parent=59 // pred_check_branch
          %410 = sbr.rel (%p408) target = $region80
        $region79: #{encoder_block.1} parent=59 // pred_region
          %411 = dma.done [#allocation9], 2048
        $region80: #{encoder_block.1} parent=59 // pred_fallthru
          _
        %s412 = sand.u32 %s37, 1
        %s413 = scalar_lea.sflag [#allocation3], %s412
        %s414 = sand.u32 %s37, 1
        %s415 = smul.addr %s414, 128
        %s416 = scalar_lea.vmem [#allocation2], %s415
        %p417 = pneg %p50
        %p418 = pneg %p47
        %p419 = scmp.lt.s32.totalorder %s29, 1
        %s420 = scalar_select %p419, %s29, 1
        %s421 = scalar_lea.vmem %s1, %s420
        %p422 = pneg %p76
        %p423 = pneg %p73
        %p424 = pneg %p97
        %p425 = pneg %p94
        %p426 = pneg %p118
        %p427 = pneg %p115
        %p428 = pneg %p139
        %p429 = pneg %p136
        %p430 = pneg %p160
        %p431 = pneg %p157
        %p432 = pneg %p181
        %p433 = pneg %p178
        %p434 = pneg %p202
        %p435 = pneg %p199
        %p436 = pneg %p223
        %p437 = pneg %p220
        %p438 = pneg %p244
        %p439 = pneg %p241
        %p440 = pneg %p270
        %p441 = pneg %p267
        %s442 = sand.u32 %s257, 1
        %s443 = scalar_lea.sflag [#allocation4], %s442
        %s444 = sand.u32 %s257, 1
        %s445 = smul.addr %s444, 128
        %s446 = scalar_lea.vmem [#allocation11], %s445
        %p447 = scmp.lt.s32.totalorder %s29, 1
        %s448 = scalar_select %p447, %s29, 1
        %s449 = scalar_lea.vmem %s1, %s448
        %v451 = vld [vmem:[%s391] sm:$0xff]
        %v452 = vld [vmem:[%s391 + $0x8] sm:$0xff]
        %v453 = vld [vmem:[%s391 + $0x10] sm:$0xff]
        %v454 = vld [vmem:[%s391 + $0x18] sm:$0xff]
        %v455 = vld [vmem:[%s391 + $0x20] sm:$0xff]
        %v456 = vld [vmem:[%s391 + $0x28] sm:$0xff]
        %v457 = vld [vmem:[%s391 + $0x30] sm:$0xff]
        %v458 = vld [vmem:[%s391 + $0x38] sm:$0xff]
        %v459 = vld [vmem:[%s391 + $0x40] sm:$0xff]
        %v460 = vld [vmem:[%s391 + $0x48] sm:$0xff]
        %v461 = vld [vmem:[%s391 + $0x50] sm:$0xff]
        %v462 = vld [vmem:[%s391 + $0x58] sm:$0xff]
        %v463 = vld [vmem:[%s391 + $0x60] sm:$0xff]
        %v464 = vld [vmem:[%s391 + $0x68] sm:$0xff]
        %v465 = vld [vmem:[%s391 + $0x70] sm:$0xff]
        %v466 = vld [vmem:[%s391 + $0x78] sm:$0xff]
        %v467 = vpack.c.bf16 %v452, %v451
        %v468 = vpack.c.bf16 %v454, %v453
        %v469 = vpack.c.bf16 %v456, %v455
        %v470 = vpack.c.bf16 %v458, %v457
        %v471 = vpack.c.bf16 %v460, %v459
        %v472 = vpack.c.bf16 %v462, %v461
        %v473 = vpack.c.bf16 %v464, %v463
        %v474 = vpack.c.bf16 %v466, %v465
        %v475 = vld [vmem:[#allocation5] sm:$0xff]
        %v476 = vld [vmem:[#allocation5 + $0x8] sm:$0xf]
        %v477 = vld [vmem:[#allocation5 + $0xc] sm:$0xff]
        %v478 = vld [vmem:[#allocation5 + $0x14] sm:$0xf]
        %v479 = vld [vmem:[#allocation5 + $0x18] sm:$0xff]
        %v480 = vld [vmem:[#allocation5 + $0x20] sm:$0xf]
        %v481 = vld [vmem:[#allocation5 + $0x24] sm:$0xff]
        %v482 = vld [vmem:[#allocation5 + $0x2c] sm:$0xf]
        %v483 = vld [vmem:[#allocation5 + $0x30] sm:$0xff]
        %v484 = vld [vmem:[#allocation5 + $0x38] sm:$0xf]
        %v485 = vld [vmem:[#allocation5 + $0x3c] sm:$0xff]
        %v486 = vld [vmem:[#allocation5 + $0x44] sm:$0xf]
        %v487 = vld [vmem:[#allocation5 + $0x48] sm:$0xff]
        %v488 = vld [vmem:[#allocation5 + $0x50] sm:$0xf]
        %v489 = vld [vmem:[#allocation5 + $0x54] sm:$0xff]
        %v490 = vld [vmem:[#allocation5 + $0x5c] sm:$0xf]
        %v491 = vld [vmem:[#allocation5 + $0x60] sm:$0xff]
        %v492 = vld [vmem:[#allocation5 + $0x68] sm:$0xf]
        %v493 = vld [vmem:[#allocation5 + $0x6c] sm:$0xff]
        %v494 = vld [vmem:[#allocation5 + $0x74] sm:$0xf]
        %v495 = vld [vmem:[#allocation5 + $0x78] sm:$0xff]
        %v496 = vld [vmem:[#allocation5 + $0x80] sm:$0xf]
        %v497 = vld [vmem:[#allocation5 + $0x84] sm:$0xff]
        %v498 = vld [vmem:[#allocation5 + $0x8c] sm:$0xf]
        %v499 = vld [vmem:[#allocation5 + $0x90] sm:$0xff]
        %v500 = vld [vmem:[#allocation5 + $0x98] sm:$0xf]
        %v501 = vld [vmem:[#allocation5 + $0x9c] sm:$0xff]
        %v502 = vld [vmem:[#allocation5 + $0xa4] sm:$0xf]
        %v503 = vld [vmem:[#allocation5 + $0xa8] sm:$0xff]
        %v504 = vld [vmem:[#allocation5 + $0xb0] sm:$0xf]
        %v505 = vld [vmem:[#allocation5 + $0xb4] sm:$0xff]
        %v506 = vld [vmem:[#allocation5 + $0xbc] sm:$0xf]
        %v507 = vld [vmem:[%s3] sm:$0x7]
        %v509 = vlaneseq
        %v510 = vshrl.u32 %v509, 7
        %v511 = vsub.s32 0, %v510
        %v512 = vrot.slane %v507, %v511
        %v513 = vlaneseq
        %v514 = vshrl.u32 %v513, 7
        %v515 = vsub.s32 1, %v514
        %v516 = vrot.slane %v507, %v515
        %v517 = vlaneseq
        %v518 = vshrl.u32 %v517, 7
        %v519 = vsub.s32 2, %v518
        %v520 = vrot.slane %v507, %v519
        %v556 = vunpack.c.l.b16 %v475
        %v557 = vunpack.c.h.b16 %v475
        %v558 = vunpack.c.l.b16 %v476
        %v559 = vunpack.c.l.b16 %v477
        %v560 = vunpack.c.h.b16 %v477
        %v561 = vunpack.c.l.b16 %v478
        %v562 = vunpack.c.l.b16 %v479
        %v563 = vunpack.c.h.b16 %v479
        %v564 = vunpack.c.l.b16 %v480
        %v565 = vunpack.c.l.b16 %v481
        %v566 = vunpack.c.h.b16 %v481
        %v567 = vunpack.c.l.b16 %v482
        %v568 = vunpack.c.l.b16 %v483
        %v569 = vunpack.c.h.b16 %v483
        %v570 = vunpack.c.l.b16 %v484
        %v571 = vunpack.c.l.b16 %v485
        %v572 = vunpack.c.h.b16 %v485
        %v573 = vunpack.c.l.b16 %v486
        %v574 = vunpack.c.l.b16 %v487
        %v575 = vunpack.c.h.b16 %v487
        %v576 = vunpack.c.l.b16 %v488
        %v577 = vunpack.c.l.b16 %v489
        %v578 = vunpack.c.h.b16 %v489
        %v579 = vunpack.c.l.b16 %v490
        %v580 = vunpack.c.l.b16 %v491
        %v581 = vunpack.c.h.b16 %v491
        %v582 = vunpack.c.l.b16 %v492
        %v583 = vunpack.c.l.b16 %v493
        %v584 = vunpack.c.h.b16 %v493
        %v585 = vunpack.c.l.b16 %v494
        %v586 = vunpack.c.l.b16 %v495
        %v587 = vunpack.c.h.b16 %v495
        %v588 = vunpack.c.l.b16 %v496
        %v589 = vunpack.c.l.b16 %v497
        %v590 = vunpack.c.h.b16 %v497
        %v591 = vunpack.c.l.b16 %v498
        %v592 = vunpack.c.l.b16 %v499
        %v593 = vunpack.c.h.b16 %v499
        %v594 = vunpack.c.l.b16 %v500
        %v595 = vunpack.c.l.b16 %v501
        %v596 = vunpack.c.h.b16 %v501
        %v597 = vunpack.c.l.b16 %v502
        %v598 = vunpack.c.l.b16 %v503
        %v599 = vunpack.c.h.b16 %v503
        %v600 = vunpack.c.l.b16 %v504
        %v601 = vunpack.c.l.b16 %v505
        %v602 = vunpack.c.h.b16 %v505
        %v603 = vunpack.c.l.b16 %v506
        %v604 = vpack.c.b16 %v559, %v556
        %v605 = vpack.c.b16 %v560, %v557
        %v606 = vpack.c.b16 %v561, %v558
        %v607 = vpack.c.b16 %v565, %v562
        %v608 = vpack.c.b16 %v566, %v563
        %v609 = vpack.c.b16 %v567, %v564
        %v610 = vpack.c.b16 %v571, %v568
        %v611 = vpack.c.b16 %v572, %v569
        %v612 = vpack.c.b16 %v573, %v570
        %v613 = vpack.c.b16 %v577, %v574
        %v614 = vpack.c.b16 %v578, %v575
        %v615 = vpack.c.b16 %v579, %v576
        %v616 = vpack.c.b16 %v583, %v580
        %v617 = vpack.c.b16 %v584, %v581
        %v618 = vpack.c.b16 %v585, %v582
        %v619 = vpack.c.b16 %v589, %v586
        %v620 = vpack.c.b16 %v590, %v587
        %v621 = vpack.c.b16 %v591, %v588
        %v622 = vpack.c.b16 %v595, %v592
        %v623 = vpack.c.b16 %v596, %v593
        %v624 = vpack.c.b16 %v597, %v594
        %v625 = vpack.c.b16 %v601, %v598
        %v626 = vpack.c.b16 %v602, %v599
        %v627 = vpack.c.b16 %v603, %v600
        %652 = vmatprep.subr.bf16.mxu0 %v605
        %653 = vmatpush1.bf16.msra.mxu0 %v604
        %654 = vmatprep.subr.bf16.mxu0 %v608
        %655 = vmatpush1.bf16.msra.mxu0 %v607
        %656 = vmatprep.subr.bf16.mxu0 %v611
        %657 = vmatpush1.bf16.msra.mxu0 %v610
        %658 = vmatprep.subr.bf16.mxu0 %v614
        %659 = vmatpush1.bf16.msra.mxu0 %v613
        %660 = vmatprep.subr.bf16.mxu0 %v617
        %661 = vmatpush1.bf16.msra.mxu0 %v616
        %662 = vmatprep.subr.bf16.mxu0 %v620
        %663 = vmatpush1.bf16.msra.mxu0 %v619
        %664 = vmatprep.subr.bf16.mxu0 %v623
        %665 = vmatpush1.bf16.msra.mxu0 %v622
        %666 = vmatprep.subr.bf16.mxu0 %v626
        %667 = vmatpush1.bf16.msra.mxu0 %v625
        %668 = vmatprep.subr.bf16.mxu0 0
        %669 = vmatpush1.bf16.msra.mxu0 0
        %670 = vmatprep.subr.bf16.mxu0 0
        %671 = vmatpush1.bf16.msra.mxu0 0
        %672 = vmatprep.subr.bf16.mxu0 0
        %673 = vmatpush1.bf16.msra.mxu0 0
        %674 = vmatprep.subr.bf16.mxu0 0
        %675 = vmatpush1.bf16.msra.mxu0 0
        %676 = vmatprep.subr.bf16.mxu0 0
        %677 = vmatpush1.bf16.msra.mxu0 0
        %678 = vmatprep.subr.bf16.mxu0 0
        %679 = vmatpush1.bf16.msra.mxu0 0
        %680 = vmatprep.subr.bf16.mxu0 0
        %681 = vmatpush1.bf16.msra.mxu0 0
        %682 = vmatprep.subr.bf16.mxu0 0
        %683 = vmatpush1.bf16.msra.mxu0 0
        %684 = vmatprep.mubr.bf16.mxu0 0
        %685 = vmatmul.mubr.bf16.gmra.mrb[0].mxu0 %v467
        %v686 = vpop.f32.mrb[0].mxu0
        %v687 = vadd.f32 %v512, %v686
        %v688 = vpop.f32.mrb[0].mxu0
        %v689 = vadd.f32 %v516, %v688
        %v690 = vpop.f32.mrb[0].mxu0
        %v691 = vadd.f32 %v512, %v690
        %v692 = vpop.f32.mrb[0].mxu0
        %v693 = vadd.f32 %v516, %v692
        %694 = vmatprep.mubr.bf16.mxu0 0
        %695 = vmatmul.mubr.bf16.gmra.mrb[0].mxu0 %v468
        %v696 = vpop.f32.mrb[0].mxu0
        %v697 = vadd.f32 %v512, %v696
        %v698 = vpop.f32.mrb[0].mxu0
        %v699 = vadd.f32 %v516, %v698
        %v700 = vpop.f32.mrb[0].mxu0
        %v701 = vadd.f32 %v512, %v700
        %v702 = vpop.f32.mrb[0].mxu0
        %v703 = vadd.f32 %v516, %v702
        %704 = vmatprep.mubr.bf16.mxu0 0
        %705 = vmatmul.mubr.bf16.gmra.mrb[0].mxu0 %v469
        %v706 = vpop.f32.mrb[0].mxu0
        %v707 = vadd.f32 %v512, %v706
        %v708 = vpop.f32.mrb[0].mxu0
        %v709 = vadd.f32 %v516, %v708
        %v710 = vpop.f32.mrb[0].mxu0
        %v711 = vadd.f32 %v512, %v710
        %v712 = vpop.f32.mrb[0].mxu0
        %v713 = vadd.f32 %v516, %v712
        %714 = vmatprep.mubr.bf16.mxu0 0
        %715 = vmatmul.mubr.bf16.gmra.mrb[0].mxu0 %v470
        %v716 = vpop.f32.mrb[0].mxu0
        %v717 = vadd.f32 %v512, %v716
        %v718 = vpop.f32.mrb[0].mxu0
        %v719 = vadd.f32 %v516, %v718
        %v720 = vpop.f32.mrb[0].mxu0
        %v721 = vadd.f32 %v512, %v720
        %v722 = vpop.f32.mrb[0].mxu0
        %v723 = vadd.f32 %v516, %v722
        %724 = vmatprep.mubr.bf16.mxu0 0
        %725 = vmatmul.mubr.bf16.gmra.mrb[0].mxu0 %v471
        %v726 = vpop.f32.mrb[0].mxu0
        %v727 = vadd.f32 %v512, %v726
        %v728 = vpop.f32.mrb[0].mxu0
        %v729 = vadd.f32 %v516, %v728
        %v730 = vpop.f32.mrb[0].mxu0
        %v731 = vadd.f32 %v512, %v730
        %v732 = vpop.f32.mrb[0].mxu0
        %v733 = vadd.f32 %v516, %v732
        %734 = vmatprep.mubr.bf16.mxu0 0
        %735 = vmatmul.mubr.bf16.gmra.mrb[0].mxu0 %v472
        %v736 = vpop.f32.mrb[0].mxu0
        %v737 = vadd.f32 %v512, %v736
        %v738 = vpop.f32.mrb[0].mxu0
        %v739 = vadd.f32 %v516, %v738
        %v740 = vpop.f32.mrb[0].mxu0
        %v741 = vadd.f32 %v512, %v740
        %v742 = vpop.f32.mrb[0].mxu0
        %v743 = vadd.f32 %v516, %v742
        %744 = vmatprep.mubr.bf16.mxu0 0
        %745 = vmatmul.mubr.bf16.gmra.mrb[0].mxu0 %v473
        %v746 = vpop.f32.mrb[0].mxu0
        %v747 = vadd.f32 %v512, %v746
        %v748 = vpop.f32.mrb[0].mxu0
        %v749 = vadd.f32 %v516, %v748
        %v750 = vpop.f32.mrb[0].mxu0
        %v751 = vadd.f32 %v512, %v750
        %v752 = vpop.f32.mrb[0].mxu0
        %v753 = vadd.f32 %v516, %v752
        %754 = vmatprep.mubr.bf16.mxu0 0
        %755 = vmatmul.mubr.bf16.gmra.mrb[0].mxu0 %v474
        %v756 = vpop.f32.mrb[0].mxu0
        %v757 = vadd.f32 %v512, %v756
        %v758 = vpop.f32.mrb[0].mxu0
        %v759 = vadd.f32 %v516, %v758
        %v760 = vpop.f32.mrb[0].mxu0
        %v761 = vadd.f32 %v512, %v760
        %v762 = vpop.f32.mrb[0].mxu0
        %v763 = vadd.f32 %v516, %v762
        %764 = vdwg.mxu0
        %765 = vmatprep.subr.bf16.mxu0 0
        %766 = vmatpush1.bf16.msra.mxu0 %v606
        %767 = vmatprep.subr.bf16.mxu0 0
        %768 = vmatpush1.bf16.msra.mxu0 %v609
        %769 = vmatprep.subr.bf16.mxu0 0
        %770 = vmatpush1.bf16.msra.mxu0 %v612
        %771 = vmatprep.subr.bf16.mxu0 0
        %772 = vmatpush1.bf16.msra.mxu0 %v615
        %773 = vmatprep.subr.bf16.mxu0 0
        %774 = vmatpush1.bf16.msra.mxu0 %v618
        %775 = vmatprep.subr.bf16.mxu0 0
        %776 = vmatpush1.bf16.msra.mxu0 %v621
        %777 = vmatprep.subr.bf16.mxu0 0
        %778 = vmatpush1.bf16.msra.mxu0 %v624
        %779 = vmatprep.subr.bf16.mxu0 0
        %780 = vmatpush1.bf16.msra.mxu0 %v627
        %781 = vmatprep.subr.bf16.mxu0 0
        %782 = vmatpush1.bf16.msra.mxu0 0
        %783 = vmatprep.subr.bf16.mxu0 0
        %784 = vmatpush1.bf16.msra.mxu0 0
        %785 = vmatprep.subr.bf16.mxu0 0
        %786 = vmatpush1.bf16.msra.mxu0 0
        %787 = vmatprep.subr.bf16.mxu0 0
        %788 = vmatpush1.bf16.msra.mxu0 0
        %789 = vmatprep.subr.bf16.mxu0 0
        %790 = vmatpush1.bf16.msra.mxu0 0
        %791 = vmatprep.subr.bf16.mxu0 0
        %792 = vmatpush1.bf16.msra.mxu0 0
        %793 = vmatprep.subr.bf16.mxu0 0
        %794 = vmatpush1.bf16.msra.mxu0 0
        %795 = vmatprep.subr.bf16.mxu0 0
        %796 = vmatpush1.bf16.msra.mxu0 0
        %797 = vmatprep.mubr.bf16.mxu0 0
        %798 = vmatmul.mubr.bf16.gmra.mrb[0].mxu0 %v467
        %v799 = vpop.f32.mrb[0].mxu0
        %v800 = vadd.f32 %v520, %v799
        %v801 = vpop.f32.mrb[0].mxu0
        %v802 = vpop.f32.mrb[0].mxu0
        %v803 = vadd.f32 %v520, %v802
        %v804 = vpop.f32.mrb[0].mxu0
        %805 = vmatprep.mubr.bf16.mxu0 0
        %806 = vmatmul.mubr.bf16.gmra.mrb[0].mxu0 %v468
        %v807 = vpop.f32.mrb[0].mxu0
        %v808 = vadd.f32 %v520, %v807
        %v809 = vpop.f32.mrb[0].mxu0
        %v810 = vpop.f32.mrb[0].mxu0
        %v811 = vadd.f32 %v520, %v810
        %v812 = vpop.f32.mrb[0].mxu0
        %813 = vmatprep.mubr.bf16.mxu0 0
        %814 = vmatmul.mubr.bf16.gmra.mrb[0].mxu0 %v469
        %v815 = vpop.f32.mrb[0].mxu0
        %v816 = vadd.f32 %v520, %v815
        %v817 = vpop.f32.mrb[0].mxu0
        %v818 = vpop.f32.mrb[0].mxu0
        %v819 = vadd.f32 %v520, %v818
        %v820 = vpop.f32.mrb[0].mxu0
        %821 = vmatprep.mubr.bf16.mxu0 0
        %822 = vmatmul.mubr.bf16.gmra.mrb[0].mxu0 %v470
        %v823 = vpop.f32.mrb[0].mxu0
        %v824 = vadd.f32 %v520, %v823
        %v825 = vpop.f32.mrb[0].mxu0
        %v826 = vpop.f32.mrb[0].mxu0
        %v827 = vadd.f32 %v520, %v826
        %v828 = vpop.f32.mrb[0].mxu0
        %829 = vmatprep.mubr.bf16.mxu0 0
        %830 = vmatmul.mubr.bf16.gmra.mrb[0].mxu0 %v471
        %v831 = vpop.f32.mrb[0].mxu0
        %v832 = vadd.f32 %v520, %v831
        %v833 = vpop.f32.mrb[0].mxu0
        %v834 = vpop.f32.mrb[0].mxu0
        %v835 = vadd.f32 %v520, %v834
        %v836 = vpop.f32.mrb[0].mxu0
        %837 = vmatprep.mubr.bf16.mxu0 0
        %838 = vmatmul.mubr.bf16.gmra.mrb[0].mxu0 %v472
        %v839 = vpop.f32.mrb[0].mxu0
        %v840 = vadd.f32 %v520, %v839
        %v841 = vpop.f32.mrb[0].mxu0
        %v842 = vpop.f32.mrb[0].mxu0
        %v843 = vadd.f32 %v520, %v842
        %v844 = vpop.f32.mrb[0].mxu0
        %845 = vmatprep.mubr.bf16.mxu0 0
        %846 = vmatmul.mubr.bf16.gmra.mrb[0].mxu0 %v473
        %v847 = vpop.f32.mrb[0].mxu0
        %v848 = vadd.f32 %v520, %v847
        %v849 = vpop.f32.mrb[0].mxu0
        %v850 = vpop.f32.mrb[0].mxu0
        %v851 = vadd.f32 %v520, %v850
        %v852 = vpop.f32.mrb[0].mxu0
        %853 = vmatprep.mubr.bf16.mxu0 0
        %854 = vmatmul.mubr.bf16.gmra.mrb[0].mxu0 %v474
        %v855 = vpop.f32.mrb[0].mxu0
        %v856 = vadd.f32 %v520, %v855
        %v857 = vpop.f32.mrb[0].mxu0
        %v858 = vpop.f32.mrb[0].mxu0
        %v859 = vadd.f32 %v520, %v858
        %v860 = vpop.f32.mrb[0].mxu0
        %861 = vdwg.mxu0
        %v862 = vmul.f32 %v687, 0.17677669
        %v863 = vmul.f32 %v691, 0.17677669
        %v864 = vmul.f32 %v697, 0.17677669
        %v865 = vmul.f32 %v701, 0.17677669
        %v866 = vmul.f32 %v707, 0.17677669
        %v867 = vmul.f32 %v711, 0.17677669
        %v868 = vmul.f32 %v717, 0.17677669
        %v869 = vmul.f32 %v721, 0.17677669
        %v870 = vmul.f32 %v727, 0.17677669
        %v871 = vmul.f32 %v731, 0.17677669
        %v872 = vmul.f32 %v737, 0.17677669
        %v873 = vmul.f32 %v741, 0.17677669
        %v874 = vmul.f32 %v747, 0.17677669
        %v875 = vmul.f32 %v751, 0.17677669
        %v876 = vmul.f32 %v757, 0.17677669
        %v877 = vmul.f32 %v761, 0.17677669
        %v878 = vpack.c.bf16 %v863, %v862
        %v879 = vpack.c.bf16 %v865, %v864
        %v880 = vpack.c.bf16 %v867, %v866
        %v881 = vpack.c.bf16 %v869, %v868
        %v882 = vpack.c.bf16 %v871, %v870
        %v883 = vpack.c.bf16 %v873, %v872
        %v884 = vpack.c.bf16 %v875, %v874
        %v885 = vpack.c.bf16 %v877, %v876
        %v886 = vpack.c.bf16 %v693, %v689
        %v887 = vpack.c.bf16 %v703, %v699
        %v888 = vpack.c.bf16 %v713, %v709
        %v889 = vpack.c.bf16 %v723, %v719
        %v890 = vpack.c.bf16 %v733, %v729
        %v891 = vpack.c.bf16 %v743, %v739
        %v892 = vpack.c.bf16 %v753, %v749
        %v893 = vpack.c.bf16 %v763, %v759
        %v894 = vpack.c.bf16 %v803, %v800
        %v895 = vpack.c.bf16 %v811, %v808
        %v896 = vpack.c.bf16 %v819, %v816
        %v897 = vpack.c.bf16 %v827, %v824
        %v898 = vpack.c.bf16 %v835, %v832
        %v899 = vpack.c.bf16 %v843, %v840
        %v900 = vpack.c.bf16 %v851, %v848
        %v901 = vpack.c.bf16 %v859, %v856
        %v902 = vld [vmem:[%s449] sm:$0x1]
        %v904 = vlaneseq
        %v905 = vshrl.u32 %v904, 7
        %v906 = vsub.s32 0, %v905
        %v907 = vrot.slane %v902, %v906
        %vm909 = vcmask 261120
        %v911 = vsel %vm909, %v878, 0
        %v914 = vsel %vm909, %v879, 0
        %v917 = vsel %vm909, %v880, 0
        %v920 = vsel %vm909, %v881, 0
        %v923 = vsel %vm909, %v882, 0
        %v926 = vsel %vm909, %v883, 0
        %v929 = vsel %vm909, %v884, 0
        %v932 = vsel %vm909, %v885, 0
        %v935 = vsel %vm909, %v886, 0
        %v938 = vsel %vm909, %v887, 0
        %v941 = vsel %vm909, %v888, 0
        %v944 = vsel %vm909, %v889, 0
        %v947 = vsel %vm909, %v890, 0
        %v950 = vsel %vm909, %v891, 0
        %v953 = vsel %vm909, %v892, 0
        %v956 = vsel %vm909, %v893, 0
        %958 = vmatprep.subr.bf16.mxu0 0
        %959 = vmatpush1.bf16.xpose.msra.mxu0 %v935
        %960 = vmatprep.subr.bf16.mxu0 0
        %961 = vmatpush1.bf16.xpose.msra.mxu0 %v938
        %962 = vmatprep.subr.bf16.mxu0 0
        %963 = vmatpush1.bf16.xpose.msra.mxu0 %v941
        %964 = vmatprep.subr.bf16.mxu0 0
        %965 = vmatpush1.bf16.xpose.msra.mxu0 %v944
        %966 = vmatprep.subr.bf16.mxu0 0
        %967 = vmatpush1.bf16.xpose.msra.mxu0 %v947
        %968 = vmatprep.subr.bf16.mxu0 0
        %969 = vmatpush1.bf16.xpose.msra.mxu0 %v950
        %970 = vmatprep.subr.bf16.mxu0 0
        %971 = vmatpush1.bf16.xpose.msra.mxu0 %v953
        %972 = vmatprep.subr.bf16.mxu0 0
        %973 = vmatpush1.bf16.xpose.msra.mxu0 %v956
        %974 = vmatprep.subr.bf16.mxu0 0
        %975 = vmatpush1.bf16.xpose.msra.mxu0 0
        %976 = vmatprep.subr.bf16.mxu0 0
        %977 = vmatpush1.bf16.xpose.msra.mxu0 0
        %978 = vmatprep.subr.bf16.mxu0 0
        %979 = vmatpush1.bf16.xpose.msra.mxu0 0
        %980 = vmatprep.subr.bf16.mxu0 0
        %981 = vmatpush1.bf16.xpose.msra.mxu0 0
        %982 = vmatprep.subr.bf16.mxu0 0
        %983 = vmatpush1.bf16.xpose.msra.mxu0 0
        %984 = vmatprep.subr.bf16.mxu0 0
        %985 = vmatpush1.bf16.xpose.msra.mxu0 0
        %986 = vmatprep.subr.bf16.mxu0 0
        %987 = vmatpush1.bf16.xpose.msra.mxu0 0
        %988 = vmatprep.subr.bf16.mxu0 0
        %989 = vmatpush1.bf16.xpose.msra.mxu0 0
        %990 = vmatprep.mubr.bf16.mxu0 0
        %991 = vmatmul.mubr.bf16.gmra.mrb[0].mxu0 %v911
        %v992 = vpop.f32.mrb[0].mxu0
        %v993 = vadd.f32 %v907, %v992
        %v994 = vpop.f32.mrb[0].mxu0
        %v995 = vpop.f32.mrb[0].mxu0
        %v996 = vadd.f32 %v907, %v995
        %v997 = vpop.f32.mrb[0].mxu0
        %998 = vmatprep.mubr.bf16.mxu0 0
        %999 = vmatmul.mubr.bf16.gmra.mrb[0].mxu0 %v914
        %v1000 = vpop.f32.mrb[0].mxu0
        %v1001 = vadd.f32 %v907, %v1000
        %v1002 = vpop.f32.mrb[0].mxu0
        %v1003 = vpop.f32.mrb[0].mxu0
        %v1004 = vadd.f32 %v907, %v1003
        %v1005 = vpop.f32.mrb[0].mxu0
        %1006 = vmatprep.mubr.bf16.mxu0 0
        %1007 = vmatmul.mubr.bf16.gmra.mrb[0].mxu0 %v917
        %v1008 = vpop.f32.mrb[0].mxu0
        %v1009 = vadd.f32 %v907, %v1008
        %v1010 = vpop.f32.mrb[0].mxu0
        %v1011 = vpop.f32.mrb[0].mxu0
        %v1012 = vadd.f32 %v907, %v1011
        %v1013 = vpop.f32.mrb[0].mxu0
        %1014 = vmatprep.mubr.bf16.mxu0 0
        %1015 = vmatmul.mubr.bf16.gmra.mrb[0].mxu0 %v920
        %v1016 = vpop.f32.mrb[0].mxu0
        %v1017 = vadd.f32 %v907, %v1016
        %v1018 = vpop.f32.mrb[0].mxu0
        %v1019 = vpop.f32.mrb[0].mxu0
        %v1020 = vadd.f32 %v907, %v1019
        %v1021 = vpop.f32.mrb[0].mxu0
        %1022 = vmatprep.mubr.bf16.mxu0 0
        %1023 = vmatmul.mubr.bf16.gmra.mrb[0].mxu0 %v923
        %v1024 = vpop.f32.mrb[0].mxu0
        %v1025 = vadd.f32 %v907, %v1024
        %v1026 = vpop.f32.mrb[0].mxu0
        %v1027 = vpop.f32.mrb[0].mxu0
        %v1028 = vadd.f32 %v907, %v1027
        %v1029 = vpop.f32.mrb[0].mxu0
        %1030 = vmatprep.mubr.bf16.mxu0 0
        %1031 = vmatmul.mubr.bf16.gmra.mrb[0].mxu0 %v926
        %v1032 = vpop.f32.mrb[0].mxu0
        %v1033 = vadd.f32 %v907, %v1032
        %v1034 = vpop.f32.mrb[0].mxu0
        %v1035 = vpop.f32.mrb[0].mxu0
        %v1036 = vadd.f32 %v907, %v1035
        %v1037 = vpop.f32.mrb[0].mxu0
        %1038 = vmatprep.mubr.bf16.mxu0 0
        %1039 = vmatmul.mubr.bf16.gmra.mrb[0].mxu0 %v929
        %v1040 = vpop.f32.mrb[0].mxu0
        %v1041 = vadd.f32 %v907, %v1040
        %v1042 = vpop.f32.mrb[0].mxu0
        %v1043 = vpop.f32.mrb[0].mxu0
        %v1044 = vadd.f32 %v907, %v1043
        %v1045 = vpop.f32.mrb[0].mxu0
        %1046 = vmatprep.mubr.bf16.mxu0 0
        %1047 = vmatmul.mubr.bf16.gmra.mrb[0].mxu0 %v932
        %v1048 = vpop.f32.mrb[0].mxu0
        %v1049 = vadd.f32 %v907, %v1048
        %v1050 = vpop.f32.mrb[0].mxu0
        %v1051 = vpop.f32.mrb[0].mxu0
        %v1052 = vadd.f32 %v907, %v1051
        %v1053 = vpop.f32.mrb[0].mxu0
        %1054 = vdwg.mxu0
        %1055 = vmax.xlane.f32.xlu0 %v993
        %v1056 = vpop.xlane.xlu0 %1055
        %1057 = vmax.xlane.f32.xlu0 %v996
        %v1058 = vpop.xlane.xlu0 %1057
        %1059 = vmax.xlane.f32.xlu0 %v1001
        %v1060 = vpop.xlane.xlu0 %1059
        %1061 = vmax.xlane.f32.xlu0 %v1004
        %v1062 = vpop.xlane.xlu0 %1061
        %1063 = vmax.xlane.f32.xlu0 %v1009
        %v1064 = vpop.xlane.xlu0 %1063
        %1065 = vmax.xlane.f32.xlu0 %v1012
        %v1066 = vpop.xlane.xlu0 %1065
        %1067 = vmax.xlane.f32.xlu0 %v1017
        %v1068 = vpop.xlane.xlu0 %1067
        %1069 = vmax.xlane.f32.xlu0 %v1020
        %v1070 = vpop.xlane.xlu0 %1069
        %1071 = vmax.xlane.f32.xlu0 %v1025
        %v1072 = vpop.xlane.xlu0 %1071
        %1073 = vmax.xlane.f32.xlu0 %v1028
        %v1074 = vpop.xlane.xlu0 %1073
        %1075 = vmax.xlane.f32.xlu0 %v1033
        %v1076 = vpop.xlane.xlu0 %1075
        %1077 = vmax.xlane.f32.xlu0 %v1036
        %v1078 = vpop.xlane.xlu0 %1077
        %1079 = vmax.xlane.f32.xlu0 %v1041
        %v1080 = vpop.xlane.xlu0 %1079
        %1081 = vmax.xlane.f32.xlu0 %v1044
        %v1082 = vpop.xlane.xlu0 %1081
        %1083 = vmax.xlane.f32.xlu0 %v1049
        %v1084 = vpop.xlane.xlu0 %1083
        %1085 = vmax.xlane.f32.xlu0 %v1052
        %v1086 = vpop.xlane.xlu0 %1085
        %v1087 = vsub.f32 %v993, %v1056
        %v1088 = vsub.f32 %v996, %v1058
        %v1089 = vsub.f32 %v1001, %v1060
        %v1090 = vsub.f32 %v1004, %v1062
        %v1091 = vsub.f32 %v1009, %v1064
        %v1092 = vsub.f32 %v1012, %v1066
        %v1093 = vsub.f32 %v1017, %v1068
        %v1094 = vsub.f32 %v1020, %v1070
        %v1095 = vsub.f32 %v1025, %v1072
        %v1096 = vsub.f32 %v1028, %v1074
        %v1097 = vsub.f32 %v1033, %v1076
        %v1098 = vsub.f32 %v1036, %v1078
        %v1099 = vsub.f32 %v1041, %v1080
        %v1100 = vsub.f32 %v1044, %v1082
        %v1101 = vsub.f32 %v1049, %v1084
        %v1102 = vsub.f32 %v1052, %v1086
        %v1103 = vmul.f32 %v1087, 1.442695
        %v1104 = vpow.pop %v1103
        %v1105 = vmul.f32 %v1088, 1.442695
        %v1106 = vpow.pop %v1105
        %v1107 = vmul.f32 %v1089, 1.442695
        %v1108 = vpow.pop %v1107
        %v1109 = vmul.f32 %v1090, 1.442695
        %v1110 = vpow.pop %v1109
        %v1111 = vmul.f32 %v1091, 1.442695
        %v1112 = vpow.pop %v1111
        %v1113 = vmul.f32 %v1092, 1.442695
        %v1114 = vpow.pop %v1113
        %v1115 = vmul.f32 %v1093, 1.442695
        %v1116 = vpow.pop %v1115
        %v1117 = vmul.f32 %v1094, 1.442695
        %v1118 = vpow.pop %v1117
        %v1119 = vmul.f32 %v1095, 1.442695
        %v1120 = vpow.pop %v1119
        %v1121 = vmul.f32 %v1096, 1.442695
        %v1122 = vpow.pop %v1121
        %v1123 = vmul.f32 %v1097, 1.442695
        %v1124 = vpow.pop %v1123
        %v1125 = vmul.f32 %v1098, 1.442695
        %v1126 = vpow.pop %v1125
        %v1127 = vmul.f32 %v1099, 1.442695
        %v1128 = vpow.pop %v1127
        %v1129 = vmul.f32 %v1100, 1.442695
        %v1130 = vpow.pop %v1129
        %v1131 = vmul.f32 %v1101, 1.442695
        %v1132 = vpow.pop %v1131
        %v1133 = vmul.f32 %v1102, 1.442695
        %v1134 = vpow.pop %v1133
        %1135 = vadd.xlane.f32.xlu0 %v1104
        %v1136 = vpop.xlane.xlu0 %1135
        %1137 = vadd.xlane.f32.xlu0 %v1106
        %v1138 = vpop.xlane.xlu0 %1137
        %1139 = vadd.xlane.f32.xlu0 %v1108
        %v1140 = vpop.xlane.xlu0 %1139
        %1141 = vadd.xlane.f32.xlu0 %v1110
        %v1142 = vpop.xlane.xlu0 %1141
        %1143 = vadd.xlane.f32.xlu0 %v1112
        %v1144 = vpop.xlane.xlu0 %1143
        %1145 = vadd.xlane.f32.xlu0 %v1114
        %v1146 = vpop.xlane.xlu0 %1145
        %1147 = vadd.xlane.f32.xlu0 %v1116
        %v1148 = vpop.xlane.xlu0 %1147
        %1149 = vadd.xlane.f32.xlu0 %v1118
        %v1150 = vpop.xlane.xlu0 %1149
        %1151 = vadd.xlane.f32.xlu0 %v1120
        %v1152 = vpop.xlane.xlu0 %1151
        %1153 = vadd.xlane.f32.xlu0 %v1122
        %v1154 = vpop.xlane.xlu0 %1153
        %1155 = vadd.xlane.f32.xlu0 %v1124
        %v1156 = vpop.xlane.xlu0 %1155
        %1157 = vadd.xlane.f32.xlu0 %v1126
        %v1158 = vpop.xlane.xlu0 %1157
        %1159 = vadd.xlane.f32.xlu0 %v1128
        %v1160 = vpop.xlane.xlu0 %1159
        %1161 = vadd.xlane.f32.xlu0 %v1130
        %v1162 = vpop.xlane.xlu0 %1161
        %1163 = vadd.xlane.f32.xlu0 %v1132
        %v1164 = vpop.xlane.xlu0 %1163
        %1165 = vadd.xlane.f32.xlu0 %v1134
        %v1166 = vpop.xlane.xlu0 %1165
        %v1167 = vrcp.pop %v1136
        %v1168 = vrcp.pop %v1138
        %v1169 = vrcp.pop %v1140
        %v1170 = vrcp.pop %v1142
        %v1171 = vrcp.pop %v1144
        %v1172 = vrcp.pop %v1146
        %v1173 = vrcp.pop %v1148
        %v1174 = vrcp.pop %v1150
        %v1175 = vrcp.pop %v1152
        %v1176 = vrcp.pop %v1154
        %v1177 = vrcp.pop %v1156
        %v1178 = vrcp.pop %v1158
        %v1179 = vrcp.pop %v1160
        %v1180 = vrcp.pop %v1162
        %v1181 = vrcp.pop %v1164
        %v1182 = vrcp.pop %v1166
        %v1183 = vmul.f32 %v1104, %v1167
        %v1184 = vmul.f32 %v1106, %v1168
        %v1185 = vmul.f32 %v1108, %v1169
        %v1186 = vmul.f32 %v1110, %v1170
        %v1187 = vmul.f32 %v1112, %v1171
        %v1188 = vmul.f32 %v1114, %v1172
        %v1189 = vmul.f32 %v1116, %v1173
        %v1190 = vmul.f32 %v1118, %v1174
        %v1191 = vmul.f32 %v1120, %v1175
        %v1192 = vmul.f32 %v1122, %v1176
        %v1193 = vmul.f32 %v1124, %v1177
        %v1194 = vmul.f32 %v1126, %v1178
        %v1195 = vmul.f32 %v1128, %v1179
        %v1196 = vmul.f32 %v1130, %v1180
        %v1197 = vmul.f32 %v1132, %v1181
        %v1198 = vmul.f32 %v1134, %v1182
        %v1199 = vpack.c.bf16 %v1184, %v1183
        %v1200 = vpack.c.bf16 %v1186, %v1185
        %v1201 = vpack.c.bf16 %v1188, %v1187
        %v1202 = vpack.c.bf16 %v1190, %v1189
        %v1203 = vpack.c.bf16 %v1192, %v1191
        %v1204 = vpack.c.bf16 %v1194, %v1193
        %v1205 = vpack.c.bf16 %v1196, %v1195
        %v1206 = vpack.c.bf16 %v1198, %v1197
        %1207 = vmatprep.subr.bf16.mxu0 0
        %1208 = vmatpush1.bf16.msra.mxu0 %v894
        %1209 = vmatprep.subr.bf16.mxu0 0
        %1210 = vmatpush1.bf16.msra.mxu0 %v895
        %1211 = vmatprep.subr.bf16.mxu0 0
        %1212 = vmatpush1.bf16.msra.mxu0 %v896
        %1213 = vmatprep.subr.bf16.mxu0 0
        %1214 = vmatpush1.bf16.msra.mxu0 %v897
        %1215 = vmatprep.subr.bf16.mxu0 0
        %1216 = vmatpush1.bf16.msra.mxu0 %v898
        %1217 = vmatprep.subr.bf16.mxu0 0
        %1218 = vmatpush1.bf16.msra.mxu0 %v899
        %1219 = vmatprep.subr.bf16.mxu0 0
        %1220 = vmatpush1.bf16.msra.mxu0 %v900
        %1221 = vmatprep.subr.bf16.mxu0 0
        %1222 = vmatpush1.bf16.msra.mxu0 %v901
        %1223 = vmatprep.subr.bf16.mxu0 0
        %1224 = vmatpush1.bf16.msra.mxu0 0
        %1225 = vmatprep.subr.bf16.mxu0 0
        %1226 = vmatpush1.bf16.msra.mxu0 0
        %1227 = vmatprep.subr.bf16.mxu0 0
        %1228 = vmatpush1.bf16.msra.mxu0 0
        %1229 = vmatprep.subr.bf16.mxu0 0
        %1230 = vmatpush1.bf16.msra.mxu0 0
        %1231 = vmatprep.subr.bf16.mxu0 0
        %1232 = vmatpush1.bf16.msra.mxu0 0
        %1233 = vmatprep.subr.bf16.mxu0 0
        %1234 = vmatpush1.bf16.msra.mxu0 0
        %1235 = vmatprep.subr.bf16.mxu0 0
        %1236 = vmatpush1.bf16.msra.mxu0 0
        %1237 = vmatprep.subr.bf16.mxu0 0
        %1238 = vmatpush1.bf16.msra.mxu0 0
        %1239 = vmatprep.mubr.bf16.mxu0 0
        %1240 = vmatmul.mubr.bf16.gmra.mrb[0].mxu0 %v1199
        %v1241 = vpop.f32.mrb[0].mxu0
        %v1242 = vadd.f32 0.0, %v1241
        %v1243 = vpop.f32.mrb[0].mxu0
        %v1244 = vpop.f32.mrb[0].mxu0
        %v1245 = vadd.f32 0.0, %v1244
        %v1246 = vpop.f32.mrb[0].mxu0
        %1247 = vmatprep.mubr.bf16.mxu0 0
        %1248 = vmatmul.mubr.bf16.gmra.mrb[0].mxu0 %v1200
        %v1249 = vpop.f32.mrb[0].mxu0
        %v1250 = vadd.f32 0.0, %v1249
        %v1251 = vpop.f32.mrb[0].mxu0
        %v1252 = vpop.f32.mrb[0].mxu0
        %v1253 = vadd.f32 0.0, %v1252
        %v1254 = vpop.f32.mrb[0].mxu0
        %1255 = vmatprep.mubr.bf16.mxu0 0
        %1256 = vmatmul.mubr.bf16.gmra.mrb[0].mxu0 %v1201
        %v1257 = vpop.f32.mrb[0].mxu0
        %v1258 = vadd.f32 0.0, %v1257
        %v1259 = vpop.f32.mrb[0].mxu0
        %v1260 = vpop.f32.mrb[0].mxu0
        %v1261 = vadd.f32 0.0, %v1260
        %v1262 = vpop.f32.mrb[0].mxu0
        %1263 = vmatprep.mubr.bf16.mxu0 0
        %1264 = vmatmul.mubr.bf16.gmra.mrb[0].mxu0 %v1202
        %v1265 = vpop.f32.mrb[0].mxu0
        %v1266 = vadd.f32 0.0, %v1265
        %v1267 = vpop.f32.mrb[0].mxu0
        %v1268 = vpop.f32.mrb[0].mxu0
        %v1269 = vadd.f32 0.0, %v1268
        %v1270 = vpop.f32.mrb[0].mxu0
        %1271 = vmatprep.mubr.bf16.mxu0 0
        %1272 = vmatmul.mubr.bf16.gmra.mrb[0].mxu0 %v1203
        %v1273 = vpop.f32.mrb[0].mxu0
        %v1274 = vadd.f32 0.0, %v1273
        %v1275 = vpop.f32.mrb[0].mxu0
        %v1276 = vpop.f32.mrb[0].mxu0
        %v1277 = vadd.f32 0.0, %v1276
        %v1278 = vpop.f32.mrb[0].mxu0
        %1279 = vmatprep.mubr.bf16.mxu0 0
        %1280 = vmatmul.mubr.bf16.gmra.mrb[0].mxu0 %v1204
        %v1281 = vpop.f32.mrb[0].mxu0
        %v1282 = vadd.f32 0.0, %v1281
        %v1283 = vpop.f32.mrb[0].mxu0
        %v1284 = vpop.f32.mrb[0].mxu0
        %v1285 = vadd.f32 0.0, %v1284
        %v1286 = vpop.f32.mrb[0].mxu0
        %1287 = vmatprep.mubr.bf16.mxu0 0
        %1288 = vmatmul.mubr.bf16.gmra.mrb[0].mxu0 %v1205
        %v1289 = vpop.f32.mrb[0].mxu0
        %v1290 = vadd.f32 0.0, %v1289
        %v1291 = vpop.f32.mrb[0].mxu0
        %v1292 = vpop.f32.mrb[0].mxu0
        %v1293 = vadd.f32 0.0, %v1292
        %v1294 = vpop.f32.mrb[0].mxu0
        %1295 = vmatprep.mubr.bf16.mxu0 0
        %1296 = vmatmul.mubr.bf16.gmra.mrb[0].mxu0 %v1206
        %v1297 = vpop.f32.mrb[0].mxu0
        %v1298 = vadd.f32 0.0, %v1297
        %v1299 = vpop.f32.mrb[0].mxu0
        %v1300 = vpop.f32.mrb[0].mxu0
        %v1301 = vadd.f32 0.0, %v1300
        %v1302 = vpop.f32.mrb[0].mxu0
        %1303 = vdwg.mxu0
        %1312 = vrot.lane.b32.xlu0 %v878, 96
        %v1313 = vpop.permute.xlu0 %1312
        %1314 = vrot.lane.b32.xlu0 %v879, 96
        %v1315 = vpop.permute.xlu0 %1314
        %1316 = vrot.lane.b32.xlu0 %v880, 96
        %v1317 = vpop.permute.xlu0 %1316
        %1318 = vrot.lane.b32.xlu0 %v881, 96
        %v1319 = vpop.permute.xlu0 %1318
        %1320 = vrot.lane.b32.xlu0 %v882, 96
        %v1321 = vpop.permute.xlu0 %1320
        %1322 = vrot.lane.b32.xlu0 %v883, 96
        %v1323 = vpop.permute.xlu0 %1322
        %1324 = vrot.lane.b32.xlu0 %v884, 96
        %v1325 = vpop.permute.xlu0 %1324
        %1326 = vrot.lane.b32.xlu0 %v885, 96
        %v1327 = vpop.permute.xlu0 %1326
        %1336 = vrot.lane.b32.xlu0 %v886, 96
        %v1337 = vpop.permute.xlu0 %1336
        %1338 = vrot.lane.b32.xlu0 %v887, 96
        %v1339 = vpop.permute.xlu0 %1338
        %1340 = vrot.lane.b32.xlu0 %v888, 96
        %v1341 = vpop.permute.xlu0 %1340
        %1342 = vrot.lane.b32.xlu0 %v889, 96
        %v1343 = vpop.permute.xlu0 %1342
        %1344 = vrot.lane.b32.xlu0 %v890, 96
        %v1345 = vpop.permute.xlu0 %1344
        %1346 = vrot.lane.b32.xlu0 %v891, 96
        %v1347 = vpop.permute.xlu0 %1346
        %1348 = vrot.lane.b32.xlu0 %v892, 96
        %v1349 = vpop.permute.xlu0 %1348
        %1350 = vrot.lane.b32.xlu0 %v893, 96
        %v1351 = vpop.permute.xlu0 %1350
        %v1353 = vsel %vm909, %v1313, 0
        %v1356 = vsel %vm909, %v1315, 0
        %v1359 = vsel %vm909, %v1317, 0
        %v1362 = vsel %vm909, %v1319, 0
        %v1365 = vsel %vm909, %v1321, 0
        %v1368 = vsel %vm909, %v1323, 0
        %v1371 = vsel %vm909, %v1325, 0
        %v1374 = vsel %vm909, %v1327, 0
        %v1377 = vsel %vm909, %v1337, 0
        %v1380 = vsel %vm909, %v1339, 0
        %v1383 = vsel %vm909, %v1341, 0
        %v1386 = vsel %vm909, %v1343, 0
        %v1389 = vsel %vm909, %v1345, 0
        %v1392 = vsel %vm909, %v1347, 0
        %v1395 = vsel %vm909, %v1349, 0
        %v1398 = vsel %vm909, %v1351, 0
        %1400 = vmatprep.subr.bf16.mxu0 0
        %1401 = vmatpush1.bf16.xpose.msra.mxu0 %v1377
        %1402 = vmatprep.subr.bf16.mxu0 0
        %1403 = vmatpush1.bf16.xpose.msra.mxu0 %v1380
        %1404 = vmatprep.subr.bf16.mxu0 0
        %1405 = vmatpush1.bf16.xpose.msra.mxu0 %v1383
        %1406 = vmatprep.subr.bf16.mxu0 0
        %1407 = vmatpush1.bf16.xpose.msra.mxu0 %v1386
        %1408 = vmatprep.subr.bf16.mxu0 0
        %1409 = vmatpush1.bf16.xpose.msra.mxu0 %v1389
        %1410 = vmatprep.subr.bf16.mxu0 0
        %1411 = vmatpush1.bf16.xpose.msra.mxu0 %v1392
        %1412 = vmatprep.subr.bf16.mxu0 0
        %1413 = vmatpush1.bf16.xpose.msra.mxu0 %v1395
        %1414 = vmatprep.subr.bf16.mxu0 0
        %1415 = vmatpush1.bf16.xpose.msra.mxu0 %v1398
        %1416 = vmatprep.subr.bf16.mxu0 0
        %1417 = vmatpush1.bf16.xpose.msra.mxu0 0
        %1418 = vmatprep.subr.bf16.mxu0 0
        %1419 = vmatpush1.bf16.xpose.msra.mxu0 0
        %1420 = vmatprep.subr.bf16.mxu0 0
        %1421 = vmatpush1.bf16.xpose.msra.mxu0 0
        %1422 = vmatprep.subr.bf16.mxu0 0
        %1423 = vmatpush1.bf16.xpose.msra.mxu0 0
        %1424 = vmatprep.subr.bf16.mxu0 0
        %1425 = vmatpush1.bf16.xpose.msra.mxu0 0
        %1426 = vmatprep.subr.bf16.mxu0 0
        %1427 = vmatpush1.bf16.xpose.msra.mxu0 0
        %1428 = vmatprep.subr.bf16.mxu0 0
        %1429 = vmatpush1.bf16.xpose.msra.mxu0 0
        %1430 = vmatprep.subr.bf16.mxu0 0
        %1431 = vmatpush1.bf16.xpose.msra.mxu0 0
        %1432 = vmatprep.mubr.bf16.mxu0 0
        %1433 = vmatmul.mubr.bf16.gmra.mrb[0].mxu0 %v1353
        %v1434 = vpop.f32.mrb[0].mxu0
        %v1435 = vadd.f32 %v907, %v1434
        %v1436 = vpop.f32.mrb[0].mxu0
        %v1437 = vpop.f32.mrb[0].mxu0
        %v1438 = vadd.f32 %v907, %v1437
        %v1439 = vpop.f32.mrb[0].mxu0
        %1440 = vmatprep.mubr.bf16.mxu0 0
        %1441 = vmatmul.mubr.bf16.gmra.mrb[0].mxu0 %v1356
        %v1442 = vpop.f32.mrb[0].mxu0
        %v1443 = vadd.f32 %v907, %v1442
        %v1444 = vpop.f32.mrb[0].mxu0
        %v1445 = vpop.f32.mrb[0].mxu0
        %v1446 = vadd.f32 %v907, %v1445
        %v1447 = vpop.f32.mrb[0].mxu0
        %1448 = vmatprep.mubr.bf16.mxu0 0
        %1449 = vmatmul.mubr.bf16.gmra.mrb[0].mxu0 %v1359
        %v1450 = vpop.f32.mrb[0].mxu0
        %v1451 = vadd.f32 %v907, %v1450
        %v1452 = vpop.f32.mrb[0].mxu0
        %v1453 = vpop.f32.mrb[0].mxu0
        %v1454 = vadd.f32 %v907, %v1453
        %v1455 = vpop.f32.mrb[0].mxu0
        %1456 = vmatprep.mubr.bf16.mxu0 0
        %1457 = vmatmul.mubr.bf16.gmra.mrb[0].mxu0 %v1362
        %v1458 = vpop.f32.mrb[0].mxu0
        %v1459 = vadd.f32 %v907, %v1458
        %v1460 = vpop.f32.mrb[0].mxu0
        %v1461 = vpop.f32.mrb[0].mxu0
        %v1462 = vadd.f32 %v907, %v1461
        %v1463 = vpop.f32.mrb[0].mxu0
        %1464 = vmatprep.mubr.bf16.mxu0 0
        %1465 = vmatmul.mubr.bf16.gmra.mrb[0].mxu0 %v1365
        %v1466 = vpop.f32.mrb[0].mxu0
        %v1467 = vadd.f32 %v907, %v1466
        %v1468 = vpop.f32.mrb[0].mxu0
        %v1469 = vpop.f32.mrb[0].mxu0
        %v1470 = vadd.f32 %v907, %v1469
        %v1471 = vpop.f32.mrb[0].mxu0
        %1472 = vmatprep.mubr.bf16.mxu0 0
        %1473 = vmatmul.mubr.bf16.gmra.mrb[0].mxu0 %v1368
        %v1474 = vpop.f32.mrb[0].mxu0
        %v1475 = vadd.f32 %v907, %v1474
        %v1476 = vpop.f32.mrb[0].mxu0
        %v1477 = vpop.f32.mrb[0].mxu0
        %v1478 = vadd.f32 %v907, %v1477
        %v1479 = vpop.f32.mrb[0].mxu0
        %1480 = vmatprep.mubr.bf16.mxu0 0
        %1481 = vmatmul.mubr.bf16.gmra.mrb[0].mxu0 %v1371
        %v1482 = vpop.f32.mrb[0].mxu0
        %v1483 = vadd.f32 %v907, %v1482
        %v1484 = vpop.f32.mrb[0].mxu0
        %v1485 = vpop.f32.mrb[0].mxu0
        %v1486 = vadd.f32 %v907, %v1485
        %v1487 = vpop.f32.mrb[0].mxu0
        %1488 = vmatprep.mubr.bf16.mxu0 0
        %1489 = vmatmul.mubr.bf16.gmra.mrb[0].mxu0 %v1374
        %v1490 = vpop.f32.mrb[0].mxu0
        %v1491 = vadd.f32 %v907, %v1490
        %v1492 = vpop.f32.mrb[0].mxu0
        %v1493 = vpop.f32.mrb[0].mxu0
        %v1494 = vadd.f32 %v907, %v1493
        %v1495 = vpop.f32.mrb[0].mxu0
        %1496 = vdwg.mxu0
        %1497 = vmax.xlane.f32.xlu0 %v1435
        %v1498 = vpop.xlane.xlu0 %1497
        %1499 = vmax.xlane.f32.xlu0 %v1438
        %v1500 = vpop.xlane.xlu0 %1499
        %1501 = vmax.xlane.f32.xlu0 %v1443
        %v1502 = vpop.xlane.xlu0 %1501
        %1503 = vmax.xlane.f32.xlu0 %v1446
        %v1504 = vpop.xlane.xlu0 %1503
        %1505 = vmax.xlane.f32.xlu0 %v1451
        %v1506 = vpop.xlane.xlu0 %1505
        %1507 = vmax.xlane.f32.xlu0 %v1454
        %v1508 = vpop.xlane.xlu0 %1507
        %1509 = vmax.xlane.f32.xlu0 %v1459
        %v1510 = vpop.xlane.xlu0 %1509
        %1511 = vmax.xlane.f32.xlu0 %v1462
        %v1512 = vpop.xlane.xlu0 %1511
        %1513 = vmax.xlane.f32.xlu0 %v1467
        %v1514 = vpop.xlane.xlu0 %1513
        %1515 = vmax.xlane.f32.xlu0 %v1470
        %v1516 = vpop.xlane.xlu0 %1515
        %1517 = vmax.xlane.f32.xlu0 %v1475
        %v1518 = vpop.xlane.xlu0 %1517
        %1519 = vmax.xlane.f32.xlu0 %v1478
        %v1520 = vpop.xlane.xlu0 %1519
        %1521 = vmax.xlane.f32.xlu0 %v1483
        %v1522 = vpop.xlane.xlu0 %1521
        %1523 = vmax.xlane.f32.xlu0 %v1486
        %v1524 = vpop.xlane.xlu0 %1523
        %1525 = vmax.xlane.f32.xlu0 %v1491
        %v1526 = vpop.xlane.xlu0 %1525
        %1527 = vmax.xlane.f32.xlu0 %v1494
        %v1528 = vpop.xlane.xlu0 %1527
        %v1529 = vsub.f32 %v1435, %v1498
        %v1530 = vsub.f32 %v1438, %v1500
        %v1531 = vsub.f32 %v1443, %v1502
        %v1532 = vsub.f32 %v1446, %v1504
        %v1533 = vsub.f32 %v1451, %v1506
        %v1534 = vsub.f32 %v1454, %v1508
        %v1535 = vsub.f32 %v1459, %v1510
        %v1536 = vsub.f32 %v1462, %v1512
        %v1537 = vsub.f32 %v1467, %v1514
        %v1538 = vsub.f32 %v1470, %v1516
        %v1539 = vsub.f32 %v1475, %v1518
        %v1540 = vsub.f32 %v1478, %v1520
        %v1541 = vsub.f32 %v1483, %v1522
        %v1542 = vsub.f32 %v1486, %v1524
        %v1543 = vsub.f32 %v1491, %v1526
        %v1544 = vsub.f32 %v1494, %v1528
        %v1545 = vmul.f32 %v1529, 1.442695
        %v1546 = vpow.pop %v1545
        %v1547 = vmul.f32 %v1530, 1.442695
        %v1548 = vpow.pop %v1547
        %v1549 = vmul.f32 %v1531, 1.442695
        %v1550 = vpow.pop %v1549
        %v1551 = vmul.f32 %v1532, 1.442695
        %v1552 = vpow.pop %v1551
        %v1553 = vmul.f32 %v1533, 1.442695
        %v1554 = vpow.pop %v1553
        %v1555 = vmul.f32 %v1534, 1.442695
        %v1556 = vpow.pop %v1555
        %v1557 = vmul.f32 %v1535, 1.442695
        %v1558 = vpow.pop %v1557
        %v1559 = vmul.f32 %v1536, 1.442695
        %v1560 = vpow.pop %v1559
        %v1561 = vmul.f32 %v1537, 1.442695
        %v1562 = vpow.pop %v1561
        %v1563 = vmul.f32 %v1538, 1.442695
        %v1564 = vpow.pop %v1563
        %v1565 = vmul.f32 %v1539, 1.442695
        %v1566 = vpow.pop %v1565
        %v1567 = vmul.f32 %v1540, 1.442695
        %v1568 = vpow.pop %v1567
        %v1569 = vmul.f32 %v1541, 1.442695
        %v1570 = vpow.pop %v1569
        %v1571 = vmul.f32 %v1542, 1.442695
        %v1572 = vpow.pop %v1571
        %v1573 = vmul.f32 %v1543, 1.442695
        %v1574 = vpow.pop %v1573
        %v1575 = vmul.f32 %v1544, 1.442695
        %v1576 = vpow.pop %v1575
        %1577 = vadd.xlane.f32.xlu0 %v1546
        %v1578 = vpop.xlane.xlu0 %1577
        %1579 = vadd.xlane.f32.xlu0 %v1548
        %v1580 = vpop.xlane.xlu0 %1579
        %1581 = vadd.xlane.f32.xlu0 %v1550
        %v1582 = vpop.xlane.xlu0 %1581
        %1583 = vadd.xlane.f32.xlu0 %v1552
        %v1584 = vpop.xlane.xlu0 %1583
        %1585 = vadd.xlane.f32.xlu0 %v1554
        %v1586 = vpop.xlane.xlu0 %1585
        %1587 = vadd.xlane.f32.xlu0 %v1556
        %v1588 = vpop.xlane.xlu0 %1587
        %1589 = vadd.xlane.f32.xlu0 %v1558
        %v1590 = vpop.xlane.xlu0 %1589
        %1591 = vadd.xlane.f32.xlu0 %v1560
        %v1592 = vpop.xlane.xlu0 %1591
        %1593 = vadd.xlane.f32.xlu0 %v1562
        %v1594 = vpop.xlane.xlu0 %1593
        %1595 = vadd.xlane.f32.xlu0 %v1564
        %v1596 = vpop.xlane.xlu0 %1595
        %1597 = vadd.xlane.f32.xlu0 %v1566
        %v1598 = vpop.xlane.xlu0 %1597
        %1599 = vadd.xlane.f32.xlu0 %v1568
        %v1600 = vpop.xlane.xlu0 %1599
        %1601 = vadd.xlane.f32.xlu0 %v1570
        %v1602 = vpop.xlane.xlu0 %1601
        %1603 = vadd.xlane.f32.xlu0 %v1572
        %v1604 = vpop.xlane.xlu0 %1603
        %1605 = vadd.xlane.f32.xlu0 %v1574
        %v1606 = vpop.xlane.xlu0 %1605
        %1607 = vadd.xlane.f32.xlu0 %v1576
        %v1608 = vpop.xlane.xlu0 %1607
        %v1609 = vrcp.pop %v1578
        %v1610 = vrcp.pop %v1580
        %v1611 = vrcp.pop %v1582
        %v1612 = vrcp.pop %v1584
        %v1613 = vrcp.pop %v1586
        %v1614 = vrcp.pop %v1588
        %v1615 = vrcp.pop %v1590
        %v1616 = vrcp.pop %v1592
        %v1617 = vrcp.pop %v1594
        %v1618 = vrcp.pop %v1596
        %v1619 = vrcp.pop %v1598
        %v1620 = vrcp.pop %v1600
        %v1621 = vrcp.pop %v1602
        %v1622 = vrcp.pop %v1604
        %v1623 = vrcp.pop %v1606
        %v1624 = vrcp.pop %v1608
        %v1625 = vmul.f32 %v1546, %v1609
        %v1626 = vmul.f32 %v1548, %v1610
        %v1627 = vmul.f32 %v1550, %v1611
        %v1628 = vmul.f32 %v1552, %v1612
        %v1629 = vmul.f32 %v1554, %v1613
        %v1630 = vmul.f32 %v1556, %v1614
        %v1631 = vmul.f32 %v1558, %v1615
        %v1632 = vmul.f32 %v1560, %v1616
        %v1633 = vmul.f32 %v1562, %v1617
        %v1634 = vmul.f32 %v1564, %v1618
        %v1635 = vmul.f32 %v1566, %v1619
        %v1636 = vmul.f32 %v1568, %v1620
        %v1637 = vmul.f32 %v1570, %v1621
        %v1638 = vmul.f32 %v1572, %v1622
        %v1639 = vmul.f32 %v1574, %v1623
        %v1640 = vmul.f32 %v1576, %v1624
        %v1641 = vpack.c.bf16 %v1626, %v1625
        %v1642 = vpack.c.bf16 %v1628, %v1627
        %v1643 = vpack.c.bf16 %v1630, %v1629
        %v1644 = vpack.c.bf16 %v1632, %v1631
        %v1645 = vpack.c.bf16 %v1634, %v1633
        %v1646 = vpack.c.bf16 %v1636, %v1635
        %v1647 = vpack.c.bf16 %v1638, %v1637
        %v1648 = vpack.c.bf16 %v1640, %v1639
        %1657 = vrot.lane.b32.xlu0 %v894, 96
        %v1658 = vpop.permute.xlu0 %1657
        %1659 = vrot.lane.b32.xlu0 %v895, 96
        %v1660 = vpop.permute.xlu0 %1659
        %1661 = vrot.lane.b32.xlu0 %v896, 96
        %v1662 = vpop.permute.xlu0 %1661
        %1663 = vrot.lane.b32.xlu0 %v897, 96
        %v1664 = vpop.permute.xlu0 %1663
        %1665 = vrot.lane.b32.xlu0 %v898, 96
        %v1666 = vpop.permute.xlu0 %1665
        %1667 = vrot.lane.b32.xlu0 %v899, 96
        %v1668 = vpop.permute.xlu0 %1667
        %1669 = vrot.lane.b32.xlu0 %v900, 96
        %v1670 = vpop.permute.xlu0 %1669
        %1671 = vrot.lane.b32.xlu0 %v901, 96
        %v1672 = vpop.permute.xlu0 %1671
        %1681 = vmatprep.subr.bf16.mxu0 0
        %1682 = vmatpush1.bf16.msra.mxu0 %v1658
        %1683 = vmatprep.subr.bf16.mxu0 0
        %1684 = vmatpush1.bf16.msra.mxu0 %v1660
        %1685 = vmatprep.subr.bf16.mxu0 0
        %1686 = vmatpush1.bf16.msra.mxu0 %v1662
        %1687 = vmatprep.subr.bf16.mxu0 0
        %1688 = vmatpush1.bf16.msra.mxu0 %v1664
        %1689 = vmatprep.subr.bf16.mxu0 0
        %1690 = vmatpush1.bf16.msra.mxu0 %v1666
        %1691 = vmatprep.subr.bf16.mxu0 0
        %1692 = vmatpush1.bf16.msra.mxu0 %v1668
        %1693 = vmatprep.subr.bf16.mxu0 0
        %1694 = vmatpush1.bf16.msra.mxu0 %v1670
        %1695 = vmatprep.subr.bf16.mxu0 0
        %1696 = vmatpush1.bf16.msra.mxu0 %v1672
        %1697 = vmatprep.subr.bf16.mxu0 0
        %1698 = vmatpush1.bf16.msra.mxu0 0
        %1699 = vmatprep.subr.bf16.mxu0 0
        %1700 = vmatpush1.bf16.msra.mxu0 0
        %1701 = vmatprep.subr.bf16.mxu0 0
        %1702 = vmatpush1.bf16.msra.mxu0 0
        %1703 = vmatprep.subr.bf16.mxu0 0
        %1704 = vmatpush1.bf16.msra.mxu0 0
        %1705 = vmatprep.subr.bf16.mxu0 0
        %1706 = vmatpush1.bf16.msra.mxu0 0
        %1707 = vmatprep.subr.bf16.mxu0 0
        %1708 = vmatpush1.bf16.msra.mxu0 0
        %1709 = vmatprep.subr.bf16.mxu0 0
        %1710 = vmatpush1.bf16.msra.mxu0 0
        %1711 = vmatprep.subr.bf16.mxu0 0
        %1712 = vmatpush1.bf16.msra.mxu0 0
        %1713 = vmatprep.mubr.bf16.mxu0 0
        %1714 = vmatmul.mubr.bf16.gmra.mrb[0].mxu0 %v1641
        %v1715 = vpop.f32.mrb[0].mxu0
        %v1716 = vadd.f32 0.0, %v1715
        %v1717 = vpop.f32.mrb[0].mxu0
        %v1718 = vpop.f32.mrb[0].mxu0
        %v1719 = vadd.f32 0.0, %v1718
        %v1720 = vpop.f32.mrb[0].mxu0
        %1721 = vmatprep.mubr.bf16.mxu0 0
        %1722 = vmatmul.mubr.bf16.gmra.mrb[0].mxu0 %v1642
        %v1723 = vpop.f32.mrb[0].mxu0
        %v1724 = vadd.f32 0.0, %v1723
        %v1725 = vpop.f32.mrb[0].mxu0
        %v1726 = vpop.f32.mrb[0].mxu0
        %v1727 = vadd.f32 0.0, %v1726
        %v1728 = vpop.f32.mrb[0].mxu0
        %1729 = vmatprep.mubr.bf16.mxu0 0
        %1730 = vmatmul.mubr.bf16.gmra.mrb[0].mxu0 %v1643
        %v1731 = vpop.f32.mrb[0].mxu0
        %v1732 = vadd.f32 0.0, %v1731
        %v1733 = vpop.f32.mrb[0].mxu0
        %v1734 = vpop.f32.mrb[0].mxu0
        %v1735 = vadd.f32 0.0, %v1734
        %v1736 = vpop.f32.mrb[0].mxu0
        %1737 = vmatprep.mubr.bf16.mxu0 0
        %1738 = vmatmul.mubr.bf16.gmra.mrb[0].mxu0 %v1644
        %v1739 = vpop.f32.mrb[0].mxu0
        %v1740 = vadd.f32 0.0, %v1739
        %v1741 = vpop.f32.mrb[0].mxu0
        %v1742 = vpop.f32.mrb[0].mxu0
        %v1743 = vadd.f32 0.0, %v1742
        %v1744 = vpop.f32.mrb[0].mxu0
        %1745 = vmatprep.mubr.bf16.mxu0 0
        %1746 = vmatmul.mubr.bf16.gmra.mrb[0].mxu0 %v1645
        %v1747 = vpop.f32.mrb[0].mxu0
        %v1748 = vadd.f32 0.0, %v1747
        %v1749 = vpop.f32.mrb[0].mxu0
        %v1750 = vpop.f32.mrb[0].mxu0
        %v1751 = vadd.f32 0.0, %v1750
        %v1752 = vpop.f32.mrb[0].mxu0
        %1753 = vmatprep.mubr.bf16.mxu0 0
        %1754 = vmatmul.mubr.bf16.gmra.mrb[0].mxu0 %v1646
        %v1755 = vpop.f32.mrb[0].mxu0
        %v1756 = vadd.f32 0.0, %v1755
        %v1757 = vpop.f32.mrb[0].mxu0
        %v1758 = vpop.f32.mrb[0].mxu0
        %v1759 = vadd.f32 0.0, %v1758
        %v1760 = vpop.f32.mrb[0].mxu0
        %1761 = vmatprep.mubr.bf16.mxu0 0
        %1762 = vmatmul.mubr.bf16.gmra.mrb[0].mxu0 %v1647
        %v1763 = vpop.f32.mrb[0].mxu0
        %v1764 = vadd.f32 0.0, %v1763
        %v1765 = vpop.f32.mrb[0].mxu0
        %v1766 = vpop.f32.mrb[0].mxu0
        %v1767 = vadd.f32 0.0, %v1766
        %v1768 = vpop.f32.mrb[0].mxu0
        %1769 = vmatprep.mubr.bf16.mxu0 0
        %1770 = vmatmul.mubr.bf16.gmra.mrb[0].mxu0 %v1648
        %v1771 = vpop.f32.mrb[0].mxu0
        %v1772 = vadd.f32 0.0, %v1771
        %v1773 = vpop.f32.mrb[0].mxu0
        %v1774 = vpop.f32.mrb[0].mxu0
        %v1775 = vadd.f32 0.0, %v1774
        %v1776 = vpop.f32.mrb[0].mxu0
        %1777 = vdwg.mxu0
        %1778 = vrot.lane.b32.xlu0 %v878, 64
        %v1779 = vpop.permute.xlu0 %1778
        %1780 = vrot.lane.b32.xlu0 %v879, 64
        %v1781 = vpop.permute.xlu0 %1780
        %1782 = vrot.lane.b32.xlu0 %v880, 64
        %v1783 = vpop.permute.xlu0 %1782
        %1784 = vrot.lane.b32.xlu0 %v881, 64
        %v1785 = vpop.permute.xlu0 %1784
        %1786 = vrot.lane.b32.xlu0 %v882, 64
        %v1787 = vpop.permute.xlu0 %1786
        %1788 = vrot.lane.b32.xlu0 %v883, 64
        %v1789 = vpop.permute.xlu0 %1788
        %1790 = vrot.lane.b32.xlu0 %v884, 64
        %v1791 = vpop.permute.xlu0 %1790
        %1792 = vrot.lane.b32.xlu0 %v885, 64
        %v1793 = vpop.permute.xlu0 %1792
        %1794 = vrot.lane.b32.xlu0 %v886, 64
        %v1795 = vpop.permute.xlu0 %1794
        %1796 = vrot.lane.b32.xlu0 %v887, 64
        %v1797 = vpop.permute.xlu0 %1796
        %1798 = vrot.lane.b32.xlu0 %v888, 64
        %v1799 = vpop.permute.xlu0 %1798
        %1800 = vrot.lane.b32.xlu0 %v889, 64
        %v1801 = vpop.permute.xlu0 %1800
        %1802 = vrot.lane.b32.xlu0 %v890, 64
        %v1803 = vpop.permute.xlu0 %1802
        %1804 = vrot.lane.b32.xlu0 %v891, 64
        %v1805 = vpop.permute.xlu0 %1804
        %1806 = vrot.lane.b32.xlu0 %v892, 64
        %v1807 = vpop.permute.xlu0 %1806
        %1808 = vrot.lane.b32.xlu0 %v893, 64
        %v1809 = vpop.permute.xlu0 %1808
        %v1811 = vsel %vm909, %v1779, 0
        %v1814 = vsel %vm909, %v1781, 0
        %v1817 = vsel %vm909, %v1783, 0
        %v1820 = vsel %vm909, %v1785, 0
        %v1823 = vsel %vm909, %v1787, 0
        %v1826 = vsel %vm909, %v1789, 0
        %v1829 = vsel %vm909, %v1791, 0
        %v1832 = vsel %vm909, %v1793, 0
        %v1835 = vsel %vm909, %v1795, 0
        %v1838 = vsel %vm909, %v1797, 0
        %v1841 = vsel %vm909, %v1799, 0
        %v1844 = vsel %vm909, %v1801, 0
        %v1847 = vsel %vm909, %v1803, 0
        %v1850 = vsel %vm909, %v1805, 0
        %v1853 = vsel %vm909, %v1807, 0
        %v1856 = vsel %vm909, %v1809, 0
        %1858 = vmatprep.subr.bf16.mxu0 0
        %1859 = vmatpush1.bf16.xpose.msra.mxu0 %v1835
        %1860 = vmatprep.subr.bf16.mxu0 0
        %1861 = vmatpush1.bf16.xpose.msra.mxu0 %v1838
        %1862 = vmatprep.subr.bf16.mxu0 0
        %1863 = vmatpush1.bf16.xpose.msra.mxu0 %v1841
        %1864 = vmatprep.subr.bf16.mxu0 0
        %1865 = vmatpush1.bf16.xpose.msra.mxu0 %v1844
        %1866 = vmatprep.subr.bf16.mxu0 0
        %1867 = vmatpush1.bf16.xpose.msra.mxu0 %v1847
        %1868 = vmatprep.subr.bf16.mxu0 0
        %1869 = vmatpush1.bf16.xpose.msra.mxu0 %v1850
        %1870 = vmatprep.subr.bf16.mxu0 0
        %1871 = vmatpush1.bf16.xpose.msra.mxu0 %v1853
        %1872 = vmatprep.subr.bf16.mxu0 0
        %1873 = vmatpush1.bf16.xpose.msra.mxu0 %v1856
        %1874 = vmatprep.subr.bf16.mxu0 0
        %1875 = vmatpush1.bf16.xpose.msra.mxu0 0
        %1876 = vmatprep.subr.bf16.mxu0 0
        %1877 = vmatpush1.bf16.xpose.msra.mxu0 0
        %1878 = vmatprep.subr.bf16.mxu0 0
        %1879 = vmatpush1.bf16.xpose.msra.mxu0 0
        %1880 = vmatprep.subr.bf16.mxu0 0
        %1881 = vmatpush1.bf16.xpose.msra.mxu0 0
        %1882 = vmatprep.subr.bf16.mxu0 0
        %1883 = vmatpush1.bf16.xpose.msra.mxu0 0
        %1884 = vmatprep.subr.bf16.mxu0 0
        %1885 = vmatpush1.bf16.xpose.msra.mxu0 0
        %1886 = vmatprep.subr.bf16.mxu0 0
        %1887 = vmatpush1.bf16.xpose.msra.mxu0 0
        %1888 = vmatprep.subr.bf16.mxu0 0
        %1889 = vmatpush1.bf16.xpose.msra.mxu0 0
        %1890 = vmatprep.mubr.bf16.mxu0 0
        %1891 = vmatmul.mubr.bf16.gmra.mrb[0].mxu0 %v1811
        %v1892 = vpop.f32.mrb[0].mxu0
        %v1893 = vadd.f32 %v907, %v1892
        %v1894 = vpop.f32.mrb[0].mxu0
        %v1895 = vpop.f32.mrb[0].mxu0
        %v1896 = vadd.f32 %v907, %v1895
        %v1897 = vpop.f32.mrb[0].mxu0
        %1898 = vmatprep.mubr.bf16.mxu0 0
        %1899 = vmatmul.mubr.bf16.gmra.mrb[0].mxu0 %v1814
        %v1900 = vpop.f32.mrb[0].mxu0
        %v1901 = vadd.f32 %v907, %v1900
        %v1902 = vpop.f32.mrb[0].mxu0
        %v1903 = vpop.f32.mrb[0].mxu0
        %v1904 = vadd.f32 %v907, %v1903
        %v1905 = vpop.f32.mrb[0].mxu0
        %1906 = vmatprep.mubr.bf16.mxu0 0
        %1907 = vmatmul.mubr.bf16.gmra.mrb[0].mxu0 %v1817
        %v1908 = vpop.f32.mrb[0].mxu0
        %v1909 = vadd.f32 %v907, %v1908
        %v1910 = vpop.f32.mrb[0].mxu0
        %v1911 = vpop.f32.mrb[0].mxu0
        %v1912 = vadd.f32 %v907, %v1911
        %v1913 = vpop.f32.mrb[0].mxu0
        %1914 = vmatprep.mubr.bf16.mxu0 0
        %1915 = vmatmul.mubr.bf16.gmra.mrb[0].mxu0 %v1820
        %v1916 = vpop.f32.mrb[0].mxu0
        %v1917 = vadd.f32 %v907, %v1916
        %v1918 = vpop.f32.mrb[0].mxu0
        %v1919 = vpop.f32.mrb[0].mxu0
        %v1920 = vadd.f32 %v907, %v1919
        %v1921 = vpop.f32.mrb[0].mxu0
        %1922 = vmatprep.mubr.bf16.mxu0 0
        %1923 = vmatmul.mubr.bf16.gmra.mrb[0].mxu0 %v1823
        %v1924 = vpop.f32.mrb[0].mxu0
        %v1925 = vadd.f32 %v907, %v1924
        %v1926 = vpop.f32.mrb[0].mxu0
        %v1927 = vpop.f32.mrb[0].mxu0
        %v1928 = vadd.f32 %v907, %v1927
        %v1929 = vpop.f32.mrb[0].mxu0
        %1930 = vmatprep.mubr.bf16.mxu0 0
        %1931 = vmatmul.mubr.bf16.gmra.mrb[0].mxu0 %v1826
        %v1932 = vpop.f32.mrb[0].mxu0
        %v1933 = vadd.f32 %v907, %v1932
        %v1934 = vpop.f32.mrb[0].mxu0
        %v1935 = vpop.f32.mrb[0].mxu0
        %v1936 = vadd.f32 %v907, %v1935
        %v1937 = vpop.f32.mrb[0].mxu0
        %1938 = vmatprep.mubr.bf16.mxu0 0
        %1939 = vmatmul.mubr.bf16.gmra.mrb[0].mxu0 %v1829
        %v1940 = vpop.f32.mrb[0].mxu0
        %v1941 = vadd.f32 %v907, %v1940
        %v1942 = vpop.f32.mrb[0].mxu0
        %v1943 = vpop.f32.mrb[0].mxu0
        %v1944 = vadd.f32 %v907, %v1943
        %v1945 = vpop.f32.mrb[0].mxu0
        %1946 = vmatprep.mubr.bf16.mxu0 0
        %1947 = vmatmul.mubr.bf16.gmra.mrb[0].mxu0 %v1832
        %v1948 = vpop.f32.mrb[0].mxu0
        %v1949 = vadd.f32 %v907, %v1948
        %v1950 = vpop.f32.mrb[0].mxu0
        %v1951 = vpop.f32.mrb[0].mxu0
        %v1952 = vadd.f32 %v907, %v1951
        %v1953 = vpop.f32.mrb[0].mxu0
        %1954 = vdwg.mxu0
        %1955 = vmax.xlane.f32.xlu0 %v1893
        %v1956 = vpop.xlane.xlu0 %1955
        %1957 = vmax.xlane.f32.xlu0 %v1896
        %v1958 = vpop.xlane.xlu0 %1957
        %1959 = vmax.xlane.f32.xlu0 %v1901
        %v1960 = vpop.xlane.xlu0 %1959
        %1961 = vmax.xlane.f32.xlu0 %v1904
        %v1962 = vpop.xlane.xlu0 %1961
        %1963 = vmax.xlane.f32.xlu0 %v1909
        %v1964 = vpop.xlane.xlu0 %1963
        %1965 = vmax.xlane.f32.xlu0 %v1912
        %v1966 = vpop.xlane.xlu0 %1965
        %1967 = vmax.xlane.f32.xlu0 %v1917
        %v1968 = vpop.xlane.xlu0 %1967
        %1969 = vmax.xlane.f32.xlu0 %v1920
        %v1970 = vpop.xlane.xlu0 %1969
        %1971 = vmax.xlane.f32.xlu0 %v1925
        %v1972 = vpop.xlane.xlu0 %1971
        %1973 = vmax.xlane.f32.xlu0 %v1928
        %v1974 = vpop.xlane.xlu0 %1973
        %1975 = vmax.xlane.f32.xlu0 %v1933
        %v1976 = vpop.xlane.xlu0 %1975
        %1977 = vmax.xlane.f32.xlu0 %v1936
        %v1978 = vpop.xlane.xlu0 %1977
        %1979 = vmax.xlane.f32.xlu0 %v1941
        %v1980 = vpop.xlane.xlu0 %1979
        %1981 = vmax.xlane.f32.xlu0 %v1944
        %v1982 = vpop.xlane.xlu0 %1981
        %1983 = vmax.xlane.f32.xlu0 %v1949
        %v1984 = vpop.xlane.xlu0 %1983
        %1985 = vmax.xlane.f32.xlu0 %v1952
        %v1986 = vpop.xlane.xlu0 %1985
        %v1987 = vsub.f32 %v1893, %v1956
        %v1988 = vsub.f32 %v1896, %v1958
        %v1989 = vsub.f32 %v1901, %v1960
        %v1990 = vsub.f32 %v1904, %v1962
        %v1991 = vsub.f32 %v1909, %v1964
        %v1992 = vsub.f32 %v1912, %v1966
        %v1993 = vsub.f32 %v1917, %v1968
        %v1994 = vsub.f32 %v1920, %v1970
        %v1995 = vsub.f32 %v1925, %v1972
        %v1996 = vsub.f32 %v1928, %v1974
        %v1997 = vsub.f32 %v1933, %v1976
        %v1998 = vsub.f32 %v1936, %v1978
        %v1999 = vsub.f32 %v1941, %v1980
        %v2000 = vsub.f32 %v1944, %v1982
        %v2001 = vsub.f32 %v1949, %v1984
        %v2002 = vsub.f32 %v1952, %v1986
        %v2003 = vmul.f32 %v1987, 1.442695
        %v2004 = vpow.pop %v2003
        %v2005 = vmul.f32 %v1988, 1.442695
        %v2006 = vpow.pop %v2005
        %v2007 = vmul.f32 %v1989, 1.442695
        %v2008 = vpow.pop %v2007
        %v2009 = vmul.f32 %v1990, 1.442695
        %v2010 = vpow.pop %v2009
        %v2011 = vmul.f32 %v1991, 1.442695
        %v2012 = vpow.pop %v2011
        %v2013 = vmul.f32 %v1992, 1.442695
        %v2014 = vpow.pop %v2013
        %v2015 = vmul.f32 %v1993, 1.442695
        %v2016 = vpow.pop %v2015
        %v2017 = vmul.f32 %v1994, 1.442695
        %v2018 = vpow.pop %v2017
        %v2019 = vmul.f32 %v1995, 1.442695
        %v2020 = vpow.pop %v2019
        %v2021 = vmul.f32 %v1996, 1.442695
        %v2022 = vpow.pop %v2021
        %v2023 = vmul.f32 %v1997, 1.442695
        %v2024 = vpow.pop %v2023
        %v2025 = vmul.f32 %v1998, 1.442695
        %v2026 = vpow.pop %v2025
        %v2027 = vmul.f32 %v1999, 1.442695
        %v2028 = vpow.pop %v2027
        %v2029 = vmul.f32 %v2000, 1.442695
        %v2030 = vpow.pop %v2029
        %v2031 = vmul.f32 %v2001, 1.442695
        %v2032 = vpow.pop %v2031
        %v2033 = vmul.f32 %v2002, 1.442695
        %v2034 = vpow.pop %v2033
        %2035 = vadd.xlane.f32.xlu0 %v2004
        %v2036 = vpop.xlane.xlu0 %2035
        %2037 = vadd.xlane.f32.xlu0 %v2006
        %v2038 = vpop.xlane.xlu0 %2037
        %2039 = vadd.xlane.f32.xlu0 %v2008
        %v2040 = vpop.xlane.xlu0 %2039
        %2041 = vadd.xlane.f32.xlu0 %v2010
        %v2042 = vpop.xlane.xlu0 %2041
        %2043 = vadd.xlane.f32.xlu0 %v2012
        %v2044 = vpop.xlane.xlu0 %2043
        %2045 = vadd.xlane.f32.xlu0 %v2014
        %v2046 = vpop.xlane.xlu0 %2045
        %2047 = vadd.xlane.f32.xlu0 %v2016
        %v2048 = vpop.xlane.xlu0 %2047
        %2049 = vadd.xlane.f32.xlu0 %v2018
        %v2050 = vpop.xlane.xlu0 %2049
        %2051 = vadd.xlane.f32.xlu0 %v2020
        %v2052 = vpop.xlane.xlu0 %2051
        %2053 = vadd.xlane.f32.xlu0 %v2022
        %v2054 = vpop.xlane.xlu0 %2053
        %2055 = vadd.xlane.f32.xlu0 %v2024
        %v2056 = vpop.xlane.xlu0 %2055
        %2057 = vadd.xlane.f32.xlu0 %v2026
        %v2058 = vpop.xlane.xlu0 %2057
        %2059 = vadd.xlane.f32.xlu0 %v2028
        %v2060 = vpop.xlane.xlu0 %2059
        %2061 = vadd.xlane.f32.xlu0 %v2030
        %v2062 = vpop.xlane.xlu0 %2061
        %2063 = vadd.xlane.f32.xlu0 %v2032
        %v2064 = vpop.xlane.xlu0 %2063
        %2065 = vadd.xlane.f32.xlu0 %v2034
        %v2066 = vpop.xlane.xlu0 %2065
        %v2067 = vrcp.pop %v2036
        %v2068 = vrcp.pop %v2038
        %v2069 = vrcp.pop %v2040
        %v2070 = vrcp.pop %v2042
        %v2071 = vrcp.pop %v2044
        %v2072 = vrcp.pop %v2046
        %v2073 = vrcp.pop %v2048
        %v2074 = vrcp.pop %v2050
        %v2075 = vrcp.pop %v2052
        %v2076 = vrcp.pop %v2054
        %v2077 = vrcp.pop %v2056
        %v2078 = vrcp.pop %v2058
        %v2079 = vrcp.pop %v2060
        %v2080 = vrcp.pop %v2062
        %v2081 = vrcp.pop %v2064
        %v2082 = vrcp.pop %v2066
        %v2083 = vmul.f32 %v2004, %v2067
        %v2084 = vmul.f32 %v2006, %v2068
        %v2085 = vmul.f32 %v2008, %v2069
        %v2086 = vmul.f32 %v2010, %v2070
        %v2087 = vmul.f32 %v2012, %v2071
        %v2088 = vmul.f32 %v2014, %v2072
        %v2089 = vmul.f32 %v2016, %v2073
        %v2090 = vmul.f32 %v2018, %v2074
        %v2091 = vmul.f32 %v2020, %v2075
        %v2092 = vmul.f32 %v2022, %v2076
        %v2093 = vmul.f32 %v2024, %v2077
        %v2094 = vmul.f32 %v2026, %v2078
        %v2095 = vmul.f32 %v2028, %v2079
        %v2096 = vmul.f32 %v2030, %v2080
        %v2097 = vmul.f32 %v2032, %v2081
        %v2098 = vmul.f32 %v2034, %v2082
        %v2099 = vpack.c.bf16 %v2084, %v2083
        %v2100 = vpack.c.bf16 %v2086, %v2085
        %v2101 = vpack.c.bf16 %v2088, %v2087
        %v2102 = vpack.c.bf16 %v2090, %v2089
        %v2103 = vpack.c.bf16 %v2092, %v2091
        %v2104 = vpack.c.bf16 %v2094, %v2093
        %v2105 = vpack.c.bf16 %v2096, %v2095
        %v2106 = vpack.c.bf16 %v2098, %v2097
        %2107 = vrot.lane.b32.xlu0 %v894, 64
        %v2108 = vpop.permute.xlu0 %2107
        %2109 = vrot.lane.b32.xlu0 %v895, 64
        %v2110 = vpop.permute.xlu0 %2109
        %2111 = vrot.lane.b32.xlu0 %v896, 64
        %v2112 = vpop.permute.xlu0 %2111
        %2113 = vrot.lane.b32.xlu0 %v897, 64
        %v2114 = vpop.permute.xlu0 %2113
        %2115 = vrot.lane.b32.xlu0 %v898, 64
        %v2116 = vpop.permute.xlu0 %2115
        %2117 = vrot.lane.b32.xlu0 %v899, 64
        %v2118 = vpop.permute.xlu0 %2117
        %2119 = vrot.lane.b32.xlu0 %v900, 64
        %v2120 = vpop.permute.xlu0 %2119
        %2121 = vrot.lane.b32.xlu0 %v901, 64
        %v2122 = vpop.permute.xlu0 %2121
        %2131 = vmatprep.subr.bf16.mxu0 0
        %2132 = vmatpush1.bf16.msra.mxu0 %v2108
        %2133 = vmatprep.subr.bf16.mxu0 0
        %2134 = vmatpush1.bf16.msra.mxu0 %v2110
        %2135 = vmatprep.subr.bf16.mxu0 0
        %2136 = vmatpush1.bf16.msra.mxu0 %v2112
        %2137 = vmatprep.subr.bf16.mxu0 0
        %2138 = vmatpush1.bf16.msra.mxu0 %v2114
        %2139 = vmatprep.subr.bf16.mxu0 0
        %2140 = vmatpush1.bf16.msra.mxu0 %v2116
        %2141 = vmatprep.subr.bf16.mxu0 0
        %2142 = vmatpush1.bf16.msra.mxu0 %v2118
        %2143 = vmatprep.subr.bf16.mxu0 0
        %2144 = vmatpush1.bf16.msra.mxu0 %v2120
        %2145 = vmatprep.subr.bf16.mxu0 0
        %2146 = vmatpush1.bf16.msra.mxu0 %v2122
        %2147 = vmatprep.subr.bf16.mxu0 0
        %2148 = vmatpush1.bf16.msra.mxu0 0
        %2149 = vmatprep.subr.bf16.mxu0 0
        %2150 = vmatpush1.bf16.msra.mxu0 0
        %2151 = vmatprep.subr.bf16.mxu0 0
        %2152 = vmatpush1.bf16.msra.mxu0 0
        %2153 = vmatprep.subr.bf16.mxu0 0
        %2154 = vmatpush1.bf16.msra.mxu0 0
        %2155 = vmatprep.subr.bf16.mxu0 0
        %2156 = vmatpush1.bf16.msra.mxu0 0
        %2157 = vmatprep.subr.bf16.mxu0 0
        %2158 = vmatpush1.bf16.msra.mxu0 0
        %2159 = vmatprep.subr.bf16.mxu0 0
        %2160 = vmatpush1.bf16.msra.mxu0 0
        %2161 = vmatprep.subr.bf16.mxu0 0
        %2162 = vmatpush1.bf16.msra.mxu0 0
        %2163 = vmatprep.mubr.bf16.mxu0 0
        %2164 = vmatmul.mubr.bf16.gmra.mrb[0].mxu0 %v2099
        %v2165 = vpop.f32.mrb[0].mxu0
        %v2166 = vadd.f32 0.0, %v2165
        %v2167 = vpop.f32.mrb[0].mxu0
        %v2168 = vpop.f32.mrb[0].mxu0
        %v2169 = vadd.f32 0.0, %v2168
        %v2170 = vpop.f32.mrb[0].mxu0
        %2171 = vmatprep.mubr.bf16.mxu0 0
        %2172 = vmatmul.mubr.bf16.gmra.mrb[0].mxu0 %v2100
        %v2173 = vpop.f32.mrb[0].mxu0
        %v2174 = vadd.f32 0.0, %v2173
        %v2175 = vpop.f32.mrb[0].mxu0
        %v2176 = vpop.f32.mrb[0].mxu0
        %v2177 = vadd.f32 0.0, %v2176
        %v2178 = vpop.f32.mrb[0].mxu0
        %2179 = vmatprep.mubr.bf16.mxu0 0
        %2180 = vmatmul.mubr.bf16.gmra.mrb[0].mxu0 %v2101
        %v2181 = vpop.f32.mrb[0].mxu0
        %v2182 = vadd.f32 0.0, %v2181
        %v2183 = vpop.f32.mrb[0].mxu0
        %v2184 = vpop.f32.mrb[0].mxu0
        %v2185 = vadd.f32 0.0, %v2184
        %v2186 = vpop.f32.mrb[0].mxu0
        %2187 = vmatprep.mubr.bf16.mxu0 0
        %2188 = vmatmul.mubr.bf16.gmra.mrb[0].mxu0 %v2102
        %v2189 = vpop.f32.mrb[0].mxu0
        %v2190 = vadd.f32 0.0, %v2189
        %v2191 = vpop.f32.mrb[0].mxu0
        %v2192 = vpop.f32.mrb[0].mxu0
        %v2193 = vadd.f32 0.0, %v2192
        %v2194 = vpop.f32.mrb[0].mxu0
        %2195 = vmatprep.mubr.bf16.mxu0 0
        %2196 = vmatmul.mubr.bf16.gmra.mrb[0].mxu0 %v2103
        %v2197 = vpop.f32.mrb[0].mxu0
        %v2198 = vadd.f32 0.0, %v2197
        %v2199 = vpop.f32.mrb[0].mxu0
        %v2200 = vpop.f32.mrb[0].mxu0
        %v2201 = vadd.f32 0.0, %v2200
        %v2202 = vpop.f32.mrb[0].mxu0
        %2203 = vmatprep.mubr.bf16.mxu0 0
        %2204 = vmatmul.mubr.bf16.gmra.mrb[0].mxu0 %v2104
        %v2205 = vpop.f32.mrb[0].mxu0
        %v2206 = vadd.f32 0.0, %v2205
        %v2207 = vpop.f32.mrb[0].mxu0
        %v2208 = vpop.f32.mrb[0].mxu0
        %v2209 = vadd.f32 0.0, %v2208
        %v2210 = vpop.f32.mrb[0].mxu0
        %2211 = vmatprep.mubr.bf16.mxu0 0
        %2212 = vmatmul.mubr.bf16.gmra.mrb[0].mxu0 %v2105
        %v2213 = vpop.f32.mrb[0].mxu0
        %v2214 = vadd.f32 0.0, %v2213
        %v2215 = vpop.f32.mrb[0].mxu0
        %v2216 = vpop.f32.mrb[0].mxu0
        %v2217 = vadd.f32 0.0, %v2216
        %v2218 = vpop.f32.mrb[0].mxu0
        %2219 = vmatprep.mubr.bf16.mxu0 0
        %2220 = vmatmul.mubr.bf16.gmra.mrb[0].mxu0 %v2106
        %v2221 = vpop.f32.mrb[0].mxu0
        %v2222 = vadd.f32 0.0, %v2221
        %v2223 = vpop.f32.mrb[0].mxu0
        %v2224 = vpop.f32.mrb[0].mxu0
        %v2225 = vadd.f32 0.0, %v2224
        %v2226 = vpop.f32.mrb[0].mxu0
        %2227 = vdwg.mxu0
        %2228 = vrot.lane.b32.xlu0 %v878, 32
        %v2229 = vpop.permute.xlu0 %2228
        %2230 = vrot.lane.b32.xlu0 %v879, 32
        %v2231 = vpop.permute.xlu0 %2230
        %2232 = vrot.lane.b32.xlu0 %v880, 32
        %v2233 = vpop.permute.xlu0 %2232
        %2234 = vrot.lane.b32.xlu0 %v881, 32
        %v2235 = vpop.permute.xlu0 %2234
        %2236 = vrot.lane.b32.xlu0 %v882, 32
        %v2237 = vpop.permute.xlu0 %2236
        %2238 = vrot.lane.b32.xlu0 %v883, 32
        %v2239 = vpop.permute.xlu0 %2238
        %2240 = vrot.lane.b32.xlu0 %v884, 32
        %v2241 = vpop.permute.xlu0 %2240
        %2242 = vrot.lane.b32.xlu0 %v885, 32
        %v2243 = vpop.permute.xlu0 %2242
        %2244 = vrot.lane.b32.xlu0 %v886, 32
        %v2245 = vpop.permute.xlu0 %2244
        %2246 = vrot.lane.b32.xlu0 %v887, 32
        %v2247 = vpop.permute.xlu0 %2246
        %2248 = vrot.lane.b32.xlu0 %v888, 32
        %v2249 = vpop.permute.xlu0 %2248
        %2250 = vrot.lane.b32.xlu0 %v889, 32
        %v2251 = vpop.permute.xlu0 %2250
        %2252 = vrot.lane.b32.xlu0 %v890, 32
        %v2253 = vpop.permute.xlu0 %2252
        %2254 = vrot.lane.b32.xlu0 %v891, 32
        %v2255 = vpop.permute.xlu0 %2254
        %2256 = vrot.lane.b32.xlu0 %v892, 32
        %v2257 = vpop.permute.xlu0 %2256
        %2258 = vrot.lane.b32.xlu0 %v893, 32
        %v2259 = vpop.permute.xlu0 %2258
        %v2261 = vsel %vm909, %v2229, 0
        %v2264 = vsel %vm909, %v2231, 0
        %v2267 = vsel %vm909, %v2233, 0
        %v2270 = vsel %vm909, %v2235, 0
        %v2273 = vsel %vm909, %v2237, 0
        %v2276 = vsel %vm909, %v2239, 0
        %v2279 = vsel %vm909, %v2241, 0
        %v2282 = vsel %vm909, %v2243, 0
        %v2285 = vsel %vm909, %v2245, 0
        %v2288 = vsel %vm909, %v2247, 0
        %v2291 = vsel %vm909, %v2249, 0
        %v2294 = vsel %vm909, %v2251, 0
        %v2297 = vsel %vm909, %v2253, 0
        %v2300 = vsel %vm909, %v2255, 0
        %v2303 = vsel %vm909, %v2257, 0
        %v2306 = vsel %vm909, %v2259, 0
        %2308 = vmatprep.subr.bf16.mxu0 0
        %2309 = vmatpush1.bf16.xpose.msra.mxu0 %v2285
        %2310 = vmatprep.subr.bf16.mxu0 0
        %2311 = vmatpush1.bf16.xpose.msra.mxu0 %v2288
        %2312 = vmatprep.subr.bf16.mxu0 0
        %2313 = vmatpush1.bf16.xpose.msra.mxu0 %v2291
        %2314 = vmatprep.subr.bf16.mxu0 0
        %2315 = vmatpush1.bf16.xpose.msra.mxu0 %v2294
        %2316 = vmatprep.subr.bf16.mxu0 0
        %2317 = vmatpush1.bf16.xpose.msra.mxu0 %v2297
        %2318 = vmatprep.subr.bf16.mxu0 0
        %2319 = vmatpush1.bf16.xpose.msra.mxu0 %v2300
        %2320 = vmatprep.subr.bf16.mxu0 0
        %2321 = vmatpush1.bf16.xpose.msra.mxu0 %v2303
        %2322 = vmatprep.subr.bf16.mxu0 0
        %2323 = vmatpush1.bf16.xpose.msra.mxu0 %v2306
        %2324 = vmatprep.subr.bf16.mxu0 0
        %2325 = vmatpush1.bf16.xpose.msra.mxu0 0
        %2326 = vmatprep.subr.bf16.mxu0 0
        %2327 = vmatpush1.bf16.xpose.msra.mxu0 0
        %2328 = vmatprep.subr.bf16.mxu0 0
        %2329 = vmatpush1.bf16.xpose.msra.mxu0 0
        %2330 = vmatprep.subr.bf16.mxu0 0
        %2331 = vmatpush1.bf16.xpose.msra.mxu0 0
        %2332 = vmatprep.subr.bf16.mxu0 0
        %2333 = vmatpush1.bf16.xpose.msra.mxu0 0
        %2334 = vmatprep.subr.bf16.mxu0 0
        %2335 = vmatpush1.bf16.xpose.msra.mxu0 0
        %2336 = vmatprep.subr.bf16.mxu0 0
        %2337 = vmatpush1.bf16.xpose.msra.mxu0 0
        %2338 = vmatprep.subr.bf16.mxu0 0
        %2339 = vmatpush1.bf16.xpose.msra.mxu0 0
        %2340 = vmatprep.mubr.bf16.mxu0 0
        %2341 = vmatmul.mubr.bf16.gmra.mrb[0].mxu0 %v2261
        %v2342 = vpop.f32.mrb[0].mxu0
        %v2343 = vadd.f32 %v907, %v2342
        %v2344 = vpop.f32.mrb[0].mxu0
        %v2345 = vpop.f32.mrb[0].mxu0
        %v2346 = vadd.f32 %v907, %v2345
        %v2347 = vpop.f32.mrb[0].mxu0
        %2348 = vmatprep.mubr.bf16.mxu0 0
        %2349 = vmatmul.mubr.bf16.gmra.mrb[0].mxu0 %v2264
        %v2350 = vpop.f32.mrb[0].mxu0
        %v2351 = vadd.f32 %v907, %v2350
        %v2352 = vpop.f32.mrb[0].mxu0
        %v2353 = vpop.f32.mrb[0].mxu0
        %v2354 = vadd.f32 %v907, %v2353
        %v2355 = vpop.f32.mrb[0].mxu0
        %2356 = vmatprep.mubr.bf16.mxu0 0
        %2357 = vmatmul.mubr.bf16.gmra.mrb[0].mxu0 %v2267
        %v2358 = vpop.f32.mrb[0].mxu0
        %v2359 = vadd.f32 %v907, %v2358
        %v2360 = vpop.f32.mrb[0].mxu0
        %v2361 = vpop.f32.mrb[0].mxu0
        %v2362 = vadd.f32 %v907, %v2361
        %v2363 = vpop.f32.mrb[0].mxu0
        %2364 = vmatprep.mubr.bf16.mxu0 0
        %2365 = vmatmul.mubr.bf16.gmra.mrb[0].mxu0 %v2270
        %v2366 = vpop.f32.mrb[0].mxu0
        %v2367 = vadd.f32 %v907, %v2366
        %v2368 = vpop.f32.mrb[0].mxu0
        %v2369 = vpop.f32.mrb[0].mxu0
        %v2370 = vadd.f32 %v907, %v2369
        %v2371 = vpop.f32.mrb[0].mxu0
        %2372 = vmatprep.mubr.bf16.mxu0 0
        %2373 = vmatmul.mubr.bf16.gmra.mrb[0].mxu0 %v2273
        %v2374 = vpop.f32.mrb[0].mxu0
        %v2375 = vadd.f32 %v907, %v2374
        %v2376 = vpop.f32.mrb[0].mxu0
        %v2377 = vpop.f32.mrb[0].mxu0
        %v2378 = vadd.f32 %v907, %v2377
        %v2379 = vpop.f32.mrb[0].mxu0
        %2380 = vmatprep.mubr.bf16.mxu0 0
        %2381 = vmatmul.mubr.bf16.gmra.mrb[0].mxu0 %v2276
        %v2382 = vpop.f32.mrb[0].mxu0
        %v2383 = vadd.f32 %v907, %v2382
        %v2384 = vpop.f32.mrb[0].mxu0
        %v2385 = vpop.f32.mrb[0].mxu0
        %v2386 = vadd.f32 %v907, %v2385
        %v2387 = vpop.f32.mrb[0].mxu0
        %2388 = vmatprep.mubr.bf16.mxu0 0
        %2389 = vmatmul.mubr.bf16.gmra.mrb[0].mxu0 %v2279
        %v2390 = vpop.f32.mrb[0].mxu0
        %v2391 = vadd.f32 %v907, %v2390
        %v2392 = vpop.f32.mrb[0].mxu0
        %v2393 = vpop.f32.mrb[0].mxu0
        %v2394 = vadd.f32 %v907, %v2393
        %v2395 = vpop.f32.mrb[0].mxu0
        %2396 = vmatprep.mubr.bf16.mxu0 0
        %2397 = vmatmul.mubr.bf16.gmra.mrb[0].mxu0 %v2282
        %v2398 = vpop.f32.mrb[0].mxu0
        %v2399 = vadd.f32 %v907, %v2398
        %v2400 = vpop.f32.mrb[0].mxu0
        %v2401 = vpop.f32.mrb[0].mxu0
        %v2402 = vadd.f32 %v907, %v2401
        %v2403 = vpop.f32.mrb[0].mxu0
        %2404 = vdwg.mxu0
        %2405 = vmax.xlane.f32.xlu0 %v2343
        %v2406 = vpop.xlane.xlu0 %2405
        %2407 = vmax.xlane.f32.xlu0 %v2346
        %v2408 = vpop.xlane.xlu0 %2407
        %2409 = vmax.xlane.f32.xlu0 %v2351
        %v2410 = vpop.xlane.xlu0 %2409
        %2411 = vmax.xlane.f32.xlu0 %v2354
        %v2412 = vpop.xlane.xlu0 %2411
        %2413 = vmax.xlane.f32.xlu0 %v2359
        %v2414 = vpop.xlane.xlu0 %2413
        %2415 = vmax.xlane.f32.xlu0 %v2362
        %v2416 = vpop.xlane.xlu0 %2415
        %2417 = vmax.xlane.f32.xlu0 %v2367
        %v2418 = vpop.xlane.xlu0 %2417
        %2419 = vmax.xlane.f32.xlu0 %v2370
        %v2420 = vpop.xlane.xlu0 %2419
        %2421 = vmax.xlane.f32.xlu0 %v2375
        %v2422 = vpop.xlane.xlu0 %2421
        %2423 = vmax.xlane.f32.xlu0 %v2378
        %v2424 = vpop.xlane.xlu0 %2423
        %2425 = vmax.xlane.f32.xlu0 %v2383
        %v2426 = vpop.xlane.xlu0 %2425
        %2427 = vmax.xlane.f32.xlu0 %v2386
        %v2428 = vpop.xlane.xlu0 %2427
        %2429 = vmax.xlane.f32.xlu0 %v2391
        %v2430 = vpop.xlane.xlu0 %2429
        %2431 = vmax.xlane.f32.xlu0 %v2394
        %v2432 = vpop.xlane.xlu0 %2431
        %2433 = vmax.xlane.f32.xlu0 %v2399
        %v2434 = vpop.xlane.xlu0 %2433
        %2435 = vmax.xlane.f32.xlu0 %v2402
        %v2436 = vpop.xlane.xlu0 %2435
        %v2437 = vsub.f32 %v2343, %v2406
        %v2438 = vsub.f32 %v2346, %v2408
        %v2439 = vsub.f32 %v2351, %v2410
        %v2440 = vsub.f32 %v2354, %v2412
        %v2441 = vsub.f32 %v2359, %v2414
        %v2442 = vsub.f32 %v2362, %v2416
        %v2443 = vsub.f32 %v2367, %v2418
        %v2444 = vsub.f32 %v2370, %v2420
        %v2445 = vsub.f32 %v2375, %v2422
        %v2446 = vsub.f32 %v2378, %v2424
        %v2447 = vsub.f32 %v2383, %v2426
        %v2448 = vsub.f32 %v2386, %v2428
        %v2449 = vsub.f32 %v2391, %v2430
        %v2450 = vsub.f32 %v2394, %v2432
        %v2451 = vsub.f32 %v2399, %v2434
        %v2452 = vsub.f32 %v2402, %v2436
        %v2453 = vmul.f32 %v2437, 1.442695
        %v2454 = vpow.pop %v2453
        %v2455 = vmul.f32 %v2438, 1.442695
        %v2456 = vpow.pop %v2455
        %v2457 = vmul.f32 %v2439, 1.442695
        %v2458 = vpow.pop %v2457
        %v2459 = vmul.f32 %v2440, 1.442695
        %v2460 = vpow.pop %v2459
        %v2461 = vmul.f32 %v2441, 1.442695
        %v2462 = vpow.pop %v2461
        %v2463 = vmul.f32 %v2442, 1.442695
        %v2464 = vpow.pop %v2463
        %v2465 = vmul.f32 %v2443, 1.442695
        %v2466 = vpow.pop %v2465
        %v2467 = vmul.f32 %v2444, 1.442695
        %v2468 = vpow.pop %v2467
        %v2469 = vmul.f32 %v2445, 1.442695
        %v2470 = vpow.pop %v2469
        %v2471 = vmul.f32 %v2446, 1.442695
        %v2472 = vpow.pop %v2471
        %v2473 = vmul.f32 %v2447, 1.442695
        %v2474 = vpow.pop %v2473
        %v2475 = vmul.f32 %v2448, 1.442695
        %v2476 = vpow.pop %v2475
        %v2477 = vmul.f32 %v2449, 1.442695
        %v2478 = vpow.pop %v2477
        %v2479 = vmul.f32 %v2450, 1.442695
        %v2480 = vpow.pop %v2479
        %v2481 = vmul.f32 %v2451, 1.442695
        %v2482 = vpow.pop %v2481
        %v2483 = vmul.f32 %v2452, 1.442695
        %v2484 = vpow.pop %v2483
        %2485 = vadd.xlane.f32.xlu0 %v2454
        %v2486 = vpop.xlane.xlu0 %2485
        %2487 = vadd.xlane.f32.xlu0 %v2456
        %v2488 = vpop.xlane.xlu0 %2487
        %2489 = vadd.xlane.f32.xlu0 %v2458
        %v2490 = vpop.xlane.xlu0 %2489
        %2491 = vadd.xlane.f32.xlu0 %v2460
        %v2492 = vpop.xlane.xlu0 %2491
        %2493 = vadd.xlane.f32.xlu0 %v2462
        %v2494 = vpop.xlane.xlu0 %2493
        %2495 = vadd.xlane.f32.xlu0 %v2464
        %v2496 = vpop.xlane.xlu0 %2495
        %2497 = vadd.xlane.f32.xlu0 %v2466
        %v2498 = vpop.xlane.xlu0 %2497
        %2499 = vadd.xlane.f32.xlu0 %v2468
        %v2500 = vpop.xlane.xlu0 %2499
        %2501 = vadd.xlane.f32.xlu0 %v2470
        %v2502 = vpop.xlane.xlu0 %2501
        %2503 = vadd.xlane.f32.xlu0 %v2472
        %v2504 = vpop.xlane.xlu0 %2503
        %2505 = vadd.xlane.f32.xlu0 %v2474
        %v2506 = vpop.xlane.xlu0 %2505
        %2507 = vadd.xlane.f32.xlu0 %v2476
        %v2508 = vpop.xlane.xlu0 %2507
        %2509 = vadd.xlane.f32.xlu0 %v2478
        %v2510 = vpop.xlane.xlu0 %2509
        %2511 = vadd.xlane.f32.xlu0 %v2480
        %v2512 = vpop.xlane.xlu0 %2511
        %2513 = vadd.xlane.f32.xlu0 %v2482
        %v2514 = vpop.xlane.xlu0 %2513
        %2515 = vadd.xlane.f32.xlu0 %v2484
        %v2516 = vpop.xlane.xlu0 %2515
        %v2517 = vrcp.pop %v2486
        %v2518 = vrcp.pop %v2488
        %v2519 = vrcp.pop %v2490
        %v2520 = vrcp.pop %v2492
        %v2521 = vrcp.pop %v2494
        %v2522 = vrcp.pop %v2496
        %v2523 = vrcp.pop %v2498
        %v2524 = vrcp.pop %v2500
        %v2525 = vrcp.pop %v2502
        %v2526 = vrcp.pop %v2504
        %v2527 = vrcp.pop %v2506
        %v2528 = vrcp.pop %v2508
        %v2529 = vrcp.pop %v2510
        %v2530 = vrcp.pop %v2512
        %v2531 = vrcp.pop %v2514
        %v2532 = vrcp.pop %v2516
        %v2533 = vmul.f32 %v2454, %v2517
        %v2534 = vmul.f32 %v2456, %v2518
        %v2535 = vmul.f32 %v2458, %v2519
        %v2536 = vmul.f32 %v2460, %v2520
        %v2537 = vmul.f32 %v2462, %v2521
        %v2538 = vmul.f32 %v2464, %v2522
        %v2539 = vmul.f32 %v2466, %v2523
        %v2540 = vmul.f32 %v2468, %v2524
        %v2541 = vmul.f32 %v2470, %v2525
        %v2542 = vmul.f32 %v2472, %v2526
        %v2543 = vmul.f32 %v2474, %v2527
        %v2544 = vmul.f32 %v2476, %v2528
        %v2545 = vmul.f32 %v2478, %v2529
        %v2546 = vmul.f32 %v2480, %v2530
        %v2547 = vmul.f32 %v2482, %v2531
        %v2548 = vmul.f32 %v2484, %v2532
        %v2549 = vpack.c.bf16 %v2534, %v2533
        %v2550 = vpack.c.bf16 %v2536, %v2535
        %v2551 = vpack.c.bf16 %v2538, %v2537
        %v2552 = vpack.c.bf16 %v2540, %v2539
        %v2553 = vpack.c.bf16 %v2542, %v2541
        %v2554 = vpack.c.bf16 %v2544, %v2543
        %v2555 = vpack.c.bf16 %v2546, %v2545
        %v2556 = vpack.c.bf16 %v2548, %v2547
        %2557 = vrot.lane.b32.xlu0 %v894, 32
        %v2558 = vpop.permute.xlu0 %2557
        %2559 = vrot.lane.b32.xlu0 %v895, 32
        %v2560 = vpop.permute.xlu0 %2559
        %2561 = vrot.lane.b32.xlu0 %v896, 32
        %v2562 = vpop.permute.xlu0 %2561
        %2563 = vrot.lane.b32.xlu0 %v897, 32
        %v2564 = vpop.permute.xlu0 %2563
        %2565 = vrot.lane.b32.xlu0 %v898, 32
        %v2566 = vpop.permute.xlu0 %2565
        %2567 = vrot.lane.b32.xlu0 %v899, 32
        %v2568 = vpop.permute.xlu0 %2567
        %2569 = vrot.lane.b32.xlu0 %v900, 32
        %v2570 = vpop.permute.xlu0 %2569
        %2571 = vrot.lane.b32.xlu0 %v901, 32
        %v2572 = vpop.permute.xlu0 %2571
        %2581 = vmatprep.subr.bf16.mxu0 0
        %2582 = vmatpush1.bf16.msra.mxu0 %v2558
        %2583 = vmatprep.subr.bf16.mxu0 0
        %2584 = vmatpush1.bf16.msra.mxu0 %v2560
        %2585 = vmatprep.subr.bf16.mxu0 0
        %2586 = vmatpush1.bf16.msra.mxu0 %v2562
        %2587 = vmatprep.subr.bf16.mxu0 0
        %2588 = vmatpush1.bf16.msra.mxu0 %v2564
        %2589 = vmatprep.subr.bf16.mxu0 0
        %2590 = vmatpush1.bf16.msra.mxu0 %v2566
        %2591 = vmatprep.subr.bf16.mxu0 0
        %2592 = vmatpush1.bf16.msra.mxu0 %v2568
        %2593 = vmatprep.subr.bf16.mxu0 0
        %2594 = vmatpush1.bf16.msra.mxu0 %v2570
        %2595 = vmatprep.subr.bf16.mxu0 0
        %2596 = vmatpush1.bf16.msra.mxu0 %v2572
        %2597 = vmatprep.subr.bf16.mxu0 0
        %2598 = vmatpush1.bf16.msra.mxu0 0
        %2599 = vmatprep.subr.bf16.mxu0 0
        %2600 = vmatpush1.bf16.msra.mxu0 0
        %2601 = vmatprep.subr.bf16.mxu0 0
        %2602 = vmatpush1.bf16.msra.mxu0 0
        %2603 = vmatprep.subr.bf16.mxu0 0
        %2604 = vmatpush1.bf16.msra.mxu0 0
        %2605 = vmatprep.subr.bf16.mxu0 0
        %2606 = vmatpush1.bf16.msra.mxu0 0
        %2607 = vmatprep.subr.bf16.mxu0 0
        %2608 = vmatpush1.bf16.msra.mxu0 0
        %2609 = vmatprep.subr.bf16.mxu0 0
        %2610 = vmatpush1.bf16.msra.mxu0 0
        %2611 = vmatprep.subr.bf16.mxu0 0
        %2612 = vmatpush1.bf16.msra.mxu0 0
        %2613 = vmatprep.mubr.bf16.mxu0 0
        %2614 = vmatmul.mubr.bf16.gmra.mrb[0].mxu0 %v2549
        %v2615 = vpop.f32.mrb[0].mxu0
        %v2616 = vadd.f32 0.0, %v2615
        %v2617 = vpop.f32.mrb[0].mxu0
        %v2618 = vpop.f32.mrb[0].mxu0
        %v2619 = vadd.f32 0.0, %v2618
        %v2620 = vpop.f32.mrb[0].mxu0
        %2621 = vmatprep.mubr.bf16.mxu0 0
        %2622 = vmatmul.mubr.bf16.gmra.mrb[0].mxu0 %v2550
        %v2623 = vpop.f32.mrb[0].mxu0
        %v2624 = vadd.f32 0.0, %v2623
        %v2625 = vpop.f32.mrb[0].mxu0
        %v2626 = vpop.f32.mrb[0].mxu0
        %v2627 = vadd.f32 0.0, %v2626
        %v2628 = vpop.f32.mrb[0].mxu0
        %2629 = vmatprep.mubr.bf16.mxu0 0
        %2630 = vmatmul.mubr.bf16.gmra.mrb[0].mxu0 %v2551
        %v2631 = vpop.f32.mrb[0].mxu0
        %v2632 = vadd.f32 0.0, %v2631
        %v2633 = vpop.f32.mrb[0].mxu0
        %v2634 = vpop.f32.mrb[0].mxu0
        %v2635 = vadd.f32 0.0, %v2634
        %v2636 = vpop.f32.mrb[0].mxu0
        %2637 = vmatprep.mubr.bf16.mxu0 0
        %2638 = vmatmul.mubr.bf16.gmra.mrb[0].mxu0 %v2552
        %v2639 = vpop.f32.mrb[0].mxu0
        %v2640 = vadd.f32 0.0, %v2639
        %v2641 = vpop.f32.mrb[0].mxu0
        %v2642 = vpop.f32.mrb[0].mxu0
        %v2643 = vadd.f32 0.0, %v2642
        %v2644 = vpop.f32.mrb[0].mxu0
        %2645 = vmatprep.mubr.bf16.mxu0 0
        %2646 = vmatmul.mubr.bf16.gmra.mrb[0].mxu0 %v2553
        %v2647 = vpop.f32.mrb[0].mxu0
        %v2648 = vadd.f32 0.0, %v2647
        %v2649 = vpop.f32.mrb[0].mxu0
        %v2650 = vpop.f32.mrb[0].mxu0
        %v2651 = vadd.f32 0.0, %v2650
        %v2652 = vpop.f32.mrb[0].mxu0
        %2653 = vmatprep.mubr.bf16.mxu0 0
        %2654 = vmatmul.mubr.bf16.gmra.mrb[0].mxu0 %v2554
        %v2655 = vpop.f32.mrb[0].mxu0
        %v2656 = vadd.f32 0.0, %v2655
        %v2657 = vpop.f32.mrb[0].mxu0
        %v2658 = vpop.f32.mrb[0].mxu0
        %v2659 = vadd.f32 0.0, %v2658
        %v2660 = vpop.f32.mrb[0].mxu0
        %2661 = vmatprep.mubr.bf16.mxu0 0
        %2662 = vmatmul.mubr.bf16.gmra.mrb[0].mxu0 %v2555
        %v2663 = vpop.f32.mrb[0].mxu0
        %v2664 = vadd.f32 0.0, %v2663
        %v2665 = vpop.f32.mrb[0].mxu0
        %v2666 = vpop.f32.mrb[0].mxu0
        %v2667 = vadd.f32 0.0, %v2666
        %v2668 = vpop.f32.mrb[0].mxu0
        %2669 = vmatprep.mubr.bf16.mxu0 0
        %2670 = vmatmul.mubr.bf16.gmra.mrb[0].mxu0 %v2556
        %v2671 = vpop.f32.mrb[0].mxu0
        %v2672 = vadd.f32 0.0, %v2671
        %v2673 = vpop.f32.mrb[0].mxu0
        %v2674 = vpop.f32.mrb[0].mxu0
        %v2675 = vadd.f32 0.0, %v2674
        %v2676 = vpop.f32.mrb[0].mxu0
        %2677 = vdwg.mxu0
        %2694 = vrot.lane.b32.xlu0 %v1716, 32
        %v2695 = vpop.permute.xlu0 %2694
        %2696 = vrot.lane.b32.xlu0 %v1719, 32
        %v2697 = vpop.permute.xlu0 %2696
        %2698 = vrot.lane.b32.xlu0 %v1724, 32
        %v2699 = vpop.permute.xlu0 %2698
        %2700 = vrot.lane.b32.xlu0 %v1727, 32
        %v2701 = vpop.permute.xlu0 %2700
        %2702 = vrot.lane.b32.xlu0 %v1732, 32
        %v2703 = vpop.permute.xlu0 %2702
        %2704 = vrot.lane.b32.xlu0 %v1735, 32
        %v2705 = vpop.permute.xlu0 %2704
        %2706 = vrot.lane.b32.xlu0 %v1740, 32
        %v2707 = vpop.permute.xlu0 %2706
        %2708 = vrot.lane.b32.xlu0 %v1743, 32
        %v2709 = vpop.permute.xlu0 %2708
        %2710 = vrot.lane.b32.xlu0 %v1748, 32
        %v2711 = vpop.permute.xlu0 %2710
        %2712 = vrot.lane.b32.xlu0 %v1751, 32
        %v2713 = vpop.permute.xlu0 %2712
        %2714 = vrot.lane.b32.xlu0 %v1756, 32
        %v2715 = vpop.permute.xlu0 %2714
        %2716 = vrot.lane.b32.xlu0 %v1759, 32
        %v2717 = vpop.permute.xlu0 %2716
        %2718 = vrot.lane.b32.xlu0 %v1764, 32
        %v2719 = vpop.permute.xlu0 %2718
        %2720 = vrot.lane.b32.xlu0 %v1767, 32
        %v2721 = vpop.permute.xlu0 %2720
        %2722 = vrot.lane.b32.xlu0 %v1772, 32
        %v2723 = vpop.permute.xlu0 %2722
        %2724 = vrot.lane.b32.xlu0 %v1775, 32
        %v2725 = vpop.permute.xlu0 %2724
        %2758 = vrot.lane.b32.xlu0 %v2166, 64
        %v2759 = vpop.permute.xlu0 %2758
        %2760 = vrot.lane.b32.xlu0 %v2169, 64
        %v2761 = vpop.permute.xlu0 %2760
        %2762 = vrot.lane.b32.xlu0 %v2174, 64
        %v2763 = vpop.permute.xlu0 %2762
        %2764 = vrot.lane.b32.xlu0 %v2177, 64
        %v2765 = vpop.permute.xlu0 %2764
        %2766 = vrot.lane.b32.xlu0 %v2182, 64
        %v2767 = vpop.permute.xlu0 %2766
        %2768 = vrot.lane.b32.xlu0 %v2185, 64
        %v2769 = vpop.permute.xlu0 %2768
        %2770 = vrot.lane.b32.xlu0 %v2190, 64
        %v2771 = vpop.permute.xlu0 %2770
        %2772 = vrot.lane.b32.xlu0 %v2193, 64
        %v2773 = vpop.permute.xlu0 %2772
        %2774 = vrot.lane.b32.xlu0 %v2198, 64
        %v2775 = vpop.permute.xlu0 %2774
        %2776 = vrot.lane.b32.xlu0 %v2201, 64
        %v2777 = vpop.permute.xlu0 %2776
        %2778 = vrot.lane.b32.xlu0 %v2206, 64
        %v2779 = vpop.permute.xlu0 %2778
        %2780 = vrot.lane.b32.xlu0 %v2209, 64
        %v2781 = vpop.permute.xlu0 %2780
        %2782 = vrot.lane.b32.xlu0 %v2214, 64
        %v2783 = vpop.permute.xlu0 %2782
        %2784 = vrot.lane.b32.xlu0 %v2217, 64
        %v2785 = vpop.permute.xlu0 %2784
        %2786 = vrot.lane.b32.xlu0 %v2222, 64
        %v2787 = vpop.permute.xlu0 %2786
        %2788 = vrot.lane.b32.xlu0 %v2225, 64
        %v2789 = vpop.permute.xlu0 %2788
        %2822 = vrot.lane.b32.xlu0 %v2616, 96
        %v2823 = vpop.permute.xlu0 %2822
        %2824 = vrot.lane.b32.xlu0 %v2619, 96
        %v2825 = vpop.permute.xlu0 %2824
        %2826 = vrot.lane.b32.xlu0 %v2624, 96
        %v2827 = vpop.permute.xlu0 %2826
        %2828 = vrot.lane.b32.xlu0 %v2627, 96
        %v2829 = vpop.permute.xlu0 %2828
        %2830 = vrot.lane.b32.xlu0 %v2632, 96
        %v2831 = vpop.permute.xlu0 %2830
        %2832 = vrot.lane.b32.xlu0 %v2635, 96
        %v2833 = vpop.permute.xlu0 %2832
        %2834 = vrot.lane.b32.xlu0 %v2640, 96
        %v2835 = vpop.permute.xlu0 %2834
        %2836 = vrot.lane.b32.xlu0 %v2643, 96
        %v2837 = vpop.permute.xlu0 %2836
        %2838 = vrot.lane.b32.xlu0 %v2648, 96
        %v2839 = vpop.permute.xlu0 %2838
        %2840 = vrot.lane.b32.xlu0 %v2651, 96
        %v2841 = vpop.permute.xlu0 %2840
        %2842 = vrot.lane.b32.xlu0 %v2656, 96
        %v2843 = vpop.permute.xlu0 %2842
        %2844 = vrot.lane.b32.xlu0 %v2659, 96
        %v2845 = vpop.permute.xlu0 %2844
        %2846 = vrot.lane.b32.xlu0 %v2664, 96
        %v2847 = vpop.permute.xlu0 %2846
        %2848 = vrot.lane.b32.xlu0 %v2667, 96
        %v2849 = vpop.permute.xlu0 %2848
        %2850 = vrot.lane.b32.xlu0 %v2672, 96
        %v2851 = vpop.permute.xlu0 %2850
        %2852 = vrot.lane.b32.xlu0 %v2675, 96
        %v2853 = vpop.permute.xlu0 %2852
        %v2870 = vsel %vm909, %v1242, %v2695
        %v2871 = vsel %vm909, %v1245, %v2697
        %v2872 = vsel %vm909, %v1250, %v2699
        %v2873 = vsel %vm909, %v1253, %v2701
        %v2874 = vsel %vm909, %v1258, %v2703
        %v2875 = vsel %vm909, %v1261, %v2705
        %v2876 = vsel %vm909, %v1266, %v2707
        %v2877 = vsel %vm909, %v1269, %v2709
        %v2878 = vsel %vm909, %v1274, %v2711
        %v2879 = vsel %vm909, %v1277, %v2713
        %v2880 = vsel %vm909, %v1282, %v2715
        %v2881 = vsel %vm909, %v1285, %v2717
        %v2882 = vsel %vm909, %v1290, %v2719
        %v2883 = vsel %vm909, %v1293, %v2721
        %v2884 = vsel %vm909, %v1298, %v2723
        %v2885 = vsel %vm909, %v1301, %v2725
        %vm2886 = vcmask 523264
        %v2887 = vsel %vm2886, %v2870, %v2759
        %v2888 = vsel %vm2886, %v2871, %v2761
        %v2889 = vsel %vm2886, %v2872, %v2763
        %v2890 = vsel %vm2886, %v2873, %v2765
        %v2891 = vsel %vm2886, %v2874, %v2767
        %v2892 = vsel %vm2886, %v2875, %v2769
        %v2893 = vsel %vm2886, %v2876, %v2771
        %v2894 = vsel %vm2886, %v2877, %v2773
        %v2895 = vsel %vm2886, %v2878, %v2775
        %v2896 = vsel %vm2886, %v2879, %v2777
        %v2897 = vsel %vm2886, %v2880, %v2779
        %v2898 = vsel %vm2886, %v2881, %v2781
        %v2899 = vsel %vm2886, %v2882, %v2783
        %v2900 = vsel %vm2886, %v2883, %v2785
        %v2901 = vsel %vm2886, %v2884, %v2787
        %v2902 = vsel %vm2886, %v2885, %v2789
        %vm2903 = vcmask 785408
        %v2904 = vsel %vm2903, %v2887, %v2823
        %v2905 = vsel %vm2903, %v2888, %v2825
        %v2906 = vsel %vm2903, %v2889, %v2827
        %v2907 = vsel %vm2903, %v2890, %v2829
        %v2908 = vsel %vm2903, %v2891, %v2831
        %v2909 = vsel %vm2903, %v2892, %v2833
        %v2910 = vsel %vm2903, %v2893, %v2835
        %v2911 = vsel %vm2903, %v2894, %v2837
        %v2912 = vsel %vm2903, %v2895, %v2839
        %v2913 = vsel %vm2903, %v2896, %v2841
        %v2914 = vsel %vm2903, %v2897, %v2843
        %v2915 = vsel %vm2903, %v2898, %v2845
        %v2916 = vsel %vm2903, %v2899, %v2847
        %v2917 = vsel %vm2903, %v2900, %v2849
        %v2918 = vsel %vm2903, %v2901, %v2851
        %v2919 = vsel %vm2903, %v2902, %v2853
        %v2920 = vpack.c.bf16 %v2905, %v2904
        %v2921 = vpack.c.bf16 %v2907, %v2906
        %v2922 = vpack.c.bf16 %v2909, %v2908
        %v2923 = vpack.c.bf16 %v2911, %v2910
        %v2924 = vpack.c.bf16 %v2913, %v2912
        %v2925 = vpack.c.bf16 %v2915, %v2914
        %v2926 = vpack.c.bf16 %v2917, %v2916
        %v2927 = vpack.c.bf16 %v2919, %v2918
        %v2928 = vld [vmem:[#allocation7] sm:$0xf]
        %v2929 = vld [vmem:[#allocation7 + $0x4] sm:$0xf]
        %v2930 = vld [vmem:[#allocation7 + $0x8] sm:$0xf]
        %v2931 = vld [vmem:[#allocation7 + $0xc] sm:$0xf]
        %v2932 = vld [vmem:[#allocation7 + $0x10] sm:$0xf]
        %v2933 = vld [vmem:[#allocation7 + $0x14] sm:$0xf]
        %v2934 = vld [vmem:[#allocation7 + $0x18] sm:$0xf]
        %v2935 = vld [vmem:[#allocation7 + $0x1c] sm:$0xf]
        %v2936 = vld [vmem:[#allocation7 + $0x20] sm:$0xf]
        %v2937 = vld [vmem:[#allocation7 + $0x24] sm:$0xf]
        %v2938 = vld [vmem:[#allocation7 + $0x28] sm:$0xf]
        %v2939 = vld [vmem:[#allocation7 + $0x2c] sm:$0xf]
        %v2940 = vld [vmem:[#allocation7 + $0x30] sm:$0xf]
        %v2941 = vld [vmem:[#allocation7 + $0x34] sm:$0xf]
        %v2942 = vld [vmem:[#allocation7 + $0x38] sm:$0xf]
        %v2943 = vld [vmem:[#allocation7 + $0x3c] sm:$0xf]
        %v2944 = vld [vmem:[%s5] sm:$0x1]
        %v2946 = vlaneseq
        %v2947 = vshrl.u32 %v2946, 7
        %v2948 = vsub.s32 0, %v2947
        %v2949 = vrot.slane %v2944, %v2948
        %v2967 = vunpack.c.l.b16 %v2928
        %v2968 = vunpack.c.l.b16 %v2929
        %v2969 = vunpack.c.l.b16 %v2930
        %v2970 = vunpack.c.l.b16 %v2931
        %v2971 = vunpack.c.l.b16 %v2932
        %v2972 = vunpack.c.l.b16 %v2933
        %v2973 = vunpack.c.l.b16 %v2934
        %v2974 = vunpack.c.l.b16 %v2935
        %v2975 = vunpack.c.l.b16 %v2936
        %v2976 = vunpack.c.l.b16 %v2937
        %v2977 = vunpack.c.l.b16 %v2938
        %v2978 = vunpack.c.l.b16 %v2939
        %v2979 = vunpack.c.l.b16 %v2940
        %v2980 = vunpack.c.l.b16 %v2941
        %v2981 = vunpack.c.l.b16 %v2942
        %v2982 = vunpack.c.l.b16 %v2943
        %v2983 = vpack.c.b16 %v2968, %v2967
        %v2984 = vpack.c.b16 %v2970, %v2969
        %v2985 = vpack.c.b16 %v2972, %v2971
        %v2986 = vpack.c.b16 %v2974, %v2973
        %v2987 = vpack.c.b16 %v2976, %v2975
        %v2988 = vpack.c.b16 %v2978, %v2977
        %v2989 = vpack.c.b16 %v2980, %v2979
        %v2990 = vpack.c.b16 %v2982, %v2981
        %2999 = vmatprep.subr.bf16.mxu0 0
        %3000 = vmatpush1.bf16.msra.mxu0 %v2983
        %3001 = vmatprep.subr.bf16.mxu0 0
        %3002 = vmatpush1.bf16.msra.mxu0 %v2984
        %3003 = vmatprep.subr.bf16.mxu0 0
        %3004 = vmatpush1.bf16.msra.mxu0 %v2985
        %3005 = vmatprep.subr.bf16.mxu0 0
        %3006 = vmatpush1.bf16.msra.mxu0 %v2986
        %3007 = vmatprep.subr.bf16.mxu0 0
        %3008 = vmatpush1.bf16.msra.mxu0 %v2987
        %3009 = vmatprep.subr.bf16.mxu0 0
        %3010 = vmatpush1.bf16.msra.mxu0 %v2988
        %3011 = vmatprep.subr.bf16.mxu0 0
        %3012 = vmatpush1.bf16.msra.mxu0 %v2989
        %3013 = vmatprep.subr.bf16.mxu0 0
        %3014 = vmatpush1.bf16.msra.mxu0 %v2990
        %3015 = vmatprep.subr.bf16.mxu0 0
        %3016 = vmatpush1.bf16.msra.mxu0 0
        %3017 = vmatprep.subr.bf16.mxu0 0
        %3018 = vmatpush1.bf16.msra.mxu0 0
        %3019 = vmatprep.subr.bf16.mxu0 0
        %3020 = vmatpush1.bf16.msra.mxu0 0
        %3021 = vmatprep.subr.bf16.mxu0 0
        %3022 = vmatpush1.bf16.msra.mxu0 0
        %3023 = vmatprep.subr.bf16.mxu0 0
        %3024 = vmatpush1.bf16.msra.mxu0 0
        %3025 = vmatprep.subr.bf16.mxu0 0
        %3026 = vmatpush1.bf16.msra.mxu0 0
        %3027 = vmatprep.subr.bf16.mxu0 0
        %3028 = vmatpush1.bf16.msra.mxu0 0
        %3029 = vmatprep.subr.bf16.mxu0 0
        %3030 = vmatpush1.bf16.msra.mxu0 0
        %3031 = vmatprep.mubr.bf16.mxu0 0
        %3032 = vmatmul.mubr.bf16.gmra.mrb[0].mxu0 %v2920
        %v3033 = vpop.f32.mrb[0].mxu0
        %v3034 = vadd.f32 %v2949, %v3033
        %v3035 = vpop.f32.mrb[0].mxu0
        %v3036 = vpop.f32.mrb[0].mxu0
        %v3037 = vadd.f32 %v2949, %v3036
        %v3038 = vpop.f32.mrb[0].mxu0
        %3039 = vmatprep.mubr.bf16.mxu0 0
        %3040 = vmatmul.mubr.bf16.gmra.mrb[0].mxu0 %v2921
        %v3041 = vpop.f32.mrb[0].mxu0
        %v3042 = vadd.f32 %v2949, %v3041
        %v3043 = vpop.f32.mrb[0].mxu0
        %v3044 = vpop.f32.mrb[0].mxu0
        %v3045 = vadd.f32 %v2949, %v3044
        %v3046 = vpop.f32.mrb[0].mxu0
        %3047 = vmatprep.mubr.bf16.mxu0 0
        %3048 = vmatmul.mubr.bf16.gmra.mrb[0].mxu0 %v2922
        %v3049 = vpop.f32.mrb[0].mxu0
        %v3050 = vadd.f32 %v2949, %v3049
        %v3051 = vpop.f32.mrb[0].mxu0
        %v3052 = vpop.f32.mrb[0].mxu0
        %v3053 = vadd.f32 %v2949, %v3052
        %v3054 = vpop.f32.mrb[0].mxu0
        %3055 = vmatprep.mubr.bf16.mxu0 0
        %3056 = vmatmul.mubr.bf16.gmra.mrb[0].mxu0 %v2923
        %v3057 = vpop.f32.mrb[0].mxu0
        %v3058 = vadd.f32 %v2949, %v3057
        %v3059 = vpop.f32.mrb[0].mxu0
        %v3060 = vpop.f32.mrb[0].mxu0
        %v3061 = vadd.f32 %v2949, %v3060
        %v3062 = vpop.f32.mrb[0].mxu0
        %3063 = vmatprep.mubr.bf16.mxu0 0
        %3064 = vmatmul.mubr.bf16.gmra.mrb[0].mxu0 %v2924
        %v3065 = vpop.f32.mrb[0].mxu0
        %v3066 = vadd.f32 %v2949, %v3065
        %v3067 = vpop.f32.mrb[0].mxu0
        %v3068 = vpop.f32.mrb[0].mxu0
        %v3069 = vadd.f32 %v2949, %v3068
        %v3070 = vpop.f32.mrb[0].mxu0
        %3071 = vmatprep.mubr.bf16.mxu0 0
        %3072 = vmatmul.mubr.bf16.gmra.mrb[0].mxu0 %v2925
        %v3073 = vpop.f32.mrb[0].mxu0
        %v3074 = vadd.f32 %v2949, %v3073
        %v3075 = vpop.f32.mrb[0].mxu0
        %v3076 = vpop.f32.mrb[0].mxu0
        %v3077 = vadd.f32 %v2949, %v3076
        %v3078 = vpop.f32.mrb[0].mxu0
        %3079 = vmatprep.mubr.bf16.mxu0 0
        %3080 = vmatmul.mubr.bf16.gmra.mrb[0].mxu0 %v2926
        %v3081 = vpop.f32.mrb[0].mxu0
        %v3082 = vadd.f32 %v2949, %v3081
        %v3083 = vpop.f32.mrb[0].mxu0
        %v3084 = vpop.f32.mrb[0].mxu0
        %v3085 = vadd.f32 %v2949, %v3084
        %v3086 = vpop.f32.mrb[0].mxu0
        %3087 = vmatprep.mubr.bf16.mxu0 0
        %3088 = vmatmul.mubr.bf16.gmra.mrb[0].mxu0 %v2927
        %v3089 = vpop.f32.mrb[0].mxu0
        %v3090 = vadd.f32 %v2949, %v3089
        %v3091 = vpop.f32.mrb[0].mxu0
        %v3092 = vpop.f32.mrb[0].mxu0
        %v3093 = vadd.f32 %v2949, %v3092
        %v3094 = vpop.f32.mrb[0].mxu0
        %3095 = vdwg.mxu0
        %v3096 = vadd.f32 %v3034, %v451
        %v3097 = vadd.f32 %v3037, %v452
        %v3098 = vadd.f32 %v3042, %v453
        %v3099 = vadd.f32 %v3045, %v454
        %v3100 = vadd.f32 %v3050, %v455
        %v3101 = vadd.f32 %v3053, %v456
        %v3102 = vadd.f32 %v3058, %v457
        %v3103 = vadd.f32 %v3061, %v458
        %v3104 = vadd.f32 %v3066, %v459
        %v3105 = vadd.f32 %v3069, %v460
        %v3106 = vadd.f32 %v3074, %v461
        %v3107 = vadd.f32 %v3077, %v462
        %v3108 = vadd.f32 %v3082, %v463
        %v3109 = vadd.f32 %v3085, %v464
        %v3110 = vadd.f32 %v3090, %v465
        %v3111 = vadd.f32 %v3093, %v466
        %v3112 = vpack.c.bf16 %v3097, %v3096
        %v3113 = vpack.c.bf16 %v3099, %v3098
        %v3114 = vpack.c.bf16 %v3101, %v3100
        %v3115 = vpack.c.bf16 %v3103, %v3102
        %v3116 = vpack.c.bf16 %v3105, %v3104
        %v3117 = vpack.c.bf16 %v3107, %v3106
        %v3118 = vpack.c.bf16 %v3109, %v3108
        %v3119 = vpack.c.bf16 %v3111, %v3110
        %v3120 = vld [vmem:[#allocation8] sm:$0xff]
        %v3121 = vld [vmem:[#allocation8 + $0x8] sm:$0xff]
        %v3122 = vld [vmem:[#allocation8 + $0x10] sm:$0xff]
        %v3123 = vld [vmem:[#allocation8 + $0x18] sm:$0xff]
        %v3124 = vld [vmem:[#allocation8 + $0x20] sm:$0xff]
        %v3125 = vld [vmem:[#allocation8 + $0x28] sm:$0xff]
        %v3126 = vld [vmem:[#allocation8 + $0x30] sm:$0xff]
        %v3127 = vld [vmem:[#allocation8 + $0x38] sm:$0xff]
        %v3128 = vld [vmem:[#allocation8 + $0x40] sm:$0xff]
        %v3129 = vld [vmem:[#allocation8 + $0x48] sm:$0xff]
        %v3130 = vld [vmem:[#allocation8 + $0x50] sm:$0xff]
        %v3131 = vld [vmem:[#allocation8 + $0x58] sm:$0xff]
        %v3132 = vld [vmem:[#allocation8 + $0x60] sm:$0xff]
        %v3133 = vld [vmem:[#allocation8 + $0x68] sm:$0xff]
        %v3134 = vld [vmem:[#allocation8 + $0x70] sm:$0xff]
        %v3135 = vld [vmem:[#allocation8 + $0x78] sm:$0xff]
        %v3136 = vld [vmem:[%s7] sm:$0x3]
        %v3138 = vlaneseq
        %v3139 = vshrl.u32 %v3138, 7
        %v3140 = vsub.s32 0, %v3139
        %v3141 = vrot.slane %v3136, %v3140
        %v3142 = vlaneseq
        %v3143 = vshrl.u32 %v3142, 7
        %v3144 = vsub.s32 1, %v3143
        %v3145 = vrot.slane %v3136, %v3144
        %v3164 = vunpack.c.l.b16 %v3120
        %v3165 = vunpack.c.h.b16 %v3120
        %v3166 = vunpack.c.l.b16 %v3121
        %v3167 = vunpack.c.h.b16 %v3121
        %v3168 = vunpack.c.l.b16 %v3122
        %v3169 = vunpack.c.h.b16 %v3122
        %v3170 = vunpack.c.l.b16 %v3123
        %v3171 = vunpack.c.h.b16 %v3123
        %v3172 = vunpack.c.l.b16 %v3124
        %v3173 = vunpack.c.h.b16 %v3124
        %v3174 = vunpack.c.l.b16 %v3125
        %v3175 = vunpack.c.h.b16 %v3125
        %v3176 = vunpack.c.l.b16 %v3126
        %v3177 = vunpack.c.h.b16 %v3126
        %v3178 = vunpack.c.l.b16 %v3127
        %v3179 = vunpack.c.h.b16 %v3127
        %v3180 = vunpack.c.l.b16 %v3128
        %v3181 = vunpack.c.h.b16 %v3128
        %v3182 = vunpack.c.l.b16 %v3129
        %v3183 = vunpack.c.h.b16 %v3129
        %v3184 = vunpack.c.l.b16 %v3130
        %v3185 = vunpack.c.h.b16 %v3130
        %v3186 = vunpack.c.l.b16 %v3131
        %v3187 = vunpack.c.h.b16 %v3131
        %v3188 = vunpack.c.l.b16 %v3132
        %v3189 = vunpack.c.h.b16 %v3132
        %v3190 = vunpack.c.l.b16 %v3133
        %v3191 = vunpack.c.h.b16 %v3133
        %v3192 = vunpack.c.l.b16 %v3134
        %v3193 = vunpack.c.h.b16 %v3134
        %v3194 = vunpack.c.l.b16 %v3135
        %v3195 = vunpack.c.h.b16 %v3135
        %v3196 = vpack.c.b16 %v3166, %v3164
        %v3197 = vpack.c.b16 %v3167, %v3165
        %v3198 = vpack.c.b16 %v3170, %v3168
        %v3199 = vpack.c.b16 %v3171, %v3169
        %v3200 = vpack.c.b16 %v3174, %v3172
        %v3201 = vpack.c.b16 %v3175, %v3173
        %v3202 = vpack.c.b16 %v3178, %v3176
        %v3203 = vpack.c.b16 %v3179, %v3177
        %v3204 = vpack.c.b16 %v3182, %v3180
        %v3205 = vpack.c.b16 %v3183, %v3181
        %v3206 = vpack.c.b16 %v3186, %v3184
        %v3207 = vpack.c.b16 %v3187, %v3185
        %v3208 = vpack.c.b16 %v3190, %v3188
        %v3209 = vpack.c.b16 %v3191, %v3189
        %v3210 = vpack.c.b16 %v3194, %v3192
        %v3211 = vpack.c.b16 %v3195, %v3193
        %3228 = vmatprep.subr.bf16.mxu0 %v3197
        %3229 = vmatpush1.bf16.msra.mxu0 %v3196
        %3230 = vmatprep.subr.bf16.mxu0 %v3199
        %3231 = vmatpush1.bf16.msra.mxu0 %v3198
        %3232 = vmatprep.subr.bf16.mxu0 %v3201
        %3233 = vmatpush1.bf16.msra.mxu0 %v3200
        %3234 = vmatprep.subr.bf16.mxu0 %v3203
        %3235 = vmatpush1.bf16.msra.mxu0 %v3202
        %3236 = vmatprep.subr.bf16.mxu0 %v3205
        %3237 = vmatpush1.bf16.msra.mxu0 %v3204
        %3238 = vmatprep.subr.bf16.mxu0 %v3207
        %3239 = vmatpush1.bf16.msra.mxu0 %v3206
        %3240 = vmatprep.subr.bf16.mxu0 %v3209
        %3241 = vmatpush1.bf16.msra.mxu0 %v3208
        %3242 = vmatprep.subr.bf16.mxu0 %v3211
        %3243 = vmatpush1.bf16.msra.mxu0 %v3210
        %3244 = vmatprep.subr.bf16.mxu0 0
        %3245 = vmatpush1.bf16.msra.mxu0 0
        %3246 = vmatprep.subr.bf16.mxu0 0
        %3247 = vmatpush1.bf16.msra.mxu0 0
        %3248 = vmatprep.subr.bf16.mxu0 0
        %3249 = vmatpush1.bf16.msra.mxu0 0
        %3250 = vmatprep.subr.bf16.mxu0 0
        %3251 = vmatpush1.bf16.msra.mxu0 0
        %3252 = vmatprep.subr.bf16.mxu0 0
        %3253 = vmatpush1.bf16.msra.mxu0 0
        %3254 = vmatprep.subr.bf16.mxu0 0
        %3255 = vmatpush1.bf16.msra.mxu0 0
        %3256 = vmatprep.subr.bf16.mxu0 0
        %3257 = vmatpush1.bf16.msra.mxu0 0
        %3258 = vmatprep.subr.bf16.mxu0 0
        %3259 = vmatpush1.bf16.msra.mxu0 0
        %3260 = vmatprep.mubr.bf16.mxu0 0
        %3261 = vmatmul.mubr.bf16.gmra.mrb[0].mxu0 %v3112
        %v3262 = vpop.f32.mrb[0].mxu0
        %v3263 = vadd.f32 %v3141, %v3262
        %v3264 = vpop.f32.mrb[0].mxu0
        %v3265 = vadd.f32 %v3145, %v3264
        %v3266 = vpop.f32.mrb[0].mxu0
        %v3267 = vadd.f32 %v3141, %v3266
        %v3268 = vpop.f32.mrb[0].mxu0
        %v3269 = vadd.f32 %v3145, %v3268
        %3270 = vmatprep.mubr.bf16.mxu0 0
        %3271 = vmatmul.mubr.bf16.gmra.mrb[0].mxu0 %v3113
        %v3272 = vpop.f32.mrb[0].mxu0
        %v3273 = vadd.f32 %v3141, %v3272
        %v3274 = vpop.f32.mrb[0].mxu0
        %v3275 = vadd.f32 %v3145, %v3274
        %v3276 = vpop.f32.mrb[0].mxu0
        %v3277 = vadd.f32 %v3141, %v3276
        %v3278 = vpop.f32.mrb[0].mxu0
        %v3279 = vadd.f32 %v3145, %v3278
        %3280 = vmatprep.mubr.bf16.mxu0 0
        %3281 = vmatmul.mubr.bf16.gmra.mrb[0].mxu0 %v3114
        %v3282 = vpop.f32.mrb[0].mxu0
        %v3283 = vadd.f32 %v3141, %v3282
        %v3284 = vpop.f32.mrb[0].mxu0
        %v3285 = vadd.f32 %v3145, %v3284
        %v3286 = vpop.f32.mrb[0].mxu0
        %v3287 = vadd.f32 %v3141, %v3286
        %v3288 = vpop.f32.mrb[0].mxu0
        %v3289 = vadd.f32 %v3145, %v3288
        %3290 = vmatprep.mubr.bf16.mxu0 0
        %3291 = vmatmul.mubr.bf16.gmra.mrb[0].mxu0 %v3115
        %v3292 = vpop.f32.mrb[0].mxu0
        %v3293 = vadd.f32 %v3141, %v3292
        %v3294 = vpop.f32.mrb[0].mxu0
        %v3295 = vadd.f32 %v3145, %v3294
        %v3296 = vpop.f32.mrb[0].mxu0
        %v3297 = vadd.f32 %v3141, %v3296
        %v3298 = vpop.f32.mrb[0].mxu0
        %v3299 = vadd.f32 %v3145, %v3298
        %3300 = vmatprep.mubr.bf16.mxu0 0
        %3301 = vmatmul.mubr.bf16.gmra.mrb[0].mxu0 %v3116
        %v3302 = vpop.f32.mrb[0].mxu0
        %v3303 = vadd.f32 %v3141, %v3302
        %v3304 = vpop.f32.mrb[0].mxu0
        %v3305 = vadd.f32 %v3145, %v3304
        %v3306 = vpop.f32.mrb[0].mxu0
        %v3307 = vadd.f32 %v3141, %v3306
        %v3308 = vpop.f32.mrb[0].mxu0
        %v3309 = vadd.f32 %v3145, %v3308
        %3310 = vmatprep.mubr.bf16.mxu0 0
        %3311 = vmatmul.mubr.bf16.gmra.mrb[0].mxu0 %v3117
        %v3312 = vpop.f32.mrb[0].mxu0
        %v3313 = vadd.f32 %v3141, %v3312
        %v3314 = vpop.f32.mrb[0].mxu0
        %v3315 = vadd.f32 %v3145, %v3314
        %v3316 = vpop.f32.mrb[0].mxu0
        %v3317 = vadd.f32 %v3141, %v3316
        %v3318 = vpop.f32.mrb[0].mxu0
        %v3319 = vadd.f32 %v3145, %v3318
        %3320 = vmatprep.mubr.bf16.mxu0 0
        %3321 = vmatmul.mubr.bf16.gmra.mrb[0].mxu0 %v3118
        %v3322 = vpop.f32.mrb[0].mxu0
        %v3323 = vadd.f32 %v3141, %v3322
        %v3324 = vpop.f32.mrb[0].mxu0
        %v3325 = vadd.f32 %v3145, %v3324
        %v3326 = vpop.f32.mrb[0].mxu0
        %v3327 = vadd.f32 %v3141, %v3326
        %v3328 = vpop.f32.mrb[0].mxu0
        %v3329 = vadd.f32 %v3145, %v3328
        %3330 = vmatprep.mubr.bf16.mxu0 0
        %3331 = vmatmul.mubr.bf16.gmra.mrb[0].mxu0 %v3119
        %v3332 = vpop.f32.mrb[0].mxu0
        %v3333 = vadd.f32 %v3141, %v3332
        %v3334 = vpop.f32.mrb[0].mxu0
        %v3335 = vadd.f32 %v3145, %v3334
        %v3336 = vpop.f32.mrb[0].mxu0
        %v3337 = vadd.f32 %v3141, %v3336
        %v3338 = vpop.f32.mrb[0].mxu0
        %v3339 = vadd.f32 %v3145, %v3338
        %3340 = vdwg.mxu0
        %v3341 = vmax.f32 %v3263, 0.0
        %v3342 = vmax.f32 %v3265, 0.0
        %v3343 = vmax.f32 %v3267, 0.0
        %v3344 = vmax.f32 %v3269, 0.0
        %v3345 = vmax.f32 %v3273, 0.0
        %v3346 = vmax.f32 %v3275, 0.0
        %v3347 = vmax.f32 %v3277, 0.0
        %v3348 = vmax.f32 %v3279, 0.0
        %v3349 = vmax.f32 %v3283, 0.0
        %v3350 = vmax.f32 %v3285, 0.0
        %v3351 = vmax.f32 %v3287, 0.0
        %v3352 = vmax.f32 %v3289, 0.0
        %v3353 = vmax.f32 %v3293, 0.0
        %v3354 = vmax.f32 %v3295, 0.0
        %v3355 = vmax.f32 %v3297, 0.0
        %v3356 = vmax.f32 %v3299, 0.0
        %v3357 = vmax.f32 %v3303, 0.0
        %v3358 = vmax.f32 %v3305, 0.0
        %v3359 = vmax.f32 %v3307, 0.0
        %v3360 = vmax.f32 %v3309, 0.0
        %v3361 = vmax.f32 %v3313, 0.0
        %v3362 = vmax.f32 %v3315, 0.0
        %v3363 = vmax.f32 %v3317, 0.0
        %v3364 = vmax.f32 %v3319, 0.0
        %v3365 = vmax.f32 %v3323, 0.0
        %v3366 = vmax.f32 %v3325, 0.0
        %v3367 = vmax.f32 %v3327, 0.0
        %v3368 = vmax.f32 %v3329, 0.0
        %v3369 = vmax.f32 %v3333, 0.0
        %v3370 = vmax.f32 %v3335, 0.0
        %v3371 = vmax.f32 %v3337, 0.0
        %v3372 = vmax.f32 %v3339, 0.0
        %v3373 = vpack.c.bf16 %v3343, %v3341
        %v3374 = vpack.c.bf16 %v3344, %v3342
        %v3375 = vpack.c.bf16 %v3347, %v3345
        %v3376 = vpack.c.bf16 %v3348, %v3346
        %v3377 = vpack.c.bf16 %v3351, %v3349
        %v3378 = vpack.c.bf16 %v3352, %v3350
        %v3379 = vpack.c.bf16 %v3355, %v3353
        %v3380 = vpack.c.bf16 %v3356, %v3354
        %v3381 = vpack.c.bf16 %v3359, %v3357
        %v3382 = vpack.c.bf16 %v3360, %v3358
        %v3383 = vpack.c.bf16 %v3363, %v3361
        %v3384 = vpack.c.bf16 %v3364, %v3362
        %v3385 = vpack.c.bf16 %v3367, %v3365
        %v3386 = vpack.c.bf16 %v3368, %v3366
        %v3387 = vpack.c.bf16 %v3371, %v3369
        %v3388 = vpack.c.bf16 %v3372, %v3370
        %v3389 = vld [vmem:[#allocation10] sm:$0xf]
        %v3390 = vld [vmem:[#allocation10 + $0x4] sm:$0xf]
        %v3391 = vld [vmem:[#allocation10 + $0x8] sm:$0xf]
        %v3392 = vld [vmem:[#allocation10 + $0xc] sm:$0xf]
        %v3393 = vld [vmem:[#allocation10 + $0x10] sm:$0xf]
        %v3394 = vld [vmem:[#allocation10 + $0x14] sm:$0xf]
        %v3395 = vld [vmem:[#allocation10 + $0x18] sm:$0xf]
        %v3396 = vld [vmem:[#allocation10 + $0x1c] sm:$0xf]
        %v3397 = vld [vmem:[#allocation10 + $0x20] sm:$0xf]
        %v3398 = vld [vmem:[#allocation10 + $0x24] sm:$0xf]
        %v3399 = vld [vmem:[#allocation10 + $0x28] sm:$0xf]
        %v3400 = vld [vmem:[#allocation10 + $0x2c] sm:$0xf]
        %v3401 = vld [vmem:[#allocation10 + $0x30] sm:$0xf]
        %v3402 = vld [vmem:[#allocation10 + $0x34] sm:$0xf]
        %v3403 = vld [vmem:[#allocation10 + $0x38] sm:$0xf]
        %v3404 = vld [vmem:[#allocation10 + $0x3c] sm:$0xf]
        %v3405 = vld [vmem:[#allocation10 + $0x40] sm:$0xf]
        %v3406 = vld [vmem:[#allocation10 + $0x44] sm:$0xf]
        %v3407 = vld [vmem:[#allocation10 + $0x48] sm:$0xf]
        %v3408 = vld [vmem:[#allocation10 + $0x4c] sm:$0xf]
        %v3409 = vld [vmem:[#allocation10 + $0x50] sm:$0xf]
        %v3410 = vld [vmem:[#allocation10 + $0x54] sm:$0xf]
        %v3411 = vld [vmem:[#allocation10 + $0x58] sm:$0xf]
        %v3412 = vld [vmem:[#allocation10 + $0x5c] sm:$0xf]
        %v3413 = vld [vmem:[#allocation10 + $0x60] sm:$0xf]
        %v3414 = vld [vmem:[#allocation10 + $0x64] sm:$0xf]
        %v3415 = vld [vmem:[#allocation10 + $0x68] sm:$0xf]
        %v3416 = vld [vmem:[#allocation10 + $0x6c] sm:$0xf]
        %v3417 = vld [vmem:[#allocation10 + $0x70] sm:$0xf]
        %v3418 = vld [vmem:[#allocation10 + $0x74] sm:$0xf]
        %v3419 = vld [vmem:[#allocation10 + $0x78] sm:$0xf]
        %v3420 = vld [vmem:[#allocation10 + $0x7c] sm:$0xf]
        %v3421 = vld [vmem:[%s9] sm:$0x1]
        %v3423 = vlaneseq
        %v3424 = vshrl.u32 %v3423, 7
        %v3425 = vsub.s32 0, %v3424
        %v3426 = vrot.slane %v3421, %v3425
        %v3460 = vunpack.c.l.b16 %v3389
        %v3461 = vunpack.c.l.b16 %v3390
        %v3462 = vunpack.c.l.b16 %v3391
        %v3463 = vunpack.c.l.b16 %v3392
        %v3464 = vunpack.c.l.b16 %v3393
        %v3465 = vunpack.c.l.b16 %v3394
        %v3466 = vunpack.c.l.b16 %v3395
        %v3467 = vunpack.c.l.b16 %v3396
        %v3468 = vunpack.c.l.b16 %v3397
        %v3469 = vunpack.c.l.b16 %v3398
        %v3470 = vunpack.c.l.b16 %v3399
        %v3471 = vunpack.c.l.b16 %v3400
        %v3472 = vunpack.c.l.b16 %v3401
        %v3473 = vunpack.c.l.b16 %v3402
        %v3474 = vunpack.c.l.b16 %v3403
        %v3475 = vunpack.c.l.b16 %v3404
        %v3476 = vunpack.c.l.b16 %v3405
        %v3477 = vunpack.c.l.b16 %v3406
        %v3478 = vunpack.c.l.b16 %v3407
        %v3479 = vunpack.c.l.b16 %v3408
        %v3480 = vunpack.c.l.b16 %v3409
        %v3481 = vunpack.c.l.b16 %v3410
        %v3482 = vunpack.c.l.b16 %v3411
        %v3483 = vunpack.c.l.b16 %v3412
        %v3484 = vunpack.c.l.b16 %v3413
        %v3485 = vunpack.c.l.b16 %v3414
        %v3486 = vunpack.c.l.b16 %v3415
        %v3487 = vunpack.c.l.b16 %v3416
        %v3488 = vunpack.c.l.b16 %v3417
        %v3489 = vunpack.c.l.b16 %v3418
        %v3490 = vunpack.c.l.b16 %v3419
        %v3491 = vunpack.c.l.b16 %v3420
        %v3492 = vpack.c.b16 %v3461, %v3460
        %v3493 = vpack.c.b16 %v3463, %v3462
        %v3494 = vpack.c.b16 %v3465, %v3464
        %v3495 = vpack.c.b16 %v3467, %v3466
        %v3496 = vpack.c.b16 %v3469, %v3468
        %v3497 = vpack.c.b16 %v3471, %v3470
        %v3498 = vpack.c.b16 %v3473, %v3472
        %v3499 = vpack.c.b16 %v3475, %v3474
        %v3500 = vpack.c.b16 %v3477, %v3476
        %v3501 = vpack.c.b16 %v3479, %v3478
        %v3502 = vpack.c.b16 %v3481, %v3480
        %v3503 = vpack.c.b16 %v3483, %v3482
        %v3504 = vpack.c.b16 %v3485, %v3484
        %v3505 = vpack.c.b16 %v3487, %v3486
        %v3506 = vpack.c.b16 %v3489, %v3488
        %v3507 = vpack.c.b16 %v3491, %v3490
        %3524 = vmatprep.subr.bf16.mxu0 0
        %3525 = vmatpush1.bf16.msra.mxu0 %v3492
        %3526 = vmatprep.subr.bf16.mxu0 0
        %3527 = vmatpush1.bf16.msra.mxu0 %v3493
        %3528 = vmatprep.subr.bf16.mxu0 0
        %3529 = vmatpush1.bf16.msra.mxu0 %v3494
        %3530 = vmatprep.subr.bf16.mxu0 0
        %3531 = vmatpush1.bf16.msra.mxu0 %v3495
        %3532 = vmatprep.subr.bf16.mxu0 0
        %3533 = vmatpush1.bf16.msra.mxu0 %v3496
        %3534 = vmatprep.subr.bf16.mxu0 0
        %3535 = vmatpush1.bf16.msra.mxu0 %v3497
        %3536 = vmatprep.subr.bf16.mxu0 0
        %3537 = vmatpush1.bf16.msra.mxu0 %v3498
        %3538 = vmatprep.subr.bf16.mxu0 0
        %3539 = vmatpush1.bf16.msra.mxu0 %v3499
        %3540 = vmatprep.subr.bf16.mxu0 0
        %3541 = vmatpush1.bf16.msra.mxu0 %v3500
        %3542 = vmatprep.subr.bf16.mxu0 0
        %3543 = vmatpush1.bf16.msra.mxu0 %v3501
        %3544 = vmatprep.subr.bf16.mxu0 0
        %3545 = vmatpush1.bf16.msra.mxu0 %v3502
        %3546 = vmatprep.subr.bf16.mxu0 0
        %3547 = vmatpush1.bf16.msra.mxu0 %v3503
        %3548 = vmatprep.subr.bf16.mxu0 0
        %3549 = vmatpush1.bf16.msra.mxu0 %v3504
        %3550 = vmatprep.subr.bf16.mxu0 0
        %3551 = vmatpush1.bf16.msra.mxu0 %v3505
        %3552 = vmatprep.subr.bf16.mxu0 0
        %3553 = vmatpush1.bf16.msra.mxu0 %v3506
        %3554 = vmatprep.subr.bf16.mxu0 0
        %3555 = vmatpush1.bf16.msra.mxu0 %v3507
        %3556 = vmatprep.mubr.bf16.mxu0 %v3374
        %3557 = vmatmul.mubr.bf16.gmra.mrb[0].mxu0 %v3373
        %v3558 = vpop.f32.mrb[0].mxu0
        %v3559 = vadd.f32 %v3426, %v3558
        %v3560 = vpop.f32.mrb[0].mxu0
        %v3561 = vpop.f32.mrb[0].mxu0
        %v3562 = vadd.f32 %v3426, %v3561
        %v3563 = vpop.f32.mrb[0].mxu0
        %3564 = vmatprep.mubr.bf16.mxu0 %v3376
        %3565 = vmatmul.mubr.bf16.gmra.mrb[0].mxu0 %v3375
        %v3566 = vpop.f32.mrb[0].mxu0
        %v3567 = vadd.f32 %v3426, %v3566
        %v3568 = vpop.f32.mrb[0].mxu0
        %v3569 = vpop.f32.mrb[0].mxu0
        %v3570 = vadd.f32 %v3426, %v3569
        %v3571 = vpop.f32.mrb[0].mxu0
        %3572 = vmatprep.mubr.bf16.mxu0 %v3378
        %3573 = vmatmul.mubr.bf16.gmra.mrb[0].mxu0 %v3377
        %v3574 = vpop.f32.mrb[0].mxu0
        %v3575 = vadd.f32 %v3426, %v3574
        %v3576 = vpop.f32.mrb[0].mxu0
        %v3577 = vpop.f32.mrb[0].mxu0
        %v3578 = vadd.f32 %v3426, %v3577
        %v3579 = vpop.f32.mrb[0].mxu0
        %3580 = vmatprep.mubr.bf16.mxu0 %v3380
        %3581 = vmatmul.mubr.bf16.gmra.mrb[0].mxu0 %v3379
        %v3582 = vpop.f32.mrb[0].mxu0
        %v3583 = vadd.f32 %v3426, %v3582
        %v3584 = vpop.f32.mrb[0].mxu0
        %v3585 = vpop.f32.mrb[0].mxu0
        %v3586 = vadd.f32 %v3426, %v3585
        %v3587 = vpop.f32.mrb[0].mxu0
        %3588 = vmatprep.mubr.bf16.mxu0 %v3382
        %3589 = vmatmul.mubr.bf16.gmra.mrb[0].mxu0 %v3381
        %v3590 = vpop.f32.mrb[0].mxu0
        %v3591 = vadd.f32 %v3426, %v3590
        %v3592 = vpop.f32.mrb[0].mxu0
        %v3593 = vpop.f32.mrb[0].mxu0
        %v3594 = vadd.f32 %v3426, %v3593
        %v3595 = vpop.f32.mrb[0].mxu0
        %3596 = vmatprep.mubr.bf16.mxu0 %v3384
        %3597 = vmatmul.mubr.bf16.gmra.mrb[0].mxu0 %v3383
        %v3598 = vpop.f32.mrb[0].mxu0
        %v3599 = vadd.f32 %v3426, %v3598
        %v3600 = vpop.f32.mrb[0].mxu0
        %v3601 = vpop.f32.mrb[0].mxu0
        %v3602 = vadd.f32 %v3426, %v3601
        %v3603 = vpop.f32.mrb[0].mxu0
        %3604 = vmatprep.mubr.bf16.mxu0 %v3386
        %3605 = vmatmul.mubr.bf16.gmra.mrb[0].mxu0 %v3385
        %v3606 = vpop.f32.mrb[0].mxu0
        %v3607 = vadd.f32 %v3426, %v3606
        %v3608 = vpop.f32.mrb[0].mxu0
        %v3609 = vpop.f32.mrb[0].mxu0
        %v3610 = vadd.f32 %v3426, %v3609
        %v3611 = vpop.f32.mrb[0].mxu0
        %3612 = vmatprep.mubr.bf16.mxu0 %v3388
        %3613 = vmatmul.mubr.bf16.gmra.mrb[0].mxu0 %v3387
        %v3614 = vpop.f32.mrb[0].mxu0
        %v3615 = vadd.f32 %v3426, %v3614
        %v3616 = vpop.f32.mrb[0].mxu0
        %v3617 = vpop.f32.mrb[0].mxu0
        %v3618 = vadd.f32 %v3426, %v3617
        %v3619 = vpop.f32.mrb[0].mxu0
        %3620 = vdwg.mxu0
        %v3621 = vadd.f32 %v3559, %v3096
        %v3622 = vadd.f32 %v3562, %v3097
        %v3623 = vadd.f32 %v3567, %v3098
        %v3624 = vadd.f32 %v3570, %v3099
        %v3625 = vadd.f32 %v3575, %v3100
        %v3626 = vadd.f32 %v3578, %v3101
        %v3627 = vadd.f32 %v3583, %v3102
        %v3628 = vadd.f32 %v3586, %v3103
        %v3629 = vadd.f32 %v3591, %v3104
        %v3630 = vadd.f32 %v3594, %v3105
        %v3631 = vadd.f32 %v3599, %v3106
        %v3632 = vadd.f32 %v3602, %v3107
        %v3633 = vadd.f32 %v3607, %v3108
        %v3634 = vadd.f32 %v3610, %v3109
        %v3635 = vadd.f32 %v3615, %v3110
        %v3636 = vadd.f32 %v3618, %v3111
        %3637 = vst [vmem:[%s446] sm:$0xff] %v3621
        %3638 = vst [vmem:[%s446 + $0x8] sm:$0xff] %v3622
        %3639 = vst [vmem:[%s446 + $0x10] sm:$0xff] %v3623
        %3640 = vst [vmem:[%s446 + $0x18] sm:$0xff] %v3624
        %3641 = vst [vmem:[%s446 + $0x20] sm:$0xff] %v3625
        %3642 = vst [vmem:[%s446 + $0x28] sm:$0xff] %v3626
        %3643 = vst [vmem:[%s446 + $0x30] sm:$0xff] %v3627
        %3644 = vst [vmem:[%s446 + $0x38] sm:$0xff] %v3628
        %3645 = vst [vmem:[%s446 + $0x40] sm:$0xff] %v3629
        %3646 = vst [vmem:[%s446 + $0x48] sm:$0xff] %v3630
        %3647 = vst [vmem:[%s446 + $0x50] sm:$0xff] %v3631
        %3648 = vst [vmem:[%s446 + $0x58] sm:$0xff] %v3632
        %3649 = vst [vmem:[%s446 + $0x60] sm:$0xff] %v3633
        %3650 = vst [vmem:[%s446 + $0x68] sm:$0xff] %v3634
        %3651 = vst [vmem:[%s446 + $0x70] sm:$0xff] %v3635
        %3652 = vst [vmem:[%s446 + $0x78] sm:$0xff] %v3636
        %s3653 = sand.u32 %s257, 1
        %s3654 = scalar_lea.sflag [#allocation4], %s3653
        %s3655 = sand.u32 %s257, 1
        %s3656 = smul.addr %s3655, 128
        %s3657 = scalar_lea.vmem [#allocation11], %s3656
        // Predicated region
        $region81: #{encoder_block.1} parent=59 // pred_check
          %p3658 = pneg %p267
        $region82: #{encoder_block.1} parent=59 // pred_check_branch
          %3660 = sbr.rel (%p3658) target = $region84
        $region83: #{encoder_block.1} parent=59 // pred_region
          %s3662 = ssub.s32 2048, 2048
          %3663 = vsyncadd %s3654, %s3662
          %s3664 = smul.addr %s29, 16
          %s3665 = smul.addr %s3664, 128
          %s3666 = scalar_lea.hbm %s10, %s3665
          %s3667 = sshll.u32 %s3657, 4
          %s3668 = int_to_ptr.vmem [resolvable:$true] %s3667
          %3673 = dma.vmem_to_hbm [thread:$0]  %s3668, 2048, %s3666, %s3654, 128, 128, 8
        $region84: #{encoder_block.1} parent=59 // pred_fallthru
          _
      $region60: #{encoder_block.1} parent=5 // pred_fallthru
        _
      %p3674 = scmp.le.s32.totalorder 2, %s24
      // Predicated region
      $region85: #{encoder_block.1} parent=5 // pred_check
        %p3675 = pneg %p3674
      $region86: #{encoder_block.1} parent=5 // pred_check_branch
        %3677 = sbr.rel (%p3675) target = $region88
      $region87: #{encoder_block.1} parent=5 // pred_region
        %s3678 = ssub.s32 %s24, 2
        // Predicated region
        $region89: #{encoder_block.1} parent=87 // pred_check
          %p3679 = pneg %p273
        $region90: #{encoder_block.1} parent=87 // pred_check_branch
          %3681 = sbr.rel (%p3679) target = $region92
        $region91: #{encoder_block.1} parent=87 // pred_region
          %s3682 = sand.u32 %s258, 1
          %s3683 = scalar_lea.sflag [#allocation4], %s3682
          %s3684 = sand.u32 %s258, 1
          %s3685 = smul.addr %s3684, 128
          %s3686 = scalar_lea.vmem [#allocation11], %s3685
          %3687 = dma.done %s3683, 2048
        $region92: #{encoder_block.1} parent=87 // pred_fallthru
          _
      $region88: #{encoder_block.1} parent=5 // pred_fallthru
        _
    $region6: #{encoder_block.1} parent=1 // loop_footer
      %s28 = sadd.s32 1, %s24
    $region7: #{encoder_block.1} parent=1 // loop_footer_branch
      %23 = sbr.rel target = $region3
    $region8: #{encoder_block.1} parent=1 // loop_exit
      _
    %3688 = vsyncpa [#allocation3], 1
    %s3689 = scalar_lea.sflag [#allocation3], 1
    %3690 = vsyncpa %s3689, 1
    %3691 = vsyncpa [#allocation6], 1
    %3692 = vsyncpa [#allocation9], 1
    %3693 = vsyncpa [#allocation4], 1
    %s3694 = scalar_lea.sflag [#allocation4], 1
    %3695 = vsyncpa %s3694, 1

</llo_original>
